<compile_context>
chip_gen: v7x
topology: tpu7x:2x2x1
jax: 0.10.0
libtpu: 0.0.40
codegen_flags: <defaults>
</compile_context>

<pallas_src>
import jax
import jax.numpy as jnp
import numpy as np
from jax.experimental import pallas as pl
from jax.experimental.pallas import tpu as pltpu


# ----------------------------------------------------------------------------
# VMEM accounting helper: real footprint of a (rows, cols) block after the
# (8, 128) tile padding.
# ----------------------------------------------------------------------------
def _pad_bytes(rows, cols, itemsize):
    pr = -(-rows // 8) * 8
    pc = -(-cols // 128) * 128
    return pr * pc * itemsize


# ----------------------------------------------------------------------------
# Fused kernel: label pyramid + N weighted MSE terms in one pass, vectorized
# over a group of (batch*channel) slices.
# ----------------------------------------------------------------------------
def _make_fused_kernel(n_levels, scales, group, level_hw, tiled):
    has_scr = n_levels >= 3

    def col_selector(w):
        # (w, w) one-hot selector: output cols [0, w/2) pick even input cols,
        # cols [w/2, w) pick odd input cols -> a single MXU pass produces
        # [even | odd] side by side (half the matmul pushes of two selectors).
        hw = w // 2
        src = jax.lax.broadcasted_iota(jnp.int32, (w, w), 0)
        dst = jax.lax.broadcasted_iota(jnp.int32, (w, w), 1)
        pick = ((dst < hw) & (src == 2 * dst)) | (
            (dst >= hw) & (src == 2 * (dst - hw) + 1))
        return pick.astype(jnp.float32)

    def kernel(label_ref, *refs):
        out_refs = refs[:n_levels]
        loss_ref = refs[n_levels]
        scr = refs[n_levels + 1] if has_scr else None
        step = pl.program_id(0)

        acc = jnp.float32(0.0)
        lab = None
        # Walk the pyramid full-resolution first (level n_levels-1) down to the
        # smallest level (level 0), pooling the label as we go.
        for idx, k in enumerate(range(n_levels - 1, -1, -1)):
            hk, wk = level_hw[k]
            rows = group * hk
            # Output tile for this level, lane-dense 2-D (group*hk, wk).
            if tiled[k]:
                f = out_refs[k][...]
            else:
                # Tiny level kept fully resident; slice this step's group rows.
                f = out_refs[k][pl.ds(step * rows, rows), :]
            f = f.astype(jnp.float32)

            if idx == 0:
                lab = label_ref[...].astype(jnp.float32)        # (group*H, W)

            d = f - lab
            # One reduce per level per step; the heavy part is cross-vreg VPU
            # adds over the whole batched block (was group*N tiny XLU reduces).
            acc = acc + jnp.float32(scales[k]) * jnp.sum(d * d)

            if k > 0:
                hn, wn = level_hw[k - 1]
                rows_n = group * hn
                # ---- row-pair max: strided ref loads on the sublane axis ----
                if idx == 0:
                    even = label_ref[pl.ds(0, rows_n, stride=2), :].astype(jnp.float32)
                    odd = label_ref[pl.ds(1, rows_n, stride=2), :].astype(jnp.float32)
                else:
                    even = scr[pl.ds(0, rows_n, stride=2), pl.ds(0, wk)]
                    odd = scr[pl.ds(1, rows_n, stride=2), pl.ds(0, wk)]
                rmax = jnp.maximum(even, odd)                    # (rows_n, wk)
                # ---- column-pair max: one fused one-hot matmul per level ----
                if wk == 2:
                    lab = jnp.max(rmax, axis=1, keepdims=True)
                else:
                    cc = jnp.dot(rmax, col_selector(wk),
                                 precision=jax.lax.Precision.HIGHEST,
                                 preferred_element_type=jnp.float32)
                    lab = jnp.maximum(cc[:, :wn], cc[:, wn:wk])  # (rows_n, wn)
                # Park the pooled level so the next iteration can do strided
                # ref loads (only needed if it will be pooled again).
                if k - 1 > 0:
                    scr[pl.ds(0, rows_n), pl.ds(0, wn)] = lab

        # Lane-dense (8,128) per-step partial block; scalar at [0,0], zeros
        # elsewhere, so the wrapper's single jnp.sum over all partials is exact.
        r = jax.lax.broadcasted_iota(jnp.int32, (8, 128), 0)
        c = jax.lax.broadcasted_iota(jnp.int32, (8, 128), 1)
        loss_ref[...] = jnp.where((r == 0) & (c == 0), acc, jnp.float32(0.0))

    return kernel


# ----------------------------------------------------------------------------
# HF_wrapper.forward
# ----------------------------------------------------------------------------
def hf_wrapper_forward(outputs, label, weights):
    """outputs: list of N NCHW arrays ordered smallest-resolution first
    (matching zip(outputs, labels[::-1]) in the PyTorch module)."""
    n = len(weights)
    assert len(outputs) == n and n >= 1
    B, C, H, W = (int(s) for s in label.shape)
    bc = B * C

    level_hw = [(int(f.shape[2]), int(f.shape[3])) for f in outputs]
    assert level_hw[-1] == (H, W), "outputs must be ordered smallest first"
    for k in range(n - 1, 0, -1):
        hk, wk = level_hw[k]
        assert hk % 2 == 0 and wk % 2 == 0
        assert level_hw[k - 1] == (hk // 2, wk // 2)

    # weight_k / numel_k -> per-level weighted-mean scale, baked in as constants
    # (numel from the ORIGINAL, unpadded outputs).
    scales = [float(w) / float(f.size) for w, f in zip(weights, outputs)]
    out_isz = [f.dtype.itemsize for f in outputs]
    lab_isz = label.dtype.itemsize

    # ---------------- VMEM budget & group selection --------------------------
    try:
        vmem_cap = int(pltpu.get_tpu_info().vmem_capacity_bytes)
    except Exception:
        vmem_cap = 64 * 2**20          # v7x per-core capacity: the tightest case
    budget = min(vmem_cap // 4, 16 * 2**20)       # all of our blocks + scratch
    vmem_limit = int(min(vmem_cap // 2, 2 * budget))

    def vmem_cost(g, bcp):
        # label block, double buffered
        tot = 2 * _pad_bytes(g * H, W, lab_isz)
        # every output pyramid level (double buffered), padded to (8,128) tiles
        for (hk, wk), isz in zip(level_hw, out_isz):
            rows = g * hk if (g * hk) % 8 == 0 else bcp * hk
            tot += 2 * _pad_bytes(rows, wk, isz)
        tot += 2 * _pad_bytes(8, 128, 4)           # loss partial block
        if n >= 3:
            tot += _pad_bytes(g * H // 2, W // 2, 4)   # pooled-label scratch
        return tot

    # >= 2 grid steps so the "parallel" axis exists (v7x megacore sharding).
    g_cap = bc // 2 if bc >= 2 else 1
    best = None
    for g in range(g_cap, 0, -1):
        bcp = -(-bc // g) * g                      # pad bc rather than shrink g
        pad = bcp - bc
        if g > 1 and pad * 4 > bc:                 # <= 25% padding overhead
            continue
        if (g * H) % 8 != 0 and bcp != g:          # keep label block (8,*) legal
            continue
        if vmem_cost(g, bcp) > budget:
            continue
        steps = bcp // g
        key = (steps % 2 == 0, -pad, g)            # even steps, min pad, big tile
        if best is None or key > best[0]:
            best = (key, g, bcp)
    if best is None:
        group, bc_p = 1, bc
    else:
        group, bc_p = best[1], best[2]
    steps = bc_p // group
    tiled = [(group * hk) % 8 == 0 for hk, _ in level_hw]

    # ---------------- lane-dense 2-D views (+ zero channel padding) ----------
    # Row-major NCHW -> (bc*Hk, Wk) is a free metadata reshape; zero-padded
    # channels contribute exactly 0 to every level's SSE.
    def to_2d(x, hk, wk):
        x2 = x.reshape(bc * hk, wk)
        if bc_p > bc:
            x2 = jnp.pad(x2, ((0, (bc_p - bc) * hk), (0, 0)))
        return x2

    lab2 = to_2d(label, H, W)
    outs2 = [to_2d(f, hk, wk) for f, (hk, wk) in zip(outputs, level_hw)]

    in_specs = [pl.BlockSpec((group * H, W), lambda i: (i, 0))]
    for (hk, wk), t in zip(level_hw, tiled):
        if t:
            in_specs.append(pl.BlockSpec((group * hk, wk), lambda i: (i, 0)))
        else:
            # Tiny level: one dense DMA, resident across all steps.
            in_specs.append(pl.BlockSpec((bc_p * hk, wk), lambda i: (0, 0)))

    scratch_shapes = []
    if n >= 3:
        scratch_shapes.append(pltpu.VMEM((group * H // 2, W // 2), jnp.float32))

    kernel = _make_fused_kernel(n, scales, group, level_hw, tiled)

    partials = pl.pallas_call(
        kernel,
        out_shape=jax.ShapeDtypeStruct((steps, 8, 128), jnp.float32),
        grid=(steps,),
        in_specs=in_specs,
        out_specs=pl.BlockSpec((None, 8, 128), lambda i: (i, 0, 0)),
        scratch_shapes=scratch_shapes,
        compiler_params=pltpu.CompilerParams(
            dimension_semantics=("parallel",),
            vmem_limit_bytes=vmem_limit),
    )(lab2, *outs2)

    return jnp.sum(partials)


# ----------------------------------------------------------------------------
# Pure-JAX reference for correctness check
# ----------------------------------------------------------------------------
def ref_forward(outputs, label, weights):
    N = len(weights)
    labels = [label.astype(jnp.float32)]
    lab = label.astype(jnp.float32)
    for _ in range(N - 1):
        lab = jax.lax.reduce_window(
            lab, -jnp.inf, jax.lax.max, (1, 1, 2, 2), (1, 1, 2, 2), "VALID")
        labels.append(lab)
    labels = labels[::-1]
    losses = jnp.stack(
        [jnp.mean((f - l) ** 2) for f, l in zip(outputs, labels)])
    return jnp.sum(losses * jnp.asarray(weights, jnp.float32))


if __name__ == "__main__":
    B, C, H, W = 2, 4, 32, 32
    N = 6  # number of supervision scales (module default)
    # Deterministic "parameter": per-scale weights (weights[0] -> smallest map).
    weights = [(i + 1) / N for i in range(N)]

    key = jax.random.PRNGKey(0)
    k_label, k_out = jax.random.split(key)
    label = jax.random.uniform(k_label, (B, C, H, W), dtype=jnp.float32)

    # outputs ordered smallest-resolution first: 1, 2, 4, 8, 16, 32
    sizes = [H // (2 ** (N - 1 - i)) for i in range(N)]
    out_keys = jax.random.split(k_out, N)
    outputs = [
        jax.random.normal(out_keys[i], (B, C, s, s), dtype=jnp.float32)
        for i, s in enumerate(sizes)
    ]

    loss = hf_wrapper_forward(outputs, label, weights)
    loss = jax.block_until_ready(loss)

    ref = ref_forward(outputs, label, weights)
    np.testing.assert_allclose(np.asarray(loss), np.asarray(ref), rtol=1e-5, atol=1e-5)

    print("KERNEL_OK")
</pallas_src>

<mosaic_0001>
module attributes {stable_mosaic.version = 11 : i64} {
  func.func @kernel(%arg0: i32, %arg1: memref<128x32xf32, #tpu.memory_space<vmem>>, %arg2: memref<8x1xf32, #tpu.memory_space<vmem>>, %arg3: memref<8x2xf32, #tpu.memory_space<vmem>>, %arg4: memref<16x4xf32, #tpu.memory_space<vmem>>, %arg5: memref<32x8xf32, #tpu.memory_space<vmem>>, %arg6: memref<64x16xf32, #tpu.memory_space<vmem>>, %arg7: memref<128x32xf32, #tpu.memory_space<vmem>>, %arg8: memref<1x8x128xf32, #tpu.memory_space<vmem>>, %arg9: memref<64x16xf32, #tpu.memory_space<vmem>>) attributes {dimension_semantics = [#tpu.dimension_semantics<parallel>], iteration_bounds = array<i64: 2>, scalar_prefetch = 0 : i64, scratch_operands = 1 : i64, tpu.core_type = #tpu.core_type<tc>, window_params = [{transform_indices = @transform_0, window_bounds = array<i64: 128, 32>}, {pipeline_mode = #tpu.pipeline_mode<synchronous>, transform_indices = @transform_1, window_bounds = array<i64: 8, 1>}, {transform_indices = @transform_2, window_bounds = array<i64: 8, 2>}, {transform_indices = @transform_3, window_bounds = array<i64: 16, 4>}, {transform_indices = @transform_4, window_bounds = array<i64: 32, 8>}, {transform_indices = @transform_5, window_bounds = array<i64: 64, 16>}, {transform_indices = @transform_6, window_bounds = array<i64: 128, 32>}, {transform_indices = @transform_7, window_bounds = array<i64: 1, 8, 128>}]} {
    %c0 = arith.constant 0 : index
    %c0_0 = arith.constant 0 : index
    %0 = vector.load %arg7[%c0, %c0_0] : memref<128x32xf32, #tpu.memory_space<vmem>>, vector<128x32xf32>
    %c0_1 = arith.constant 0 : index
    %c0_2 = arith.constant 0 : index
    %1 = vector.load %arg1[%c0_1, %c0_2] : memref<128x32xf32, #tpu.memory_space<vmem>>, vector<128x32xf32>
    %2 = arith.subf %0, %1 : vector<128x32xf32>
    %3 = arith.mulf %2, %2 : vector<128x32xf32>
    %4 = vector.shape_cast %3 : vector<128x32xf32> to vector<1x128x32xf32>
    %cst = arith.constant dense<0.000000e+00> : vector<1xf32>
    %5 = vector.multi_reduction <add>, %4, %cst [1, 2] : vector<1x128x32xf32> to vector<1xf32>
    %6 = vector.shape_cast %5 : vector<1xf32> to vector<1x1x1xf32>
    %7 = vector.extract %6[0, 0, 0] : f32 from vector<1x1x1xf32>
    %cst_3 = arith.constant 1.22070313E-4 : f32
    %8 = arith.mulf %cst_3, %7 : f32
    %cst_4 = arith.constant 0.000000e+00 : f32
    %9 = arith.addf %cst_4, %8 : f32
    %c0_5 = arith.constant 0 : index
    %c0_6 = arith.constant 0 : index
    %10 = tpu.strided_load %arg1[%c0_5, %c0_6] {strides = array<i32: 2, 1>} : memref<128x32xf32, #tpu.memory_space<vmem>>, vector<64x32xf32>
    %c1 = arith.constant 1 : index
    %c0_7 = arith.constant 0 : index
    %11 = tpu.strided_load %arg1[%c1, %c0_7] {strides = array<i32: 2, 1>} : memref<128x32xf32, #tpu.memory_space<vmem>>, vector<64x32xf32>
    %12 = arith.maximumf %10, %11 : vector<64x32xf32>
    %13 = tpu.iota {dimensions = array<i32: 0>} : vector<32x32xi32>
    %14 = tpu.iota {dimensions = array<i32: 1>} : vector<32x32xi32>
    %c16_i32 = arith.constant 16 : i32
    %15 = vector.broadcast %c16_i32 : i32 to vector<32x32xi32>
    %16 = arith.cmpi slt, %14, %15 : vector<32x32xi32>
    %c2_i32 = arith.constant 2 : i32
    %17 = vector.broadcast %c2_i32 : i32 to vector<32x32xi32>
    %18 = arith.muli %17, %14 : vector<32x32xi32>
    %19 = arith.cmpi eq, %13, %18 : vector<32x32xi32>
    %20 = arith.andi %16, %19 : vector<32x32xi1>
    %c16_i32_8 = arith.constant 16 : i32
    %21 = vector.broadcast %c16_i32_8 : i32 to vector<32x32xi32>
    %22 = arith.cmpi sge, %14, %21 : vector<32x32xi32>
    %c16_i32_9 = arith.constant 16 : i32
    %23 = vector.broadcast %c16_i32_9 : i32 to vector<32x32xi32>
    %24 = arith.subi %14, %23 : vector<32x32xi32>
    %c2_i32_10 = arith.constant 2 : i32
    %25 = vector.broadcast %c2_i32_10 : i32 to vector<32x32xi32>
    %26 = arith.muli %25, %24 : vector<32x32xi32>
    %c1_i32 = arith.constant 1 : i32
    %27 = vector.broadcast %c1_i32 : i32 to vector<32x32xi32>
    %28 = arith.addi %26, %27 : vector<32x32xi32>
    %29 = arith.cmpi eq, %13, %28 : vector<32x32xi32>
    %30 = arith.andi %22, %29 : vector<32x32xi1>
    %31 = arith.ori %20, %30 : vector<32x32xi1>
    %32 = arith.extui %31 : vector<32x32xi1> to vector<32x32xi32>
    %33 = arith.sitofp %32 : vector<32x32xi32> to vector<32x32xf32>
    %cst_11 = arith.constant dense<0.000000e+00> : vector<64x32xf32>
    %34 = tpu.matmul %12, %33, %cst_11 {dimension_numbers = #tpu.dot_dimension_numbers<[1], [0], [0], [1], [0, 0, 1, 1], [], []>, precision = #tpu.contract_precision<fp32>} : vector<64x32xf32>, vector<32x32xf32>, vector<64x32xf32> -> vector<64x32xf32>
    %35 = vector.extract_strided_slice %34 {offsets = [0, 0], sizes = [64, 16], strides = [1, 1]} : vector<64x32xf32> to vector<64x16xf32>
    %36 = vector.extract_strided_slice %34 {offsets = [0, 16], sizes = [64, 16], strides = [1, 1]} : vector<64x32xf32> to vector<64x16xf32>
    %37 = arith.maximumf %35, %36 : vector<64x16xf32>
    %c0_12 = arith.constant 0 : index
    %c0_13 = arith.constant 0 : index
    %38 = vector.load %arg9[%c0_12, %c0_13] : memref<64x16xf32, #tpu.memory_space<vmem>>, vector<64x16xf32>
    tpu.vector_store %arg9[%c0_12, %c0_13], %37 {strides = array<i32>} : memref<64x16xf32, #tpu.memory_space<vmem>>, vector<64x16xf32>,
    %c0_14 = arith.constant 0 : index
    %c0_15 = arith.constant 0 : index
    %39 = vector.load %arg6[%c0_14, %c0_15] : memref<64x16xf32, #tpu.memory_space<vmem>>, vector<64x16xf32>
    %40 = arith.subf %39, %37 : vector<64x16xf32>
    %41 = arith.mulf %40, %40 : vector<64x16xf32>
    %42 = vector.shape_cast %41 : vector<64x16xf32> to vector<1x64x16xf32>
    %cst_16 = arith.constant dense<0.000000e+00> : vector<1xf32>
    %43 = vector.multi_reduction <add>, %42, %cst_16 [1, 2] : vector<1x64x16xf32> to vector<1xf32>
    %44 = vector.shape_cast %43 : vector<1xf32> to vector<1x1x1xf32>
    %45 = vector.extract %44[0, 0, 0] : f32 from vector<1x1x1xf32>
    %cst_17 = arith.constant 4.06901032E-4 : f32
    %46 = arith.mulf %cst_17, %45 : f32
    %47 = arith.addf %9, %46 : f32
    %c0_18 = arith.constant 0 : index
    %c0_19 = arith.constant 0 : index
    %48 = tpu.strided_load %arg9[%c0_18, %c0_19] {strides = array<i32: 2, 1>} : memref<64x16xf32, #tpu.memory_space<vmem>>, vector<32x16xf32>
    %c1_20 = arith.constant 1 : index
    %c0_21 = arith.constant 0 : index
    %49 = tpu.strided_load %arg9[%c1_20, %c0_21] {strides = array<i32: 2, 1>} : memref<64x16xf32, #tpu.memory_space<vmem>>, vector<32x16xf32>
    %50 = arith.maximumf %48, %49 : vector<32x16xf32>
    %51 = tpu.iota {dimensions = array<i32: 0>} : vector<16x16xi32>
    %52 = tpu.iota {dimensions = array<i32: 1>} : vector<16x16xi32>
    %c8_i32 = arith.constant 8 : i32
    %53 = vector.broadcast %c8_i32 : i32 to vector<16x16xi32>
    %54 = arith.cmpi slt, %52, %53 : vector<16x16xi32>
    %c2_i32_22 = arith.constant 2 : i32
    %55 = vector.broadcast %c2_i32_22 : i32 to vector<16x16xi32>
    %56 = arith.muli %55, %52 : vector<16x16xi32>
    %57 = arith.cmpi eq, %51, %56 : vector<16x16xi32>
    %58 = arith.andi %54, %57 : vector<16x16xi1>
    %c8_i32_23 = arith.constant 8 : i32
    %59 = vector.broadcast %c8_i32_23 : i32 to vector<16x16xi32>
    %60 = arith.cmpi sge, %52, %59 : vector<16x16xi32>
    %c8_i32_24 = arith.constant 8 : i32
    %61 = vector.broadcast %c8_i32_24 : i32 to vector<16x16xi32>
    %62 = arith.subi %52, %61 : vector<16x16xi32>
    %c2_i32_25 = arith.constant 2 : i32
    %63 = vector.broadcast %c2_i32_25 : i32 to vector<16x16xi32>
    %64 = arith.muli %63, %62 : vector<16x16xi32>
    %c1_i32_26 = arith.constant 1 : i32
    %65 = vector.broadcast %c1_i32_26 : i32 to vector<16x16xi32>
    %66 = arith.addi %64, %65 : vector<16x16xi32>
    %67 = arith.cmpi eq, %51, %66 : vector<16x16xi32>
    %68 = arith.andi %60, %67 : vector<16x16xi1>
    %69 = arith.ori %58, %68 : vector<16x16xi1>
    %70 = arith.extui %69 : vector<16x16xi1> to vector<16x16xi32>
    %71 = arith.sitofp %70 : vector<16x16xi32> to vector<16x16xf32>
    %cst_27 = arith.constant dense<0.000000e+00> : vector<32x16xf32>
    %72 = tpu.matmul %50, %71, %cst_27 {dimension_numbers = #tpu.dot_dimension_numbers<[1], [0], [0], [1], [0, 0, 1, 1], [], []>, precision = #tpu.contract_precision<fp32>} : vector<32x16xf32>, vector<16x16xf32>, vector<32x16xf32> -> vector<32x16xf32>
    %73 = vector.extract_strided_slice %72 {offsets = [0, 0], sizes = [32, 8], strides = [1, 1]} : vector<32x16xf32> to vector<32x8xf32>
    %74 = vector.extract_strided_slice %72 {offsets = [0, 8], sizes = [32, 8], strides = [1, 1]} : vector<32x16xf32> to vector<32x8xf32>
    %75 = arith.maximumf %73, %74 : vector<32x8xf32>
    %c0_28 = arith.constant 0 : index
    %c0_29 = arith.constant 0 : index
    %76 = vector.load %arg9[%c0_28, %c0_29] : memref<64x16xf32, #tpu.memory_space<vmem>>, vector<32x8xf32>
    tpu.vector_store %arg9[%c0_28, %c0_29], %75 {strides = array<i32>} : memref<64x16xf32, #tpu.memory_space<vmem>>, vector<32x8xf32>,
    %c0_30 = arith.constant 0 : index
    %c0_31 = arith.constant 0 : index
    %77 = vector.load %arg5[%c0_30, %c0_31] : memref<32x8xf32, #tpu.memory_space<vmem>>, vector<32x8xf32>
    %78 = arith.subf %77, %75 : vector<32x8xf32>
    %79 = arith.mulf %78, %78 : vector<32x8xf32>
    %80 = vector.shape_cast %79 : vector<32x8xf32> to vector<1x32x8xf32>
    %cst_32 = arith.constant dense<0.000000e+00> : vector<1xf32>
    %81 = vector.multi_reduction <add>, %80, %cst_32 [1, 2] : vector<1x32x8xf32> to vector<1xf32>
    %82 = vector.shape_cast %81 : vector<1xf32> to vector<1x1x1xf32>
    %83 = vector.extract %82[0, 0, 0] : f32 from vector<1x1x1xf32>
    %cst_33 = arith.constant 0.00130208337 : f32
    %84 = arith.mulf %cst_33, %83 : f32
    %85 = arith.addf %47, %84 : f32
    %c0_34 = arith.constant 0 : index
    %c0_35 = arith.constant 0 : index
    %86 = tpu.strided_load %arg9[%c0_34, %c0_35] {strides = array<i32: 2, 1>} : memref<64x16xf32, #tpu.memory_space<vmem>>, vector<16x8xf32>
    %c1_36 = arith.constant 1 : index
    %c0_37 = arith.constant 0 : index
    %87 = tpu.strided_load %arg9[%c1_36, %c0_37] {strides = array<i32: 2, 1>} : memref<64x16xf32, #tpu.memory_space<vmem>>, vector<16x8xf32>
    %88 = arith.maximumf %86, %87 : vector<16x8xf32>
    %89 = tpu.iota {dimensions = array<i32: 0>} : vector<8x8xi32>
    %90 = tpu.iota {dimensions = array<i32: 1>} : vector<8x8xi32>
    %c4_i32 = arith.constant 4 : i32
    %91 = vector.broadcast %c4_i32 : i32 to vector<8x8xi32>
    %92 = arith.cmpi slt, %90, %91 : vector<8x8xi32>
    %c2_i32_38 = arith.constant 2 : i32
    %93 = vector.broadcast %c2_i32_38 : i32 to vector<8x8xi32>
    %94 = arith.muli %93, %90 : vector<8x8xi32>
    %95 = arith.cmpi eq, %89, %94 : vector<8x8xi32>
    %96 = arith.andi %92, %95 : vector<8x8xi1>
    %c4_i32_39 = arith.constant 4 : i32
    %97 = vector.broadcast %c4_i32_39 : i32 to vector<8x8xi32>
    %98 = arith.cmpi sge, %90, %97 : vector<8x8xi32>
    %c4_i32_40 = arith.constant 4 : i32
    %99 = vector.broadcast %c4_i32_40 : i32 to vector<8x8xi32>
    %100 = arith.subi %90, %99 : vector<8x8xi32>
    %c2_i32_41 = arith.constant 2 : i32
    %101 = vector.broadcast %c2_i32_41 : i32 to vector<8x8xi32>
    %102 = arith.muli %101, %100 : vector<8x8xi32>
    %c1_i32_42 = arith.constant 1 : i32
    %103 = vector.broadcast %c1_i32_42 : i32 to vector<8x8xi32>
    %104 = arith.addi %102, %103 : vector<8x8xi32>
    %105 = arith.cmpi eq, %89, %104 : vector<8x8xi32>
    %106 = arith.andi %98, %105 : vector<8x8xi1>
    %107 = arith.ori %96, %106 : vector<8x8xi1>
    %108 = arith.extui %107 : vector<8x8xi1> to vector<8x8xi32>
    %109 = arith.sitofp %108 : vector<8x8xi32> to vector<8x8xf32>
    %cst_43 = arith.constant dense<0.000000e+00> : vector<16x8xf32>
    %110 = tpu.matmul %88, %109, %cst_43 {dimension_numbers = #tpu.dot_dimension_numbers<[1], [0], [0], [1], [0, 0, 1, 1], [], []>, precision = #tpu.contract_precision<fp32>} : vector<16x8xf32>, vector<8x8xf32>, vector<16x8xf32> -> vector<16x8xf32>
    %111 = vector.extract_strided_slice %110 {offsets = [0, 0], sizes = [16, 4], strides = [1, 1]} : vector<16x8xf32> to vector<16x4xf32>
    %112 = vector.extract_strided_slice %110 {offsets = [0, 4], sizes = [16, 4], strides = [1, 1]} : vector<16x8xf32> to vector<16x4xf32>
    %113 = arith.maximumf %111, %112 : vector<16x4xf32>
    %c0_44 = arith.constant 0 : index
    %c0_45 = arith.constant 0 : index
    %114 = vector.load %arg9[%c0_44, %c0_45] : memref<64x16xf32, #tpu.memory_space<vmem>>, vector<16x4xf32>
    tpu.vector_store %arg9[%c0_44, %c0_45], %113 {strides = array<i32>} : memref<64x16xf32, #tpu.memory_space<vmem>>, vector<16x4xf32>,
    %c0_46 = arith.constant 0 : index
    %c0_47 = arith.constant 0 : index
    %115 = vector.load %arg4[%c0_46, %c0_47] : memref<16x4xf32, #tpu.memory_space<vmem>>, vector<16x4xf32>
    %116 = arith.subf %115, %113 : vector<16x4xf32>
    %117 = arith.mulf %116, %116 : vector<16x4xf32>
    %118 = vector.shape_cast %117 : vector<16x4xf32> to vector<1x16x4xf32>
    %cst_48 = arith.constant dense<0.000000e+00> : vector<1xf32>
    %119 = vector.multi_reduction <add>, %118, %cst_48 [1, 2] : vector<1x16x4xf32> to vector<1xf32>
    %120 = vector.shape_cast %119 : vector<1xf32> to vector<1x1x1xf32>
    %121 = vector.extract %120[0, 0, 0] : f32 from vector<1x1x1xf32>
    %cst_49 = arith.constant 3.906250e-03 : f32
    %122 = arith.mulf %cst_49, %121 : f32
    %123 = arith.addf %85, %122 : f32
    %c0_50 = arith.constant 0 : index
    %c0_51 = arith.constant 0 : index
    %124 = tpu.strided_load %arg9[%c0_50, %c0_51] {strides = array<i32: 2, 1>} : memref<64x16xf32, #tpu.memory_space<vmem>>, vector<8x4xf32>
    %c1_52 = arith.constant 1 : index
    %c0_53 = arith.constant 0 : index
    %125 = tpu.strided_load %arg9[%c1_52, %c0_53] {strides = array<i32: 2, 1>} : memref<64x16xf32, #tpu.memory_space<vmem>>, vector<8x4xf32>
    %126 = arith.maximumf %124, %125 : vector<8x4xf32>
    %127 = tpu.iota {dimensions = array<i32: 0>} : vector<4x4xi32>
    %128 = tpu.iota {dimensions = array<i32: 1>} : vector<4x4xi32>
    %c2_i32_54 = arith.constant 2 : i32
    %129 = vector.broadcast %c2_i32_54 : i32 to vector<4x4xi32>
    %130 = arith.cmpi slt, %128, %129 : vector<4x4xi32>
    %c2_i32_55 = arith.constant 2 : i32
    %131 = vector.broadcast %c2_i32_55 : i32 to vector<4x4xi32>
    %132 = arith.muli %131, %128 : vector<4x4xi32>
    %133 = arith.cmpi eq, %127, %132 : vector<4x4xi32>
    %134 = arith.andi %130, %133 : vector<4x4xi1>
    %c2_i32_56 = arith.constant 2 : i32
    %135 = vector.broadcast %c2_i32_56 : i32 to vector<4x4xi32>
    %136 = arith.cmpi sge, %128, %135 : vector<4x4xi32>
    %c2_i32_57 = arith.constant 2 : i32
    %137 = vector.broadcast %c2_i32_57 : i32 to vector<4x4xi32>
    %138 = arith.subi %128, %137 : vector<4x4xi32>
    %c2_i32_58 = arith.constant 2 : i32
    %139 = vector.broadcast %c2_i32_58 : i32 to vector<4x4xi32>
    %140 = arith.muli %139, %138 : vector<4x4xi32>
    %c1_i32_59 = arith.constant 1 : i32
    %141 = vector.broadcast %c1_i32_59 : i32 to vector<4x4xi32>
    %142 = arith.addi %140, %141 : vector<4x4xi32>
    %143 = arith.cmpi eq, %127, %142 : vector<4x4xi32>
    %144 = arith.andi %136, %143 : vector<4x4xi1>
    %145 = arith.ori %134, %144 : vector<4x4xi1>
    %146 = arith.extui %145 : vector<4x4xi1> to vector<4x4xi32>
    %147 = arith.sitofp %146 : vector<4x4xi32> to vector<4x4xf32>
    %cst_60 = arith.constant dense<0.000000e+00> : vector<8x4xf32>
    %148 = tpu.matmul %126, %147, %cst_60 {dimension_numbers = #tpu.dot_dimension_numbers<[1], [0], [0], [1], [0, 0, 1, 1], [], []>, precision = #tpu.contract_precision<fp32>} : vector<8x4xf32>, vector<4x4xf32>, vector<8x4xf32> -> vector<8x4xf32>
    %149 = vector.extract_strided_slice %148 {offsets = [0, 0], sizes = [8, 2], strides = [1, 1]} : vector<8x4xf32> to vector<8x2xf32>
    %150 = vector.extract_strided_slice %148 {offsets = [0, 2], sizes = [8, 2], strides = [1, 1]} : vector<8x4xf32> to vector<8x2xf32>
    %151 = arith.maximumf %149, %150 : vector<8x2xf32>
    %c0_61 = arith.constant 0 : index
    %c0_62 = arith.constant 0 : index
    %152 = vector.load %arg9[%c0_61, %c0_62] : memref<64x16xf32, #tpu.memory_space<vmem>>, vector<8x2xf32>
    tpu.vector_store %arg9[%c0_61, %c0_62], %151 {strides = array<i32>} : memref<64x16xf32, #tpu.memory_space<vmem>>, vector<8x2xf32>,
    %c0_63 = arith.constant 0 : index
    %c0_64 = arith.constant 0 : index
    %153 = vector.load %arg3[%c0_63, %c0_64] : memref<8x2xf32, #tpu.memory_space<vmem>>, vector<8x2xf32>
    %154 = arith.subf %153, %151 : vector<8x2xf32>
    %155 = arith.mulf %154, %154 : vector<8x2xf32>
    %156 = vector.shape_cast %155 : vector<8x2xf32> to vector<1x8x2xf32>
    %cst_65 = arith.constant dense<0.000000e+00> : vector<1xf32>
    %157 = vector.multi_reduction <add>, %156, %cst_65 [1, 2] : vector<1x8x2xf32> to vector<1xf32>
    %158 = vector.shape_cast %157 : vector<1xf32> to vector<1x1x1xf32>
    %159 = vector.extract %158[0, 0, 0] : f32 from vector<1x1x1xf32>
    %cst_66 = arith.constant 0.010416667 : f32
    %160 = arith.mulf %cst_66, %159 : f32
    %161 = arith.addf %123, %160 : f32
    %c0_67 = arith.constant 0 : index
    %c0_68 = arith.constant 0 : index
    %162 = tpu.strided_load %arg9[%c0_67, %c0_68] {strides = array<i32: 2, 1>} : memref<64x16xf32, #tpu.memory_space<vmem>>, vector<4x2xf32>
    %c1_69 = arith.constant 1 : index
    %c0_70 = arith.constant 0 : index
    %163 = tpu.strided_load %arg9[%c1_69, %c0_70] {strides = array<i32: 2, 1>} : memref<64x16xf32, #tpu.memory_space<vmem>>, vector<4x2xf32>
    %164 = arith.maximumf %162, %163 : vector<4x2xf32>
    %cst_71 = arith.constant dense<0xFF800000> : vector<4xf32>
    %165 = vector.multi_reduction <maximumf>, %164, %cst_71 [1] : vector<4x2xf32> to vector<4xf32>
    %166 = vector.shape_cast %165 : vector<4xf32> to vector<4x1xf32>
    %c4_i32_72 = arith.constant 4 : i32
    %167 = arith.muli %arg0, %c4_i32_72 : i32
    %168 = arith.index_cast %167 : i32 to index
    %c0_73 = arith.constant 0 : index
    %169 = vector.load %arg2[%168, %c0_73] : memref<8x1xf32, #tpu.memory_space<vmem>>, vector<4x1xf32>
    %170 = arith.subf %169, %166 : vector<4x1xf32>
    %171 = arith.mulf %170, %170 : vector<4x1xf32>
    %172 = vector.shape_cast %171 : vector<4x1xf32> to vector<1x4x1xf32>
    %cst_74 = arith.constant dense<0.000000e+00> : vector<1xf32>
    %173 = vector.multi_reduction <add>, %172, %cst_74 [1, 2] : vector<1x4x1xf32> to vector<1xf32>
    %174 = vector.shape_cast %173 : vector<1xf32> to vector<1x1x1xf32>
    %175 = vector.extract %174[0, 0, 0] : f32 from vector<1x1x1xf32>
    %cst_75 = arith.constant 0.020833334 : f32
    %176 = arith.mulf %cst_75, %175 : f32
    %177 = arith.addf %161, %176 : f32
    %178 = tpu.iota {dimensions = array<i32: 0>} : vector<8x128xi32>
    %179 = tpu.iota {dimensions = array<i32: 1>} : vector<8x128xi32>
    %c0_i32 = arith.constant 0 : i32
    %180 = vector.broadcast %c0_i32 : i32 to vector<8x128xi32>
    %181 = arith.cmpi eq, %178, %180 : vector<8x128xi32>
    %c0_i32_76 = arith.constant 0 : i32
    %182 = vector.broadcast %c0_i32_76 : i32 to vector<8x128xi32>
    %183 = arith.cmpi eq, %179, %182 : vector<8x128xi32>
    %184 = arith.andi %181, %183 : vector<8x128xi1>
    %cst_77 = arith.constant 0.000000e+00 : f32
    %185 = vector.broadcast %177 : f32 to vector<8x128xf32>
    %186 = vector.broadcast %cst_77 : f32 to vector<8x128xf32>
    %187 = arith.select %184, %185, %186 : vector<8x128xi1>, vector<8x128xf32>
    %c0_78 = arith.constant 0 : index
    %c0_79 = arith.constant 0 : index
    %c0_80 = arith.constant 0 : index
    %188 = vector.load %arg8[%c0_78, %c0_79, %c0_80] : memref<1x8x128xf32, #tpu.memory_space<vmem>>, vector<1x8x128xf32>
    %189 = vector.shape_cast %188 : vector<1x8x128xf32> to vector<8x128xf32>
    %190 = vector.shape_cast %187 : vector<8x128xf32> to vector<1x8x128xf32>
    tpu.vector_store %arg8[%c0_78, %c0_79, %c0_80], %190 {strides = array<i32>} : memref<1x8x128xf32, #tpu.memory_space<vmem>>, vector<1x8x128xf32>,
    return
  }
  func.func @transform_0(%arg0: i32) -> (i32, i32) {
    %c0_i32 = arith.constant 0 : i32
    %c0_i32_0 = arith.constant 0 : i32
    return %arg0, %c0_i32 : i32, i32
  }
  func.func @transform_1(%arg0: i32) -> (i32, i32) {
    %c0_i32 = arith.constant 0 : i32
    %c0_i32_0 = arith.constant 0 : i32
    %c0_i32_1 = arith.constant 0 : i32
    return %c0_i32, %c0_i32_0 : i32, i32
  }
  func.func @transform_2(%arg0: i32) -> (i32, i32) {
    %c0_i32 = arith.constant 0 : i32
    %c0_i32_0 = arith.constant 0 : i32
    return %arg0, %c0_i32 : i32, i32
  }
  func.func @transform_3(%arg0: i32) -> (i32, i32) {
    %c0_i32 = arith.constant 0 : i32
    %c0_i32_0 = arith.constant 0 : i32
    return %arg0, %c0_i32 : i32, i32
  }
  func.func @transform_4(%arg0: i32) -> (i32, i32) {
    %c0_i32 = arith.constant 0 : i32
    %c0_i32_0 = arith.constant 0 : i32
    return %arg0, %c0_i32 : i32, i32
  }
  func.func @transform_5(%arg0: i32) -> (i32, i32) {
    %c0_i32 = arith.constant 0 : i32
    %c0_i32_0 = arith.constant 0 : i32
    return %arg0, %c0_i32 : i32, i32
  }
  func.func @transform_6(%arg0: i32) -> (i32, i32) {
    %c0_i32 = arith.constant 0 : i32
    %c0_i32_0 = arith.constant 0 : i32
    return %arg0, %c0_i32 : i32, i32
  }
  func.func @transform_7(%arg0: i32) -> (i32, i32, i32) {
    %c0_i32 = arith.constant 0 : i32
    %c0_i32_0 = arith.constant 0 : i32
    %c0_i32_1 = arith.constant 0 : i32
    return %arg0, %c0_i32, %c0_i32_0 : i32, i32, i32
  }
}

</mosaic_0001>

<llo_original>
// kernel: tpu_custom_call.1
$region0: #{tpu_custom_call.1}
  #allocation0 [shape = 'u32[]', space=smem, size = 0x4, offset = 0x4, fixed_abs, tag = 'smem constant byte address 0x4 - core index']
  #allocation1 [shape = 'u32[144,128]{1,0:T(1,128)}', space=vmem, size = 0x12000, scoped, tag = 'internal scratch']
  #allocation2 [shape = 'f32[64,16]{1,0:T(8,128)}', space=vmem, size = 0x8000, scoped, tag = 'scratch operand']
  %s0 = inlined_call_operand.vmem [shape: f32[256,32], index: 0, kind: input, shape index: {}]
  %s1 = inlined_call_operand.vmem [shape: f32[8,1], index: 1, kind: input, shape index: {}]
  %s2 = inlined_call_operand.vmem [shape: f32[16,2], index: 2, kind: input, shape index: {}]
  %s3 = inlined_call_operand.vmem [shape: f32[32,4], index: 3, kind: input, shape index: {}]
  %s4 = inlined_call_operand.vmem [shape: f32[64,8], index: 4, kind: input, shape index: {}]
  %s5 = inlined_call_operand.vmem [shape: f32[128,16], index: 5, kind: input, shape index: {}]
  %s6 = inlined_call_operand.vmem [shape: f32[256,32], index: 6, kind: input, shape index: {}]
  %s7 = inlined_call_operand.hbm [shape: f32[2,8,128], index: 7, kind: output, shape index: {}]
  %s8 = sld [smem:[#allocation0]]
  $region61: #{tpu_custom_call.1} parent=0
    _
  %s10 = ssub.s32 1, %s8
  %s11 = scalar_select 0, %s10, %s8
  $region1: #{tpu_custom_call.1} parent=0
    #allocation3 [shape = 'u8[8192]{0}', space=vmem, size = 0x2000, scoped, tag = 'output window, operand 0']
    #allocation4 [shape = 's32[2]{0}', space=sflag, size = 0x8, scoped, tag = 'scoped memory for tpu_custom_call.1']
    %12 = vsyncpa [#allocation4], 0
    %s13 = scalar_lea.sflag [#allocation4], 1
    %14 = vsyncpa %s13, 0
    loop: start=0, step=1, limit=4
    $region2: #{tpu_custom_call.1} parent=1 // loop_pre_header
      _
    $region3: #{tpu_custom_call.1} parent=1 // loop_header
      %s16 = sphi 0, %s20
      %p17 = scmp.ge.s32.totalorder %s16, 4
      %s26 = sphi 0, %s28
      %s29 = sphi 0, %s26
      %s30 = sphi 0, %s29
      %s46 = sphi 0, %s30
      %s50 = sphi 0, %s50
      %s52 = sphi 0, %s50
      %s53 = sphi 0, %s52
      %s67 = sphi 0, %s53
      %s73 = sphi 0, %s75
      %s76 = sphi 0, %s73
      %s77 = sphi 0, %s76
      %s93 = sphi 0, %s77
      %s99 = sphi 0, %s101
      %s102 = sphi 0, %s99
      %s103 = sphi 0, %s102
      %s119 = sphi 0, %s103
      %s125 = sphi 0, %s127
      %s128 = sphi 0, %s125
      %s129 = sphi 0, %s128
      %s145 = sphi 0, %s129
      %s151 = sphi 0, %s153
      %s154 = sphi 0, %s151
      %s155 = sphi 0, %s154
      %s171 = sphi 0, %s155
      %s177 = sphi 0, %s179
      %s180 = sphi 0, %s177
      %s181 = sphi 0, %s180
      %s197 = sphi 0, %s181
      %s203 = sphi 0, %s205
      %s206 = sphi 0, %s203
      %s207 = sphi 0, %s206
      %s223 = sphi 0, %s207
    $region4: #{tpu_custom_call.1} parent=1 // loop_header_branch
      %19 = sbr.rel (%p17) target = $region8
    $region5: #{tpu_custom_call.1} parent=1 // loop_body
      %s21 = ssub.s32 %s16, 1
      %s22 = ssub.s32 %s16, 2
      %s23 = sadd.s32 %s16, 1
      %s24 = ssub.s32 %s16, %s23
      %p25 = scmp.eq.s32.totalorder %s24, 0
      %s27 = sadd.s32 %s26, 1
      %s28 = scalar_select %p25, %s26, %s27
      %p31 = pneg %p25
      %p32 = scmp.eq.s32.totalorder %s16, 1
      %p33 = por %p31, %p32
      %p34 = scmp.ne.s32.totalorder %s26, %s29
      %p35 = scmp.eq.s32.totalorder %s16, 0
      %p36 = por %p34, %p35
      %p37 = scmp.ne.s32.totalorder %s26, %s29
      %p38 = scmp.eq.s32.totalorder %s21, 1
      %p39 = por %p37, %p38
      %p40 = scmp.ne.s32.totalorder %s29, %s30
      %p41 = scmp.eq.s32.totalorder %s21, 0
      %p42 = por %p40, %p41
      %p43 = scmp.ne.s32.totalorder %s29, %s30
      %p44 = scmp.eq.s32.totalorder %s22, 1
      %p45 = por %p43, %p44
      %p47 = scmp.ne.s32.totalorder %s30, %s46
      %p48 = scmp.eq.s32.totalorder %s22, 0
      %p49 = por %p47, %p48
      %s51 = sadd.s32 %s50, 1
      %p54 = scmp.eq.s32.totalorder %s16, 1
      %p55 = scmp.ne.s32.totalorder %s50, %s52
      %p56 = scmp.eq.s32.totalorder %s16, 0
      %p57 = por %p55, %p56
      %p58 = scmp.ne.s32.totalorder %s50, %s52
      %p59 = scmp.eq.s32.totalorder %s21, 1
      %p60 = por %p58, %p59
      %p61 = scmp.ne.s32.totalorder %s52, %s53
      %p62 = scmp.eq.s32.totalorder %s21, 0
      %p63 = por %p61, %p62
      %p64 = scmp.ne.s32.totalorder %s52, %s53
      %p65 = scmp.eq.s32.totalorder %s22, 1
      %p66 = por %p64, %p65
      %p68 = scmp.ne.s32.totalorder %s53, %s67
      %p69 = scmp.eq.s32.totalorder %s22, 0
      %p70 = por %p68, %p69
      %s71 = ssub.s32 %s16, %s23
      %p72 = scmp.eq.s32.totalorder %s71, 0
      %s74 = sadd.s32 %s73, 1
      %s75 = scalar_select %p72, %s73, %s74
      %p78 = pneg %p72
      %p79 = scmp.eq.s32.totalorder %s16, 1
      %p80 = por %p78, %p79
      %p81 = scmp.ne.s32.totalorder %s73, %s76
      %p82 = scmp.eq.s32.totalorder %s16, 0
      %p83 = por %p81, %p82
      %p84 = scmp.ne.s32.totalorder %s73, %s76
      %p85 = scmp.eq.s32.totalorder %s21, 1
      %p86 = por %p84, %p85
      %p87 = scmp.ne.s32.totalorder %s76, %s77
      %p88 = scmp.eq.s32.totalorder %s21, 0
      %p89 = por %p87, %p88
      %p90 = scmp.ne.s32.totalorder %s76, %s77
      %p91 = scmp.eq.s32.totalorder %s22, 1
      %p92 = por %p90, %p91
      %p94 = scmp.ne.s32.totalorder %s77, %s93
      %p95 = scmp.eq.s32.totalorder %s22, 0
      %p96 = por %p94, %p95
      %s97 = ssub.s32 %s16, %s23
      %p98 = scmp.eq.s32.totalorder %s97, 0
      %s100 = sadd.s32 %s99, 1
      %s101 = scalar_select %p98, %s99, %s100
      %p104 = pneg %p98
      %p105 = scmp.eq.s32.totalorder %s16, 1
      %p106 = por %p104, %p105
      %p107 = scmp.ne.s32.totalorder %s99, %s102
      %p108 = scmp.eq.s32.totalorder %s16, 0
      %p109 = por %p107, %p108
      %p110 = scmp.ne.s32.totalorder %s99, %s102
      %p111 = scmp.eq.s32.totalorder %s21, 1
      %p112 = por %p110, %p111
      %p113 = scmp.ne.s32.totalorder %s102, %s103
      %p114 = scmp.eq.s32.totalorder %s21, 0
      %p115 = por %p113, %p114
      %p116 = scmp.ne.s32.totalorder %s102, %s103
      %p117 = scmp.eq.s32.totalorder %s22, 1
      %p118 = por %p116, %p117
      %p120 = scmp.ne.s32.totalorder %s103, %s119
      %p121 = scmp.eq.s32.totalorder %s22, 0
      %p122 = por %p120, %p121
      %s123 = ssub.s32 %s16, %s23
      %p124 = scmp.eq.s32.totalorder %s123, 0
      %s126 = sadd.s32 %s125, 1
      %s127 = scalar_select %p124, %s125, %s126
      %p130 = pneg %p124
      %p131 = scmp.eq.s32.totalorder %s16, 1
      %p132 = por %p130, %p131
      %p133 = scmp.ne.s32.totalorder %s125, %s128
      %p134 = scmp.eq.s32.totalorder %s16, 0
      %p135 = por %p133, %p134
      %p136 = scmp.ne.s32.totalorder %s125, %s128
      %p137 = scmp.eq.s32.totalorder %s21, 1
      %p138 = por %p136, %p137
      %p139 = scmp.ne.s32.totalorder %s128, %s129
      %p140 = scmp.eq.s32.totalorder %s21, 0
      %p141 = por %p139, %p140
      %p142 = scmp.ne.s32.totalorder %s128, %s129
      %p143 = scmp.eq.s32.totalorder %s22, 1
      %p144 = por %p142, %p143
      %p146 = scmp.ne.s32.totalorder %s129, %s145
      %p147 = scmp.eq.s32.totalorder %s22, 0
      %p148 = por %p146, %p147
      %s149 = ssub.s32 %s16, %s23
      %p150 = scmp.eq.s32.totalorder %s149, 0
      %s152 = sadd.s32 %s151, 1
      %s153 = scalar_select %p150, %s151, %s152
      %p156 = pneg %p150
      %p157 = scmp.eq.s32.totalorder %s16, 1
      %p158 = por %p156, %p157
      %p159 = scmp.ne.s32.totalorder %s151, %s154
      %p160 = scmp.eq.s32.totalorder %s16, 0
      %p161 = por %p159, %p160
      %p162 = scmp.ne.s32.totalorder %s151, %s154
      %p163 = scmp.eq.s32.totalorder %s21, 1
      %p164 = por %p162, %p163
      %p165 = scmp.ne.s32.totalorder %s154, %s155
      %p166 = scmp.eq.s32.totalorder %s21, 0
      %p167 = por %p165, %p166
      %p168 = scmp.ne.s32.totalorder %s154, %s155
      %p169 = scmp.eq.s32.totalorder %s22, 1
      %p170 = por %p168, %p169
      %p172 = scmp.ne.s32.totalorder %s155, %s171
      %p173 = scmp.eq.s32.totalorder %s22, 0
      %p174 = por %p172, %p173
      %s175 = ssub.s32 %s16, %s23
      %p176 = scmp.eq.s32.totalorder %s175, 0
      %s178 = sadd.s32 %s177, 1
      %s179 = scalar_select %p176, %s177, %s178
      %p182 = pneg %p176
      %p183 = scmp.eq.s32.totalorder %s16, 1
      %p184 = por %p182, %p183
      %p185 = scmp.ne.s32.totalorder %s177, %s180
      %p186 = scmp.eq.s32.totalorder %s16, 0
      %p187 = por %p185, %p186
      %p188 = scmp.ne.s32.totalorder %s177, %s180
      %p189 = scmp.eq.s32.totalorder %s21, 1
      %p190 = por %p188, %p189
      %p191 = scmp.ne.s32.totalorder %s180, %s181
      %p192 = scmp.eq.s32.totalorder %s21, 0
      %p193 = por %p191, %p192
      %p194 = scmp.ne.s32.totalorder %s180, %s181
      %p195 = scmp.eq.s32.totalorder %s22, 1
      %p196 = por %p194, %p195
      %p198 = scmp.ne.s32.totalorder %s181, %s197
      %p199 = scmp.eq.s32.totalorder %s22, 0
      %p200 = por %p198, %p199
      %s201 = ssub.s32 %s16, %s23
      %p202 = scmp.eq.s32.totalorder %s201, 0
      %s204 = sadd.s32 %s203, 1
      %s205 = scalar_select %p202, %s203, %s204
      %p208 = pneg %p202
      %p209 = scmp.eq.s32.totalorder %s16, 1
      %p210 = por %p208, %p209
      %p211 = scmp.ne.s32.totalorder %s203, %s206
      %p212 = scmp.eq.s32.totalorder %s16, 0
      %p213 = por %p211, %p212
      %p214 = scmp.ne.s32.totalorder %s203, %s206
      %p215 = scmp.eq.s32.totalorder %s21, 1
      %p216 = por %p214, %p215
      %p217 = scmp.ne.s32.totalorder %s206, %s207
      %p218 = scmp.eq.s32.totalorder %s21, 0
      %p219 = por %p217, %p218
      %p220 = scmp.ne.s32.totalorder %s206, %s207
      %p221 = scmp.eq.s32.totalorder %s22, 1
      %p222 = por %p220, %p221
      %p224 = scmp.ne.s32.totalorder %s207, %s223
      %p225 = scmp.eq.s32.totalorder %s22, 0
      %p226 = por %p224, %p225
      %p227 = scmp.le.s32.totalorder 1, %s16
      %p228 = scmp.lt.s32.totalorder %s16, 3
      %p229 = pnand %p227, %p228
      %p230 = pneg %p229
      // Predicated region
      $region9: #{tpu_custom_call.1} parent=5 // pred_check
        _
      $region10: #{tpu_custom_call.1} parent=5 // pred_check_branch
        %232 = sbr.rel (%p229) target = $region12
      $region11: #{tpu_custom_call.1} parent=5 // pred_region
        %s233 = ssub.s32 %s16, 1
        // Predicated region
        $region13: #{tpu_custom_call.1} parent=11 // pred_check
          %p234 = pneg %p63
        $region14: #{tpu_custom_call.1} parent=11 // pred_check_branch
          %236 = sbr.rel (%p234) target = $region16
        $region15: #{tpu_custom_call.1} parent=11 // pred_region
          _
        $region16: #{tpu_custom_call.1} parent=11 // pred_fallthru
          _
      $region12: #{tpu_custom_call.1} parent=5 // pred_fallthru
        _
      %p237 = scmp.lt.s32.totalorder %s16, 2
      // Predicated region
      $region17: #{tpu_custom_call.1} parent=5 // pred_check
        %p238 = pneg %p237
      $region18: #{tpu_custom_call.1} parent=5 // pred_check_branch
        %240 = sbr.rel (%p238) target = $region20
      $region19: #{tpu_custom_call.1} parent=5 // pred_region
        // Predicated region
        $region21: #{tpu_custom_call.1} parent=19 // pred_check
          %p241 = pneg %p36
        $region22: #{tpu_custom_call.1} parent=19 // pred_check_branch
          %243 = sbr.rel (%p241) target = $region24
        $region23: #{tpu_custom_call.1} parent=19 // pred_region
          %s244 = smul.u32 16, %s16
          %p245 = scmp.lt.s32.totalorder %s244, 31
          %s246 = scalar_select %p245, %s244, 31
          %s247 = smul.addr %s246, 8
          %s248 = scalar_lea.vmem %s0, %s247
          %s249 = smul.u32 16, %s16
        $region24: #{tpu_custom_call.1} parent=19 // pred_fallthru
          _
        // Predicated region
        $region25: #{tpu_custom_call.1} parent=19 // pred_check
          %p250 = pneg %p83
        $region26: #{tpu_custom_call.1} parent=19 // pred_check_branch
          %252 = sbr.rel (%p250) target = $region28
        $region27: #{tpu_custom_call.1} parent=19 // pred_region
          %p253 = scmp.lt.s32.totalorder %s16, 1
          %s254 = scalar_select %p253, %s16, 1
          %s255 = smul.addr %s254, 8
          %s256 = scalar_lea.vmem %s2, %s255
        $region28: #{tpu_custom_call.1} parent=19 // pred_fallthru
          _
        // Predicated region
        $region29: #{tpu_custom_call.1} parent=19 // pred_check
          %p257 = pneg %p109
        $region30: #{tpu_custom_call.1} parent=19 // pred_check_branch
          %259 = sbr.rel (%p257) target = $region32
        $region31: #{tpu_custom_call.1} parent=19 // pred_region
          %s260 = smul.u32 2, %s16
          %p261 = scmp.lt.s32.totalorder %s260, 3
          %s262 = scalar_select %p261, %s260, 3
          %s263 = smul.addr %s262, 8
          %s264 = scalar_lea.vmem %s3, %s263
          %s265 = smul.u32 2, %s16
        $region32: #{tpu_custom_call.1} parent=19 // pred_fallthru
          _
        // Predicated region
        $region33: #{tpu_custom_call.1} parent=19 // pred_check
          %p266 = pneg %p135
        $region34: #{tpu_custom_call.1} parent=19 // pred_check_branch
          %268 = sbr.rel (%p266) target = $region36
        $region35: #{tpu_custom_call.1} parent=19 // pred_region
          %s269 = smul.u32 4, %s16
          %p270 = scmp.lt.s32.totalorder %s269, 7
          %s271 = scalar_select %p270, %s269, 7
          %s272 = smul.addr %s271, 8
          %s273 = scalar_lea.vmem %s4, %s272
          %s274 = smul.u32 4, %s16
        $region36: #{tpu_custom_call.1} parent=19 // pred_fallthru
          _
        // Predicated region
        $region37: #{tpu_custom_call.1} parent=19 // pred_check
          %p275 = pneg %p161
        $region38: #{tpu_custom_call.1} parent=19 // pred_check_branch
          %277 = sbr.rel (%p275) target = $region40
        $region39: #{tpu_custom_call.1} parent=19 // pred_region
          %s278 = smul.u32 8, %s16
          %p279 = scmp.lt.s32.totalorder %s278, 15
          %s280 = scalar_select %p279, %s278, 15
          %s281 = smul.addr %s280, 8
          %s282 = scalar_lea.vmem %s5, %s281
          %s283 = smul.u32 8, %s16
        $region40: #{tpu_custom_call.1} parent=19 // pred_fallthru
          _
        // Predicated region
        $region41: #{tpu_custom_call.1} parent=19 // pred_check
          %p284 = pneg %p187
        $region42: #{tpu_custom_call.1} parent=19 // pred_check_branch
          %286 = sbr.rel (%p284) target = $region44
        $region43: #{tpu_custom_call.1} parent=19 // pred_region
          %s287 = smul.u32 16, %s16
          %p288 = scmp.lt.s32.totalorder %s287, 31
          %s289 = scalar_select %p288, %s287, 31
          %s290 = smul.addr %s289, 8
          %s291 = scalar_lea.vmem %s6, %s290
          %s292 = smul.u32 16, %s16
        $region44: #{tpu_custom_call.1} parent=19 // pred_fallthru
          _
      $region20: #{tpu_custom_call.1} parent=5 // pred_fallthru
        _
      %p293 = scmp.le.s32.totalorder 1, %s16
      %p294 = scmp.lt.s32.totalorder %s16, 3
      %p295 = pnand %p293, %p294
      %p296 = pneg %p295
      // Predicated region
      $region45: #{tpu_custom_call.1} parent=5 // pred_check
        _
      $region46: #{tpu_custom_call.1} parent=5 // pred_check_branch
        %298 = sbr.rel (%p295) target = $region48
      $region47: #{tpu_custom_call.1} parent=5 // pred_region
        %s299 = ssub.s32 %s16, 1
        %s300 = smul.u32 16, %s21
        %p301 = scmp.lt.s32.totalorder %s300, 31
        %s302 = scalar_select %p301, %s300, 31
        %s303 = smul.addr %s302, 8
        %s304 = scalar_lea.vmem %s0, %s303
        %p305 = pneg %p42
        %p306 = pneg %p39
        %p307 = pneg %p63
        %p308 = pneg %p60
        %p309 = scmp.lt.s32.totalorder %s21, 1
        %s310 = scalar_select %p309, %s21, 1
        %s311 = smul.addr %s310, 8
        %s312 = scalar_lea.vmem %s2, %s311
        %p313 = pneg %p89
        %p314 = pneg %p86
        %s315 = smul.u32 2, %s21
        %p316 = scmp.lt.s32.totalorder %s315, 3
        %s317 = scalar_select %p316, %s315, 3
        %s318 = smul.addr %s317, 8
        %s319 = scalar_lea.vmem %s3, %s318
        %p320 = pneg %p115
        %p321 = pneg %p112
        %s322 = smul.u32 4, %s21
        %p323 = scmp.lt.s32.totalorder %s322, 7
        %s324 = scalar_select %p323, %s322, 7
        %s325 = smul.addr %s324, 8
        %s326 = scalar_lea.vmem %s4, %s325
        %p327 = pneg %p141
        %p328 = pneg %p138
        %s329 = smul.u32 8, %s21
        %p330 = scmp.lt.s32.totalorder %s329, 15
        %s331 = scalar_select %p330, %s329, 15
        %s332 = smul.addr %s331, 8
        %s333 = scalar_lea.vmem %s5, %s332
        %p334 = pneg %p167
        %p335 = pneg %p164
        %s336 = smul.u32 16, %s21
        %p337 = scmp.lt.s32.totalorder %s336, 31
        %s338 = scalar_select %p337, %s336, 31
        %s339 = smul.addr %s338, 8
        %s340 = scalar_lea.vmem %s6, %s339
        %p341 = pneg %p193
        %p342 = pneg %p190
        %p343 = pneg %p219
        %p344 = pneg %p216
        %s345 = sand.u32 %s206, 1
        %s346 = scalar_lea.sflag [#allocation4], %s345
        %s347 = sand.u32 %s206, 1
        %s348 = smul.addr %s347, 8
        %s349 = scalar_lea.vmem [#allocation3], %s348
        %s350 = smul.u32 16, %s21
        %p351 = scmp.lt.s32.totalorder %s350, 31
        %s352 = scalar_select %p351, %s350, 31
        %s353 = smul.addr %s352, 8
        %s354 = scalar_lea.vmem %s0, %s353
        %s355 = smul.u32 16, %s21
        %p356 = scmp.lt.s32.totalorder %s21, 1
        %s357 = scalar_select %p356, %s21, 1
        %s358 = smul.addr %s357, 8
        %s359 = scalar_lea.vmem %s2, %s358
        %s360 = smul.u32 2, %s21
        %p361 = scmp.lt.s32.totalorder %s360, 3
        %s362 = scalar_select %p361, %s360, 3
        %s363 = smul.addr %s362, 8
        %s364 = scalar_lea.vmem %s3, %s363
        %s365 = smul.u32 2, %s21
        %s366 = smul.u32 4, %s21
        %p367 = scmp.lt.s32.totalorder %s366, 7
        %s368 = scalar_select %p367, %s366, 7
        %s369 = smul.addr %s368, 8
        %s370 = scalar_lea.vmem %s4, %s369
        %s371 = smul.u32 4, %s21
        %s372 = smul.u32 8, %s21
        %p373 = scmp.lt.s32.totalorder %s372, 15
        %s374 = scalar_select %p373, %s372, 15
        %s375 = smul.addr %s374, 8
        %s376 = scalar_lea.vmem %s5, %s375
        %s377 = smul.u32 8, %s21
        %s378 = smul.u32 16, %s21
        %p379 = scmp.lt.s32.totalorder %s378, 31
        %s380 = scalar_select %p379, %s378, 31
        %s381 = smul.addr %s380, 8
        %s382 = scalar_lea.vmem %s6, %s381
        %s383 = smul.u32 16, %s21
        %v384 = vld [vmem:[%s382] sm:$0xff]
        %v385 = vld [vmem:[%s382 + $0x8] sm:$0xff]
        %v386 = vld [vmem:[%s382 + $0x10] sm:$0xff]
        %v387 = vld [vmem:[%s382 + $0x18] sm:$0xff]
        %v388 = vld [vmem:[%s382 + $0x20] sm:$0xff]
        %v389 = vld [vmem:[%s382 + $0x28] sm:$0xff]
        %v390 = vld [vmem:[%s382 + $0x30] sm:$0xff]
        %v391 = vld [vmem:[%s382 + $0x38] sm:$0xff]
        %v392 = vld [vmem:[%s382 + $0x40] sm:$0xff]
        %v393 = vld [vmem:[%s382 + $0x48] sm:$0xff]
        %v394 = vld [vmem:[%s382 + $0x50] sm:$0xff]
        %v395 = vld [vmem:[%s382 + $0x58] sm:$0xff]
        %v396 = vld [vmem:[%s382 + $0x60] sm:$0xff]
        %v397 = vld [vmem:[%s382 + $0x68] sm:$0xff]
        %v398 = vld [vmem:[%s382 + $0x70] sm:$0xff]
        %v399 = vld [vmem:[%s382 + $0x78] sm:$0xff]
        %v400 = vld [vmem:[%s354] sm:$0xff]
        %v401 = vld [vmem:[%s354 + $0x8] sm:$0xff]
        %v402 = vld [vmem:[%s354 + $0x10] sm:$0xff]
        %v403 = vld [vmem:[%s354 + $0x18] sm:$0xff]
        %v404 = vld [vmem:[%s354 + $0x20] sm:$0xff]
        %v405 = vld [vmem:[%s354 + $0x28] sm:$0xff]
        %v406 = vld [vmem:[%s354 + $0x30] sm:$0xff]
        %v407 = vld [vmem:[%s354 + $0x38] sm:$0xff]
        %v408 = vld [vmem:[%s354 + $0x40] sm:$0xff]
        %v409 = vld [vmem:[%s354 + $0x48] sm:$0xff]
        %v410 = vld [vmem:[%s354 + $0x50] sm:$0xff]
        %v411 = vld [vmem:[%s354 + $0x58] sm:$0xff]
        %v412 = vld [vmem:[%s354 + $0x60] sm:$0xff]
        %v413 = vld [vmem:[%s354 + $0x68] sm:$0xff]
        %v414 = vld [vmem:[%s354 + $0x70] sm:$0xff]
        %v415 = vld [vmem:[%s354 + $0x78] sm:$0xff]
        %v416 = vsub.f32 %v384, %v400
        %v417 = vsub.f32 %v385, %v401
        %v418 = vsub.f32 %v386, %v402
        %v419 = vsub.f32 %v387, %v403
        %v420 = vsub.f32 %v388, %v404
        %v421 = vsub.f32 %v389, %v405
        %v422 = vsub.f32 %v390, %v406
        %v423 = vsub.f32 %v391, %v407
        %v424 = vsub.f32 %v392, %v408
        %v425 = vsub.f32 %v393, %v409
        %v426 = vsub.f32 %v394, %v410
        %v427 = vsub.f32 %v395, %v411
        %v428 = vsub.f32 %v396, %v412
        %v429 = vsub.f32 %v397, %v413
        %v430 = vsub.f32 %v398, %v414
        %v431 = vsub.f32 %v399, %v415
        %v432 = vmul.f32 %v416, %v416
        %v433 = vmul.f32 %v417, %v417
        %v434 = vmul.f32 %v418, %v418
        %v435 = vmul.f32 %v419, %v419
        %v436 = vmul.f32 %v420, %v420
        %v437 = vmul.f32 %v421, %v421
        %v438 = vmul.f32 %v422, %v422
        %v439 = vmul.f32 %v423, %v423
        %v440 = vmul.f32 %v424, %v424
        %v441 = vmul.f32 %v425, %v425
        %v442 = vmul.f32 %v426, %v426
        %v443 = vmul.f32 %v427, %v427
        %v444 = vmul.f32 %v428, %v428
        %v445 = vmul.f32 %v429, %v429
        %v446 = vmul.f32 %v430, %v430
        %v447 = vmul.f32 %v431, %v431
        %vm448 = vcmask 261120
        %v449 = vsel %vm448, %v432, 0.0
        %v450 = vsel %vm448, %v433, 0.0
        %v451 = vadd.f32 %v449, %v450
        %v452 = vsel %vm448, %v434, 0.0
        %v453 = vadd.f32 %v451, %v452
        %v454 = vsel %vm448, %v435, 0.0
        %v455 = vadd.f32 %v453, %v454
        %v456 = vsel %vm448, %v436, 0.0
        %v457 = vadd.f32 %v455, %v456
        %v458 = vsel %vm448, %v437, 0.0
        %v459 = vadd.f32 %v457, %v458
        %v460 = vsel %vm448, %v438, 0.0
        %v461 = vadd.f32 %v459, %v460
        %v462 = vsel %vm448, %v439, 0.0
        %v463 = vadd.f32 %v461, %v462
        %v464 = vsel %vm448, %v440, 0.0
        %v465 = vadd.f32 %v463, %v464
        %v466 = vsel %vm448, %v441, 0.0
        %v467 = vadd.f32 %v465, %v466
        %v468 = vsel %vm448, %v442, 0.0
        %v469 = vadd.f32 %v467, %v468
        %v470 = vsel %vm448, %v443, 0.0
        %v471 = vadd.f32 %v469, %v470
        %v472 = vsel %vm448, %v444, 0.0
        %v473 = vadd.f32 %v471, %v472
        %v474 = vsel %vm448, %v445, 0.0
        %v475 = vadd.f32 %v473, %v474
        %v476 = vsel %vm448, %v446, 0.0
        %v477 = vadd.f32 %v475, %v476
        %v478 = vsel %vm448, %v447, 0.0
        %v479 = vadd.f32 %v477, %v478
        %480 = vadd.xlane.f32.xlu0 %v479
        %v481 = vpop.xlane.xlu0 %480
        %v482 = vrot.slane %v481, 4
        %v483 = vadd.f32 %v481, %v482
        %v484 = vrot.slane %v483, 2
        %v485 = vadd.f32 %v483, %v484
        %v486 = vrot.slane %v485, 1
        %v487 = vadd.f32 %v485, %v486
        %s488 = vtos %v487
        %s489 = smul.f32 %s488, 0.00012207031
        %s490 = sadd.f32 %s489, 0.0
        %v491 = vld [vmem:[%s354] ss:$2 sm:$0xff]
        %s492 = scalar_lea.vmem %s354, 16
        %v493 = vld [vmem:[%s492] ss:$2 sm:$0xff]
        %s494 = scalar_lea.vmem %s354, 32
        %v495 = vld [vmem:[%s494] ss:$2 sm:$0xff]
        %s496 = scalar_lea.vmem %s354, 48
        %v497 = vld [vmem:[%s496] ss:$2 sm:$0xff]
        %s498 = scalar_lea.vmem %s354, 64
        %v499 = vld [vmem:[%s498] ss:$2 sm:$0xff]
        %s500 = scalar_lea.vmem %s354, 80
        %v501 = vld [vmem:[%s500] ss:$2 sm:$0xff]
        %s502 = scalar_lea.vmem %s354, 96
        %v503 = vld [vmem:[%s502] ss:$2 sm:$0xff]
        %s504 = scalar_lea.vmem %s354, 112
        %v505 = vld [vmem:[%s504] ss:$2 sm:$0xff]
        %s506 = scalar_lea.vmem %s354, 1
        %v507 = vld [vmem:[%s506] ss:$2 sm:$0xff]
        %s508 = scalar_lea.vmem %s354, 17
        %v509 = vld [vmem:[%s508] ss:$2 sm:$0xff]
        %s510 = scalar_lea.vmem %s354, 33
        %v511 = vld [vmem:[%s510] ss:$2 sm:$0xff]
        %s512 = scalar_lea.vmem %s354, 49
        %v513 = vld [vmem:[%s512] ss:$2 sm:$0xff]
        %s514 = scalar_lea.vmem %s354, 65
        %v515 = vld [vmem:[%s514] ss:$2 sm:$0xff]
        %s516 = scalar_lea.vmem %s354, 81
        %v517 = vld [vmem:[%s516] ss:$2 sm:$0xff]
        %s518 = scalar_lea.vmem %s354, 97
        %v519 = vld [vmem:[%s518] ss:$2 sm:$0xff]
        %s520 = scalar_lea.vmem %s354, 113
        %v521 = vld [vmem:[%s520] ss:$2 sm:$0xff]
        %v522 = vmax.f32 %v491, %v507
        %v523 = vmax.f32 %v493, %v509
        %v524 = vmax.f32 %v495, %v511
        %v525 = vmax.f32 %v497, %v513
        %v526 = vmax.f32 %v499, %v515
        %v527 = vmax.f32 %v501, %v517
        %v528 = vmax.f32 %v503, %v519
        %v529 = vmax.f32 %v505, %v521
        %v530 = vlaneseq
        %v531 = vshrl.u32 %v530, 7
        %v532 = vadd.s32 %v531, 8
        %v533 = vadd.s32 %v531, 16
        %v534 = vadd.s32 %v531, 24
        %v535 = vlaneseq
        %v536 = vand.u32 %v535, 127
        %vm537 = vcmp.lt.s32.totalorder %v536, 16
        %v538 = vmul.u32 %v536, 2
        %vm539 = vcmp.eq.s32.totalorder %v531, %v538
        %vm540 = vcmp.eq.s32.totalorder %v532, %v538
        %vm541 = vcmp.eq.s32.totalorder %v533, %v538
        %vm542 = vcmp.eq.s32.totalorder %v534, %v538
        %vm543 = vmand %vm537, %vm539
        %vm544 = vmand %vm537, %vm540
        %vm545 = vmand %vm537, %vm541
        %vm546 = vmand %vm537, %vm542
        %vm547 = vcmp.ge.s32.totalorder %v536, 16
        %v548 = vsub.s32 %v536, 16
        %v549 = vmul.u32 %v548, 2
        %v550 = vadd.s32 %v549, 1
        %vm551 = vcmp.eq.s32.totalorder %v531, %v550
        %vm552 = vcmp.eq.s32.totalorder %v532, %v550
        %vm553 = vcmp.eq.s32.totalorder %v533, %v550
        %vm554 = vcmp.eq.s32.totalorder %v534, %v550
        %vm555 = vmand %vm547, %vm551
        %vm556 = vmand %vm547, %vm552
        %vm557 = vmand %vm547, %vm553
        %vm558 = vmand %vm547, %vm554
        %vm559 = vmor %vm543, %vm555
        %vm560 = vmor %vm544, %vm556
        %vm561 = vmor %vm545, %vm557
        %vm562 = vmor %vm546, %vm558
        %v563 = vsel %vm559, 1, 0
        %v564 = vsel %vm560, 1, 0
        %v565 = vsel %vm561, 1, 0
        %v566 = vsel %vm562, 1, 0
        %v567 = vcvt.s32.f32 %v563
        %v568 = vcvt.s32.f32 %v564
        %v569 = vcvt.s32.f32 %v565
        %v570 = vcvt.s32.f32 %v566
        %v572 = vsel %vm448, %v522, 0
        %v575 = vsel %vm448, %v523, 0
        %v578 = vsel %vm448, %v524, 0
        %v581 = vsel %vm448, %v525, 0
        %v584 = vsel %vm448, %v526, 0
        %v587 = vsel %vm448, %v527, 0
        %v590 = vsel %vm448, %v528, 0
        %v593 = vsel %vm448, %v529, 0
        %595 = vmatprep.subr.mxu0 0.0
        %v596 = vand.u32 %v567, 4294901760
        %597 = vmatpush1.msra.mxu0 %v596
        %598 = vmatprep.subr.mxu0 0.0
        %v599 = vand.u32 %v568, 4294901760
        %600 = vmatpush1.msra.mxu0 %v599
        %601 = vmatprep.subr.mxu0 0.0
        %v602 = vand.u32 %v569, 4294901760
        %603 = vmatpush1.msra.mxu0 %v602
        %604 = vmatprep.subr.mxu0 0.0
        %v605 = vand.u32 %v570, 4294901760
        %606 = vmatpush1.msra.mxu0 %v605
        %607 = vmatprep.subr.mxu0 0.0
        %608 = vmatpush1.msra.mxu0 0.0
        %609 = vmatprep.subr.mxu0 0.0
        %610 = vmatpush1.msra.mxu0 0.0
        %611 = vmatprep.subr.mxu0 0.0
        %612 = vmatpush1.msra.mxu0 0.0
        %613 = vmatprep.subr.mxu0 0.0
        %614 = vmatpush1.msra.mxu0 0.0
        %615 = vmatprep.subr.mxu0 0.0
        %616 = vmatpush1.msra.mxu0 0.0
        %617 = vmatprep.subr.mxu0 0.0
        %618 = vmatpush1.msra.mxu0 0.0
        %619 = vmatprep.subr.mxu0 0.0
        %620 = vmatpush1.msra.mxu0 0.0
        %621 = vmatprep.subr.mxu0 0.0
        %622 = vmatpush1.msra.mxu0 0.0
        %623 = vmatprep.subr.mxu0 0.0
        %624 = vmatpush1.msra.mxu0 0.0
        %625 = vmatprep.subr.mxu0 0.0
        %626 = vmatpush1.msra.mxu0 0.0
        %627 = vmatprep.subr.mxu0 0.0
        %628 = vmatpush1.msra.mxu0 0.0
        %629 = vmatprep.subr.mxu0 0.0
        %630 = vmatpush1.msra.mxu0 0.0
        %631 = vmatprep.subr.mxu0 0.0
        %632 = vmatpush1.msra.mxu0 0.0
        %633 = vmatprep.subr.mxu0 0.0
        %634 = vmatpush1.msra.mxu0 0.0
        %635 = vmatprep.subr.mxu0 0.0
        %636 = vmatpush1.msra.mxu0 0.0
        %637 = vmatprep.subr.mxu0 0.0
        %638 = vmatpush1.msra.mxu0 0.0
        %639 = vmatprep.subr.mxu0 0.0
        %640 = vmatpush1.msra.mxu0 0.0
        %641 = vmatprep.subr.mxu0 0.0
        %642 = vmatpush1.msra.mxu0 0.0
        %643 = vmatprep.subr.mxu0 0.0
        %644 = vmatpush1.msra.mxu0 0.0
        %645 = vmatprep.subr.mxu0 0.0
        %646 = vmatpush1.msra.mxu0 0.0
        %647 = vmatprep.subr.mxu0 0.0
        %648 = vmatpush1.msra.mxu0 0.0
        %649 = vmatprep.subr.mxu0 0.0
        %650 = vmatpush1.msra.mxu0 0.0
        %651 = vmatprep.subr.mxu0 0.0
        %652 = vmatpush1.msra.mxu0 0.0
        %653 = vmatprep.subr.mxu0 0.0
        %654 = vmatpush1.msra.mxu0 0.0
        %655 = vmatprep.subr.mxu0 0.0
        %656 = vmatpush1.msra.mxu0 0.0
        %657 = vmatprep.subr.mxu0 0.0
        %658 = vmatpush1.msra.mxu0 0.0
        %659 = vmatprep.subr.mxu0 0.0
        %660 = vmatpush1.msra.mxu0 0.0
        %661 = vmatprep.subr.mxu0 0.0
        %662 = vmatpush1.msra.mxu0 0.0
        %663 = vmatprep.mubr.f32.mxu0 0.0
        %v664 = vand.u32 %v572, 4294901760
        %v665 = vsub.f32 %v572, %v664
        %v666 = vand.u32 %v665, 4294901760
        %v667 = vsub.f32 %v665, %v666
        %v668 = vand.u32 %v667, 4294901760
        %669 = vmatmul.mubr.f32.gmra.mrb[0].mxu0 %v668
        %v670 = vpop.f32.mrb[0].mxu0
        %v671 = vadd.f32 0.0, %v670
        %v672 = vpop.f32.mrb[0].mxu0
        %673 = vmatprep.mubr.f32.mxu0 0.0
        %v674 = vand.u32 %v575, 4294901760
        %v675 = vsub.f32 %v575, %v674
        %v676 = vand.u32 %v675, 4294901760
        %v677 = vsub.f32 %v675, %v676
        %v678 = vand.u32 %v677, 4294901760
        %679 = vmatmul.mubr.f32.gmra.mrb[0].mxu0 %v678
        %v680 = vpop.f32.mrb[0].mxu0
        %v681 = vadd.f32 0.0, %v680
        %v682 = vpop.f32.mrb[0].mxu0
        %683 = vmatprep.mubr.f32.mxu0 0.0
        %v684 = vand.u32 %v578, 4294901760
        %v685 = vsub.f32 %v578, %v684
        %v686 = vand.u32 %v685, 4294901760
        %v687 = vsub.f32 %v685, %v686
        %v688 = vand.u32 %v687, 4294901760
        %689 = vmatmul.mubr.f32.gmra.mrb[0].mxu0 %v688
        %v690 = vpop.f32.mrb[0].mxu0
        %v691 = vadd.f32 0.0, %v690
        %v692 = vpop.f32.mrb[0].mxu0
        %693 = vmatprep.mubr.f32.mxu0 0.0
        %v694 = vand.u32 %v581, 4294901760
        %v695 = vsub.f32 %v581, %v694
        %v696 = vand.u32 %v695, 4294901760
        %v697 = vsub.f32 %v695, %v696
        %v698 = vand.u32 %v697, 4294901760
        %699 = vmatmul.mubr.f32.gmra.mrb[0].mxu0 %v698
        %v700 = vpop.f32.mrb[0].mxu0
        %v701 = vadd.f32 0.0, %v700
        %v702 = vpop.f32.mrb[0].mxu0
        %703 = vmatprep.mubr.f32.mxu0 0.0
        %v704 = vand.u32 %v584, 4294901760
        %v705 = vsub.f32 %v584, %v704
        %v706 = vand.u32 %v705, 4294901760
        %v707 = vsub.f32 %v705, %v706
        %v708 = vand.u32 %v707, 4294901760
        %709 = vmatmul.mubr.f32.gmra.mrb[0].mxu0 %v708
        %v710 = vpop.f32.mrb[0].mxu0
        %v711 = vadd.f32 0.0, %v710
        %v712 = vpop.f32.mrb[0].mxu0
        %713 = vmatprep.mubr.f32.mxu0 0.0
        %v714 = vand.u32 %v587, 4294901760
        %v715 = vsub.f32 %v587, %v714
        %v716 = vand.u32 %v715, 4294901760
        %v717 = vsub.f32 %v715, %v716
        %v718 = vand.u32 %v717, 4294901760
        %719 = vmatmul.mubr.f32.gmra.mrb[0].mxu0 %v718
        %v720 = vpop.f32.mrb[0].mxu0
        %v721 = vadd.f32 0.0, %v720
        %v722 = vpop.f32.mrb[0].mxu0
        %723 = vmatprep.mubr.f32.mxu0 0.0
        %v724 = vand.u32 %v590, 4294901760
        %v725 = vsub.f32 %v590, %v724
        %v726 = vand.u32 %v725, 4294901760
        %v727 = vsub.f32 %v725, %v726
        %v728 = vand.u32 %v727, 4294901760
        %729 = vmatmul.mubr.f32.gmra.mrb[0].mxu0 %v728
        %v730 = vpop.f32.mrb[0].mxu0
        %v731 = vadd.f32 0.0, %v730
        %v732 = vpop.f32.mrb[0].mxu0
        %733 = vmatprep.mubr.f32.mxu0 0.0
        %v734 = vand.u32 %v593, 4294901760
        %v735 = vsub.f32 %v593, %v734
        %v736 = vand.u32 %v735, 4294901760
        %v737 = vsub.f32 %v735, %v736
        %v738 = vand.u32 %v737, 4294901760
        %739 = vmatmul.mubr.f32.gmra.mrb[0].mxu0 %v738
        %v740 = vpop.f32.mrb[0].mxu0
        %v741 = vadd.f32 0.0, %v740
        %v742 = vpop.f32.mrb[0].mxu0
        %743 = vdwg.mxu0
        %744 = vmatprep.subr.mxu0 0.0
        %v745 = vand.u32 %v567, 4294901760
        %v746 = vsub.f32 %v567, %v745
        %v747 = vand.u32 %v746, 4294901760
        %v748 = vsub.f32 %v746, %v747
        %v749 = vand.u32 %v748, 4294901760
        %750 = vmatpush1.msra.mxu0 %v749
        %751 = vmatprep.subr.mxu0 0.0
        %v752 = vand.u32 %v568, 4294901760
        %v753 = vsub.f32 %v568, %v752
        %v754 = vand.u32 %v753, 4294901760
        %v755 = vsub.f32 %v753, %v754
        %v756 = vand.u32 %v755, 4294901760
        %757 = vmatpush1.msra.mxu0 %v756
        %758 = vmatprep.subr.mxu0 0.0
        %v759 = vand.u32 %v569, 4294901760
        %v760 = vsub.f32 %v569, %v759
        %v761 = vand.u32 %v760, 4294901760
        %v762 = vsub.f32 %v760, %v761
        %v763 = vand.u32 %v762, 4294901760
        %764 = vmatpush1.msra.mxu0 %v763
        %765 = vmatprep.subr.mxu0 0.0
        %v766 = vand.u32 %v570, 4294901760
        %v767 = vsub.f32 %v570, %v766
        %v768 = vand.u32 %v767, 4294901760
        %v769 = vsub.f32 %v767, %v768
        %v770 = vand.u32 %v769, 4294901760
        %771 = vmatpush1.msra.mxu0 %v770
        %772 = vmatprep.subr.mxu0 0.0
        %773 = vmatpush1.msra.mxu0 0.0
        %774 = vmatprep.subr.mxu0 0.0
        %775 = vmatpush1.msra.mxu0 0.0
        %776 = vmatprep.subr.mxu0 0.0
        %777 = vmatpush1.msra.mxu0 0.0
        %778 = vmatprep.subr.mxu0 0.0
        %779 = vmatpush1.msra.mxu0 0.0
        %780 = vmatprep.subr.mxu0 0.0
        %781 = vmatpush1.msra.mxu0 0.0
        %782 = vmatprep.subr.mxu0 0.0
        %783 = vmatpush1.msra.mxu0 0.0
        %784 = vmatprep.subr.mxu0 0.0
        %785 = vmatpush1.msra.mxu0 0.0
        %786 = vmatprep.subr.mxu0 0.0
        %787 = vmatpush1.msra.mxu0 0.0
        %788 = vmatprep.subr.mxu0 0.0
        %789 = vmatpush1.msra.mxu0 0.0
        %790 = vmatprep.subr.mxu0 0.0
        %791 = vmatpush1.msra.mxu0 0.0
        %792 = vmatprep.subr.mxu0 0.0
        %793 = vmatpush1.msra.mxu0 0.0
        %794 = vmatprep.subr.mxu0 0.0
        %795 = vmatpush1.msra.mxu0 0.0
        %796 = vmatprep.subr.mxu0 0.0
        %797 = vmatpush1.msra.mxu0 0.0
        %798 = vmatprep.subr.mxu0 0.0
        %799 = vmatpush1.msra.mxu0 0.0
        %800 = vmatprep.subr.mxu0 0.0
        %801 = vmatpush1.msra.mxu0 0.0
        %802 = vmatprep.subr.mxu0 0.0
        %803 = vmatpush1.msra.mxu0 0.0
        %804 = vmatprep.subr.mxu0 0.0
        %805 = vmatpush1.msra.mxu0 0.0
        %806 = vmatprep.subr.mxu0 0.0
        %807 = vmatpush1.msra.mxu0 0.0
        %808 = vmatprep.subr.mxu0 0.0
        %809 = vmatpush1.msra.mxu0 0.0
        %810 = vmatprep.subr.mxu0 0.0
        %811 = vmatpush1.msra.mxu0 0.0
        %812 = vmatprep.subr.mxu0 0.0
        %813 = vmatpush1.msra.mxu0 0.0
        %814 = vmatprep.subr.mxu0 0.0
        %815 = vmatpush1.msra.mxu0 0.0
        %816 = vmatprep.subr.mxu0 0.0
        %817 = vmatpush1.msra.mxu0 0.0
        %818 = vmatprep.subr.mxu0 0.0
        %819 = vmatpush1.msra.mxu0 0.0
        %820 = vmatprep.subr.mxu0 0.0
        %821 = vmatpush1.msra.mxu0 0.0
        %822 = vmatprep.subr.mxu0 0.0
        %823 = vmatpush1.msra.mxu0 0.0
        %824 = vmatprep.subr.mxu0 0.0
        %825 = vmatpush1.msra.mxu0 0.0
        %826 = vmatprep.subr.mxu0 0.0
        %827 = vmatpush1.msra.mxu0 0.0
        %828 = vmatprep.mubr.f32.mxu0 0.0
        %v829 = vand.u32 %v572, 4294901760
        %830 = vmatmul.mubr.f32.gmra.mrb[0].mxu0 %v829
        %v831 = vpop.f32.mrb[0].mxu0
        %v832 = vadd.f32 %v671, %v831
        %v833 = vpop.f32.mrb[0].mxu0
        %834 = vmatprep.mubr.f32.mxu0 0.0
        %v835 = vand.u32 %v575, 4294901760
        %836 = vmatmul.mubr.f32.gmra.mrb[0].mxu0 %v835
        %v837 = vpop.f32.mrb[0].mxu0
        %v838 = vadd.f32 %v681, %v837
        %v839 = vpop.f32.mrb[0].mxu0
        %840 = vmatprep.mubr.f32.mxu0 0.0
        %v841 = vand.u32 %v578, 4294901760
        %842 = vmatmul.mubr.f32.gmra.mrb[0].mxu0 %v841
        %v843 = vpop.f32.mrb[0].mxu0
        %v844 = vadd.f32 %v691, %v843
        %v845 = vpop.f32.mrb[0].mxu0
        %846 = vmatprep.mubr.f32.mxu0 0.0
        %v847 = vand.u32 %v581, 4294901760
        %848 = vmatmul.mubr.f32.gmra.mrb[0].mxu0 %v847
        %v849 = vpop.f32.mrb[0].mxu0
        %v850 = vadd.f32 %v701, %v849
        %v851 = vpop.f32.mrb[0].mxu0
        %852 = vmatprep.mubr.f32.mxu0 0.0
        %v853 = vand.u32 %v584, 4294901760
        %854 = vmatmul.mubr.f32.gmra.mrb[0].mxu0 %v853
        %v855 = vpop.f32.mrb[0].mxu0
        %v856 = vadd.f32 %v711, %v855
        %v857 = vpop.f32.mrb[0].mxu0
        %858 = vmatprep.mubr.f32.mxu0 0.0
        %v859 = vand.u32 %v587, 4294901760
        %860 = vmatmul.mubr.f32.gmra.mrb[0].mxu0 %v859
        %v861 = vpop.f32.mrb[0].mxu0
        %v862 = vadd.f32 %v721, %v861
        %v863 = vpop.f32.mrb[0].mxu0
        %864 = vmatprep.mubr.f32.mxu0 0.0
        %v865 = vand.u32 %v590, 4294901760
        %866 = vmatmul.mubr.f32.gmra.mrb[0].mxu0 %v865
        %v867 = vpop.f32.mrb[0].mxu0
        %v868 = vadd.f32 %v731, %v867
        %v869 = vpop.f32.mrb[0].mxu0
        %870 = vmatprep.mubr.f32.mxu0 0.0
        %v871 = vand.u32 %v593, 4294901760
        %872 = vmatmul.mubr.f32.gmra.mrb[0].mxu0 %v871
        %v873 = vpop.f32.mrb[0].mxu0
        %v874 = vadd.f32 %v741, %v873
        %v875 = vpop.f32.mrb[0].mxu0
        %876 = vdwg.mxu0
        %877 = vmatprep.subr.mxu0 0.0
        %v878 = vand.u32 %v567, 4294901760
        %v879 = vsub.f32 %v567, %v878
        %880 = vmatpush1.msra.mxu0 %v879
        %881 = vmatprep.subr.mxu0 0.0
        %v882 = vand.u32 %v568, 4294901760
        %v883 = vsub.f32 %v568, %v882
        %884 = vmatpush1.msra.mxu0 %v883
        %885 = vmatprep.subr.mxu0 0.0
        %v886 = vand.u32 %v569, 4294901760
        %v887 = vsub.f32 %v569, %v886
        %888 = vmatpush1.msra.mxu0 %v887
        %889 = vmatprep.subr.mxu0 0.0
        %v890 = vand.u32 %v570, 4294901760
        %v891 = vsub.f32 %v570, %v890
        %892 = vmatpush1.msra.mxu0 %v891
        %893 = vmatprep.subr.mxu0 0.0
        %894 = vmatpush1.msra.mxu0 0.0
        %895 = vmatprep.subr.mxu0 0.0
        %896 = vmatpush1.msra.mxu0 0.0
        %897 = vmatprep.subr.mxu0 0.0
        %898 = vmatpush1.msra.mxu0 0.0
        %899 = vmatprep.subr.mxu0 0.0
        %900 = vmatpush1.msra.mxu0 0.0
        %901 = vmatprep.subr.mxu0 0.0
        %902 = vmatpush1.msra.mxu0 0.0
        %903 = vmatprep.subr.mxu0 0.0
        %904 = vmatpush1.msra.mxu0 0.0
        %905 = vmatprep.subr.mxu0 0.0
        %906 = vmatpush1.msra.mxu0 0.0
        %907 = vmatprep.subr.mxu0 0.0
        %908 = vmatpush1.msra.mxu0 0.0
        %909 = vmatprep.subr.mxu0 0.0
        %910 = vmatpush1.msra.mxu0 0.0
        %911 = vmatprep.subr.mxu0 0.0
        %912 = vmatpush1.msra.mxu0 0.0
        %913 = vmatprep.subr.mxu0 0.0
        %914 = vmatpush1.msra.mxu0 0.0
        %915 = vmatprep.subr.mxu0 0.0
        %916 = vmatpush1.msra.mxu0 0.0
        %917 = vmatprep.subr.mxu0 0.0
        %918 = vmatpush1.msra.mxu0 0.0
        %919 = vmatprep.subr.mxu0 0.0
        %920 = vmatpush1.msra.mxu0 0.0
        %921 = vmatprep.subr.mxu0 0.0
        %922 = vmatpush1.msra.mxu0 0.0
        %923 = vmatprep.subr.mxu0 0.0
        %924 = vmatpush1.msra.mxu0 0.0
        %925 = vmatprep.subr.mxu0 0.0
        %926 = vmatpush1.msra.mxu0 0.0
        %927 = vmatprep.subr.mxu0 0.0
        %928 = vmatpush1.msra.mxu0 0.0
        %929 = vmatprep.subr.mxu0 0.0
        %930 = vmatpush1.msra.mxu0 0.0
        %931 = vmatprep.subr.mxu0 0.0
        %932 = vmatpush1.msra.mxu0 0.0
        %933 = vmatprep.subr.mxu0 0.0
        %934 = vmatpush1.msra.mxu0 0.0
        %935 = vmatprep.subr.mxu0 0.0
        %936 = vmatpush1.msra.mxu0 0.0
        %937 = vmatprep.subr.mxu0 0.0
        %938 = vmatpush1.msra.mxu0 0.0
        %939 = vmatprep.subr.mxu0 0.0
        %940 = vmatpush1.msra.mxu0 0.0
        %941 = vmatprep.subr.mxu0 0.0
        %942 = vmatpush1.msra.mxu0 0.0
        %943 = vmatprep.subr.mxu0 0.0
        %944 = vmatpush1.msra.mxu0 0.0
        %945 = vmatprep.subr.mxu0 0.0
        %946 = vmatpush1.msra.mxu0 0.0
        %947 = vmatprep.subr.mxu0 0.0
        %948 = vmatpush1.msra.mxu0 0.0
        %949 = vmatprep.mubr.f32.mxu0 0.0
        %v950 = vand.u32 %v572, 4294901760
        %v951 = vsub.f32 %v572, %v950
        %952 = vmatmul.mubr.f32.gmra.mrb[0].mxu0 %v951
        %v953 = vpop.f32.mrb[0].mxu0
        %v954 = vadd.f32 %v832, %v953
        %v955 = vpop.f32.mrb[0].mxu0
        %956 = vmatprep.mubr.f32.mxu0 0.0
        %v957 = vand.u32 %v575, 4294901760
        %v958 = vsub.f32 %v575, %v957
        %959 = vmatmul.mubr.f32.gmra.mrb[0].mxu0 %v958
        %v960 = vpop.f32.mrb[0].mxu0
        %v961 = vadd.f32 %v838, %v960
        %v962 = vpop.f32.mrb[0].mxu0
        %963 = vmatprep.mubr.f32.mxu0 0.0
        %v964 = vand.u32 %v578, 4294901760
        %v965 = vsub.f32 %v578, %v964
        %966 = vmatmul.mubr.f32.gmra.mrb[0].mxu0 %v965
        %v967 = vpop.f32.mrb[0].mxu0
        %v968 = vadd.f32 %v844, %v967
        %v969 = vpop.f32.mrb[0].mxu0
        %970 = vmatprep.mubr.f32.mxu0 0.0
        %v971 = vand.u32 %v581, 4294901760
        %v972 = vsub.f32 %v581, %v971
        %973 = vmatmul.mubr.f32.gmra.mrb[0].mxu0 %v972
        %v974 = vpop.f32.mrb[0].mxu0
        %v975 = vadd.f32 %v850, %v974
        %v976 = vpop.f32.mrb[0].mxu0
        %977 = vmatprep.mubr.f32.mxu0 0.0
        %v978 = vand.u32 %v584, 4294901760
        %v979 = vsub.f32 %v584, %v978
        %980 = vmatmul.mubr.f32.gmra.mrb[0].mxu0 %v979
        %v981 = vpop.f32.mrb[0].mxu0
        %v982 = vadd.f32 %v856, %v981
        %v983 = vpop.f32.mrb[0].mxu0
        %984 = vmatprep.mubr.f32.mxu0 0.0
        %v985 = vand.u32 %v587, 4294901760
        %v986 = vsub.f32 %v587, %v985
        %987 = vmatmul.mubr.f32.gmra.mrb[0].mxu0 %v986
        %v988 = vpop.f32.mrb[0].mxu0
        %v989 = vadd.f32 %v862, %v988
        %v990 = vpop.f32.mrb[0].mxu0
        %991 = vmatprep.mubr.f32.mxu0 0.0
        %v992 = vand.u32 %v590, 4294901760
        %v993 = vsub.f32 %v590, %v992
        %994 = vmatmul.mubr.f32.gmra.mrb[0].mxu0 %v993
        %v995 = vpop.f32.mrb[0].mxu0
        %v996 = vadd.f32 %v868, %v995
        %v997 = vpop.f32.mrb[0].mxu0
        %998 = vmatprep.mubr.f32.mxu0 0.0
        %v999 = vand.u32 %v593, 4294901760
        %v1000 = vsub.f32 %v593, %v999
        %1001 = vmatmul.mubr.f32.gmra.mrb[0].mxu0 %v1000
        %v1002 = vpop.f32.mrb[0].mxu0
        %v1003 = vadd.f32 %v874, %v1002
        %v1004 = vpop.f32.mrb[0].mxu0
        %1005 = vdwg.mxu0
        %1006 = vmatprep.subr.mxu0 0.0
        %v1007 = vand.u32 %v567, 4294901760
        %1008 = vmatpush1.msra.mxu0 %v1007
        %1009 = vmatprep.subr.mxu0 0.0
        %v1010 = vand.u32 %v568, 4294901760
        %1011 = vmatpush1.msra.mxu0 %v1010
        %1012 = vmatprep.subr.mxu0 0.0
        %v1013 = vand.u32 %v569, 4294901760
        %1014 = vmatpush1.msra.mxu0 %v1013
        %1015 = vmatprep.subr.mxu0 0.0
        %v1016 = vand.u32 %v570, 4294901760
        %1017 = vmatpush1.msra.mxu0 %v1016
        %1018 = vmatprep.subr.mxu0 0.0
        %1019 = vmatpush1.msra.mxu0 0.0
        %1020 = vmatprep.subr.mxu0 0.0
        %1021 = vmatpush1.msra.mxu0 0.0
        %1022 = vmatprep.subr.mxu0 0.0
        %1023 = vmatpush1.msra.mxu0 0.0
        %1024 = vmatprep.subr.mxu0 0.0
        %1025 = vmatpush1.msra.mxu0 0.0
        %1026 = vmatprep.subr.mxu0 0.0
        %1027 = vmatpush1.msra.mxu0 0.0
        %1028 = vmatprep.subr.mxu0 0.0
        %1029 = vmatpush1.msra.mxu0 0.0
        %1030 = vmatprep.subr.mxu0 0.0
        %1031 = vmatpush1.msra.mxu0 0.0
        %1032 = vmatprep.subr.mxu0 0.0
        %1033 = vmatpush1.msra.mxu0 0.0
        %1034 = vmatprep.subr.mxu0 0.0
        %1035 = vmatpush1.msra.mxu0 0.0
        %1036 = vmatprep.subr.mxu0 0.0
        %1037 = vmatpush1.msra.mxu0 0.0
        %1038 = vmatprep.subr.mxu0 0.0
        %1039 = vmatpush1.msra.mxu0 0.0
        %1040 = vmatprep.subr.mxu0 0.0
        %1041 = vmatpush1.msra.mxu0 0.0
        %1042 = vmatprep.subr.mxu0 0.0
        %1043 = vmatpush1.msra.mxu0 0.0
        %1044 = vmatprep.subr.mxu0 0.0
        %1045 = vmatpush1.msra.mxu0 0.0
        %1046 = vmatprep.subr.mxu0 0.0
        %1047 = vmatpush1.msra.mxu0 0.0
        %1048 = vmatprep.subr.mxu0 0.0
        %1049 = vmatpush1.msra.mxu0 0.0
        %1050 = vmatprep.subr.mxu0 0.0
        %1051 = vmatpush1.msra.mxu0 0.0
        %1052 = vmatprep.subr.mxu0 0.0
        %1053 = vmatpush1.msra.mxu0 0.0
        %1054 = vmatprep.subr.mxu0 0.0
        %1055 = vmatpush1.msra.mxu0 0.0
        %1056 = vmatprep.subr.mxu0 0.0
        %1057 = vmatpush1.msra.mxu0 0.0
        %1058 = vmatprep.subr.mxu0 0.0
        %1059 = vmatpush1.msra.mxu0 0.0
        %1060 = vmatprep.subr.mxu0 0.0
        %1061 = vmatpush1.msra.mxu0 0.0
        %1062 = vmatprep.subr.mxu0 0.0
        %1063 = vmatpush1.msra.mxu0 0.0
        %1064 = vmatprep.subr.mxu0 0.0
        %1065 = vmatpush1.msra.mxu0 0.0
        %1066 = vmatprep.subr.mxu0 0.0
        %1067 = vmatpush1.msra.mxu0 0.0
        %1068 = vmatprep.subr.mxu0 0.0
        %1069 = vmatpush1.msra.mxu0 0.0
        %1070 = vmatprep.subr.mxu0 0.0
        %1071 = vmatpush1.msra.mxu0 0.0
        %1072 = vmatprep.subr.mxu0 0.0
        %1073 = vmatpush1.msra.mxu0 0.0
        %1074 = vmatprep.mubr.f32.mxu0 0.0
        %v1075 = vand.u32 %v572, 4294901760
        %v1076 = vsub.f32 %v572, %v1075
        %v1077 = vand.u32 %v1076, 4294901760
        %1078 = vmatmul.mubr.f32.gmra.mrb[0].mxu0 %v1077
        %v1079 = vpop.f32.mrb[0].mxu0
        %v1080 = vadd.f32 %v954, %v1079
        %v1081 = vpop.f32.mrb[0].mxu0
        %1082 = vmatprep.mubr.f32.mxu0 0.0
        %v1083 = vand.u32 %v575, 4294901760
        %v1084 = vsub.f32 %v575, %v1083
        %v1085 = vand.u32 %v1084, 4294901760
        %1086 = vmatmul.mubr.f32.gmra.mrb[0].mxu0 %v1085
        %v1087 = vpop.f32.mrb[0].mxu0
        %v1088 = vadd.f32 %v961, %v1087
        %v1089 = vpop.f32.mrb[0].mxu0
        %1090 = vmatprep.mubr.f32.mxu0 0.0
        %v1091 = vand.u32 %v578, 4294901760
        %v1092 = vsub.f32 %v578, %v1091
        %v1093 = vand.u32 %v1092, 4294901760
        %1094 = vmatmul.mubr.f32.gmra.mrb[0].mxu0 %v1093
        %v1095 = vpop.f32.mrb[0].mxu0
        %v1096 = vadd.f32 %v968, %v1095
        %v1097 = vpop.f32.mrb[0].mxu0
        %1098 = vmatprep.mubr.f32.mxu0 0.0
        %v1099 = vand.u32 %v581, 4294901760
        %v1100 = vsub.f32 %v581, %v1099
        %v1101 = vand.u32 %v1100, 4294901760
        %1102 = vmatmul.mubr.f32.gmra.mrb[0].mxu0 %v1101
        %v1103 = vpop.f32.mrb[0].mxu0
        %v1104 = vadd.f32 %v975, %v1103
        %v1105 = vpop.f32.mrb[0].mxu0
        %1106 = vmatprep.mubr.f32.mxu0 0.0
        %v1107 = vand.u32 %v584, 4294901760
        %v1108 = vsub.f32 %v584, %v1107
        %v1109 = vand.u32 %v1108, 4294901760
        %1110 = vmatmul.mubr.f32.gmra.mrb[0].mxu0 %v1109
        %v1111 = vpop.f32.mrb[0].mxu0
        %v1112 = vadd.f32 %v982, %v1111
        %v1113 = vpop.f32.mrb[0].mxu0
        %1114 = vmatprep.mubr.f32.mxu0 0.0
        %v1115 = vand.u32 %v587, 4294901760
        %v1116 = vsub.f32 %v587, %v1115
        %v1117 = vand.u32 %v1116, 4294901760
        %1118 = vmatmul.mubr.f32.gmra.mrb[0].mxu0 %v1117
        %v1119 = vpop.f32.mrb[0].mxu0
        %v1120 = vadd.f32 %v989, %v1119
        %v1121 = vpop.f32.mrb[0].mxu0
        %1122 = vmatprep.mubr.f32.mxu0 0.0
        %v1123 = vand.u32 %v590, 4294901760
        %v1124 = vsub.f32 %v590, %v1123
        %v1125 = vand.u32 %v1124, 4294901760
        %1126 = vmatmul.mubr.f32.gmra.mrb[0].mxu0 %v1125
        %v1127 = vpop.f32.mrb[0].mxu0
        %v1128 = vadd.f32 %v996, %v1127
        %v1129 = vpop.f32.mrb[0].mxu0
        %1130 = vmatprep.mubr.f32.mxu0 0.0
        %v1131 = vand.u32 %v593, 4294901760
        %v1132 = vsub.f32 %v593, %v1131
        %v1133 = vand.u32 %v1132, 4294901760
        %1134 = vmatmul.mubr.f32.gmra.mrb[0].mxu0 %v1133
        %v1135 = vpop.f32.mrb[0].mxu0
        %v1136 = vadd.f32 %v1003, %v1135
        %v1137 = vpop.f32.mrb[0].mxu0
        %1138 = vdwg.mxu0
        %1139 = vmatprep.subr.mxu0 0.0
        %v1140 = vand.u32 %v567, 4294901760
        %v1141 = vsub.f32 %v567, %v1140
        %v1142 = vand.u32 %v1141, 4294901760
        %1143 = vmatpush1.msra.mxu0 %v1142
        %1144 = vmatprep.subr.mxu0 0.0
        %v1145 = vand.u32 %v568, 4294901760
        %v1146 = vsub.f32 %v568, %v1145
        %v1147 = vand.u32 %v1146, 4294901760
        %1148 = vmatpush1.msra.mxu0 %v1147
        %1149 = vmatprep.subr.mxu0 0.0
        %v1150 = vand.u32 %v569, 4294901760
        %v1151 = vsub.f32 %v569, %v1150
        %v1152 = vand.u32 %v1151, 4294901760
        %1153 = vmatpush1.msra.mxu0 %v1152
        %1154 = vmatprep.subr.mxu0 0.0
        %v1155 = vand.u32 %v570, 4294901760
        %v1156 = vsub.f32 %v570, %v1155
        %v1157 = vand.u32 %v1156, 4294901760
        %1158 = vmatpush1.msra.mxu0 %v1157
        %1159 = vmatprep.subr.mxu0 0.0
        %1160 = vmatpush1.msra.mxu0 0.0
        %1161 = vmatprep.subr.mxu0 0.0
        %1162 = vmatpush1.msra.mxu0 0.0
        %1163 = vmatprep.subr.mxu0 0.0
        %1164 = vmatpush1.msra.mxu0 0.0
        %1165 = vmatprep.subr.mxu0 0.0
        %1166 = vmatpush1.msra.mxu0 0.0
        %1167 = vmatprep.subr.mxu0 0.0
        %1168 = vmatpush1.msra.mxu0 0.0
        %1169 = vmatprep.subr.mxu0 0.0
        %1170 = vmatpush1.msra.mxu0 0.0
        %1171 = vmatprep.subr.mxu0 0.0
        %1172 = vmatpush1.msra.mxu0 0.0
        %1173 = vmatprep.subr.mxu0 0.0
        %1174 = vmatpush1.msra.mxu0 0.0
        %1175 = vmatprep.subr.mxu0 0.0
        %1176 = vmatpush1.msra.mxu0 0.0
        %1177 = vmatprep.subr.mxu0 0.0
        %1178 = vmatpush1.msra.mxu0 0.0
        %1179 = vmatprep.subr.mxu0 0.0
        %1180 = vmatpush1.msra.mxu0 0.0
        %1181 = vmatprep.subr.mxu0 0.0
        %1182 = vmatpush1.msra.mxu0 0.0
        %1183 = vmatprep.subr.mxu0 0.0
        %1184 = vmatpush1.msra.mxu0 0.0
        %1185 = vmatprep.subr.mxu0 0.0
        %1186 = vmatpush1.msra.mxu0 0.0
        %1187 = vmatprep.subr.mxu0 0.0
        %1188 = vmatpush1.msra.mxu0 0.0
        %1189 = vmatprep.subr.mxu0 0.0
        %1190 = vmatpush1.msra.mxu0 0.0
        %1191 = vmatprep.subr.mxu0 0.0
        %1192 = vmatpush1.msra.mxu0 0.0
        %1193 = vmatprep.subr.mxu0 0.0
        %1194 = vmatpush1.msra.mxu0 0.0
        %1195 = vmatprep.subr.mxu0 0.0
        %1196 = vmatpush1.msra.mxu0 0.0
        %1197 = vmatprep.subr.mxu0 0.0
        %1198 = vmatpush1.msra.mxu0 0.0
        %1199 = vmatprep.subr.mxu0 0.0
        %1200 = vmatpush1.msra.mxu0 0.0
        %1201 = vmatprep.subr.mxu0 0.0
        %1202 = vmatpush1.msra.mxu0 0.0
        %1203 = vmatprep.subr.mxu0 0.0
        %1204 = vmatpush1.msra.mxu0 0.0
        %1205 = vmatprep.subr.mxu0 0.0
        %1206 = vmatpush1.msra.mxu0 0.0
        %1207 = vmatprep.subr.mxu0 0.0
        %1208 = vmatpush1.msra.mxu0 0.0
        %1209 = vmatprep.subr.mxu0 0.0
        %1210 = vmatpush1.msra.mxu0 0.0
        %1211 = vmatprep.subr.mxu0 0.0
        %1212 = vmatpush1.msra.mxu0 0.0
        %1213 = vmatprep.subr.mxu0 0.0
        %1214 = vmatpush1.msra.mxu0 0.0
        %1215 = vmatprep.mubr.f32.mxu0 0.0
        %v1216 = vand.u32 %v572, 4294901760
        %1217 = vmatmul.mubr.f32.gmra.mrb[0].mxu0 %v1216
        %v1218 = vpop.f32.mrb[0].mxu0
        %v1219 = vadd.f32 %v1080, %v1218
        %v1220 = vpop.f32.mrb[0].mxu0
        %1221 = vmatprep.mubr.f32.mxu0 0.0
        %v1222 = vand.u32 %v575, 4294901760
        %1223 = vmatmul.mubr.f32.gmra.mrb[0].mxu0 %v1222
        %v1224 = vpop.f32.mrb[0].mxu0
        %v1225 = vadd.f32 %v1088, %v1224
        %v1226 = vpop.f32.mrb[0].mxu0
        %1227 = vmatprep.mubr.f32.mxu0 0.0
        %v1228 = vand.u32 %v578, 4294901760
        %1229 = vmatmul.mubr.f32.gmra.mrb[0].mxu0 %v1228
        %v1230 = vpop.f32.mrb[0].mxu0
        %v1231 = vadd.f32 %v1096, %v1230
        %v1232 = vpop.f32.mrb[0].mxu0
        %1233 = vmatprep.mubr.f32.mxu0 0.0
        %v1234 = vand.u32 %v581, 4294901760
        %1235 = vmatmul.mubr.f32.gmra.mrb[0].mxu0 %v1234
        %v1236 = vpop.f32.mrb[0].mxu0
        %v1237 = vadd.f32 %v1104, %v1236
        %v1238 = vpop.f32.mrb[0].mxu0
        %1239 = vmatprep.mubr.f32.mxu0 0.0
        %v1240 = vand.u32 %v584, 4294901760
        %1241 = vmatmul.mubr.f32.gmra.mrb[0].mxu0 %v1240
        %v1242 = vpop.f32.mrb[0].mxu0
        %v1243 = vadd.f32 %v1112, %v1242
        %v1244 = vpop.f32.mrb[0].mxu0
        %1245 = vmatprep.mubr.f32.mxu0 0.0
        %v1246 = vand.u32 %v587, 4294901760
        %1247 = vmatmul.mubr.f32.gmra.mrb[0].mxu0 %v1246
        %v1248 = vpop.f32.mrb[0].mxu0
        %v1249 = vadd.f32 %v1120, %v1248
        %v1250 = vpop.f32.mrb[0].mxu0
        %1251 = vmatprep.mubr.f32.mxu0 0.0
        %v1252 = vand.u32 %v590, 4294901760
        %1253 = vmatmul.mubr.f32.gmra.mrb[0].mxu0 %v1252
        %v1254 = vpop.f32.mrb[0].mxu0
        %v1255 = vadd.f32 %v1128, %v1254
        %v1256 = vpop.f32.mrb[0].mxu0
        %1257 = vmatprep.mubr.f32.mxu0 0.0
        %v1258 = vand.u32 %v593, 4294901760
        %1259 = vmatmul.mubr.f32.gmra.mrb[0].mxu0 %v1258
        %v1260 = vpop.f32.mrb[0].mxu0
        %v1261 = vadd.f32 %v1136, %v1260
        %v1262 = vpop.f32.mrb[0].mxu0
        %1263 = vdwg.mxu0
        %1264 = vmatprep.subr.mxu0 0.0
        %v1265 = vand.u32 %v567, 4294901760
        %1266 = vmatpush1.msra.mxu0 %v1265
        %1267 = vmatprep.subr.mxu0 0.0
        %v1268 = vand.u32 %v568, 4294901760
        %1269 = vmatpush1.msra.mxu0 %v1268
        %1270 = vmatprep.subr.mxu0 0.0
        %v1271 = vand.u32 %v569, 4294901760
        %1272 = vmatpush1.msra.mxu0 %v1271
        %1273 = vmatprep.subr.mxu0 0.0
        %v1274 = vand.u32 %v570, 4294901760
        %1275 = vmatpush1.msra.mxu0 %v1274
        %1276 = vmatprep.subr.mxu0 0.0
        %1277 = vmatpush1.msra.mxu0 0.0
        %1278 = vmatprep.subr.mxu0 0.0
        %1279 = vmatpush1.msra.mxu0 0.0
        %1280 = vmatprep.subr.mxu0 0.0
        %1281 = vmatpush1.msra.mxu0 0.0
        %1282 = vmatprep.subr.mxu0 0.0
        %1283 = vmatpush1.msra.mxu0 0.0
        %1284 = vmatprep.subr.mxu0 0.0
        %1285 = vmatpush1.msra.mxu0 0.0
        %1286 = vmatprep.subr.mxu0 0.0
        %1287 = vmatpush1.msra.mxu0 0.0
        %1288 = vmatprep.subr.mxu0 0.0
        %1289 = vmatpush1.msra.mxu0 0.0
        %1290 = vmatprep.subr.mxu0 0.0
        %1291 = vmatpush1.msra.mxu0 0.0
        %1292 = vmatprep.subr.mxu0 0.0
        %1293 = vmatpush1.msra.mxu0 0.0
        %1294 = vmatprep.subr.mxu0 0.0
        %1295 = vmatpush1.msra.mxu0 0.0
        %1296 = vmatprep.subr.mxu0 0.0
        %1297 = vmatpush1.msra.mxu0 0.0
        %1298 = vmatprep.subr.mxu0 0.0
        %1299 = vmatpush1.msra.mxu0 0.0
        %1300 = vmatprep.subr.mxu0 0.0
        %1301 = vmatpush1.msra.mxu0 0.0
        %1302 = vmatprep.subr.mxu0 0.0
        %1303 = vmatpush1.msra.mxu0 0.0
        %1304 = vmatprep.subr.mxu0 0.0
        %1305 = vmatpush1.msra.mxu0 0.0
        %1306 = vmatprep.subr.mxu0 0.0
        %1307 = vmatpush1.msra.mxu0 0.0
        %1308 = vmatprep.subr.mxu0 0.0
        %1309 = vmatpush1.msra.mxu0 0.0
        %1310 = vmatprep.subr.mxu0 0.0
        %1311 = vmatpush1.msra.mxu0 0.0
        %1312 = vmatprep.subr.mxu0 0.0
        %1313 = vmatpush1.msra.mxu0 0.0
        %1314 = vmatprep.subr.mxu0 0.0
        %1315 = vmatpush1.msra.mxu0 0.0
        %1316 = vmatprep.subr.mxu0 0.0
        %1317 = vmatpush1.msra.mxu0 0.0
        %1318 = vmatprep.subr.mxu0 0.0
        %1319 = vmatpush1.msra.mxu0 0.0
        %1320 = vmatprep.subr.mxu0 0.0
        %1321 = vmatpush1.msra.mxu0 0.0
        %1322 = vmatprep.subr.mxu0 0.0
        %1323 = vmatpush1.msra.mxu0 0.0
        %1324 = vmatprep.subr.mxu0 0.0
        %1325 = vmatpush1.msra.mxu0 0.0
        %1326 = vmatprep.subr.mxu0 0.0
        %1327 = vmatpush1.msra.mxu0 0.0
        %1328 = vmatprep.subr.mxu0 0.0
        %1329 = vmatpush1.msra.mxu0 0.0
        %1330 = vmatprep.subr.mxu0 0.0
        %1331 = vmatpush1.msra.mxu0 0.0
        %1332 = vmatprep.mubr.f32.mxu0 0.0
        %v1333 = vand.u32 %v572, 4294901760
        %1334 = vmatmul.mubr.f32.gmra.mrb[0].mxu0 %v1333
        %v1335 = vpop.f32.mrb[0].mxu0
        %v1336 = vadd.f32 %v1219, %v1335
        %v1337 = vpop.f32.mrb[0].mxu0
        %1338 = vmatprep.mubr.f32.mxu0 0.0
        %v1339 = vand.u32 %v575, 4294901760
        %1340 = vmatmul.mubr.f32.gmra.mrb[0].mxu0 %v1339
        %v1341 = vpop.f32.mrb[0].mxu0
        %v1342 = vadd.f32 %v1225, %v1341
        %v1343 = vpop.f32.mrb[0].mxu0
        %1344 = vmatprep.mubr.f32.mxu0 0.0
        %v1345 = vand.u32 %v578, 4294901760
        %1346 = vmatmul.mubr.f32.gmra.mrb[0].mxu0 %v1345
        %v1347 = vpop.f32.mrb[0].mxu0
        %v1348 = vadd.f32 %v1231, %v1347
        %v1349 = vpop.f32.mrb[0].mxu0
        %1350 = vmatprep.mubr.f32.mxu0 0.0
        %v1351 = vand.u32 %v581, 4294901760
        %1352 = vmatmul.mubr.f32.gmra.mrb[0].mxu0 %v1351
        %v1353 = vpop.f32.mrb[0].mxu0
        %v1354 = vadd.f32 %v1237, %v1353
        %v1355 = vpop.f32.mrb[0].mxu0
        %1356 = vmatprep.mubr.f32.mxu0 0.0
        %v1357 = vand.u32 %v584, 4294901760
        %1358 = vmatmul.mubr.f32.gmra.mrb[0].mxu0 %v1357
        %v1359 = vpop.f32.mrb[0].mxu0
        %v1360 = vadd.f32 %v1243, %v1359
        %v1361 = vpop.f32.mrb[0].mxu0
        %1362 = vmatprep.mubr.f32.mxu0 0.0
        %v1363 = vand.u32 %v587, 4294901760
        %1364 = vmatmul.mubr.f32.gmra.mrb[0].mxu0 %v1363
        %v1365 = vpop.f32.mrb[0].mxu0
        %v1366 = vadd.f32 %v1249, %v1365
        %v1367 = vpop.f32.mrb[0].mxu0
        %1368 = vmatprep.mubr.f32.mxu0 0.0
        %v1369 = vand.u32 %v590, 4294901760
        %1370 = vmatmul.mubr.f32.gmra.mrb[0].mxu0 %v1369
        %v1371 = vpop.f32.mrb[0].mxu0
        %v1372 = vadd.f32 %v1255, %v1371
        %v1373 = vpop.f32.mrb[0].mxu0
        %1374 = vmatprep.mubr.f32.mxu0 0.0
        %v1375 = vand.u32 %v593, 4294901760
        %1376 = vmatmul.mubr.f32.gmra.mrb[0].mxu0 %v1375
        %v1377 = vpop.f32.mrb[0].mxu0
        %v1378 = vadd.f32 %v1261, %v1377
        %v1379 = vpop.f32.mrb[0].mxu0
        %1380 = vdwg.mxu0
        %1389 = vrot.lane.b32.xlu0 %v1336, 112
        %v1390 = vpop.permute.xlu0 %1389
        %1391 = vrot.lane.b32.xlu0 %v1342, 112
        %v1392 = vpop.permute.xlu0 %1391
        %1393 = vrot.lane.b32.xlu0 %v1348, 112
        %v1394 = vpop.permute.xlu0 %1393
        %1395 = vrot.lane.b32.xlu0 %v1354, 112
        %v1396 = vpop.permute.xlu0 %1395
        %1397 = vrot.lane.b32.xlu0 %v1360, 112
        %v1398 = vpop.permute.xlu0 %1397
        %1399 = vrot.lane.b32.xlu0 %v1366, 112
        %v1400 = vpop.permute.xlu0 %1399
        %1401 = vrot.lane.b32.xlu0 %v1372, 112
        %v1402 = vpop.permute.xlu0 %1401
        %1403 = vrot.lane.b32.xlu0 %v1378, 112
        %v1404 = vpop.permute.xlu0 %1403
        %v1413 = vmax.f32 %v1336, %v1390
        %v1414 = vmax.f32 %v1342, %v1392
        %v1415 = vmax.f32 %v1348, %v1394
        %v1416 = vmax.f32 %v1354, %v1396
        %v1417 = vmax.f32 %v1360, %v1398
        %v1418 = vmax.f32 %v1366, %v1400
        %v1419 = vmax.f32 %v1372, %v1402
        %v1420 = vmax.f32 %v1378, %v1404
        %vm1421 = vcmask 130048
        %1422 = vst.msk [vmem:[#allocation2] sm:$0xff] %vm1421, %v1413
        %1423 = vst.msk [vmem:[#allocation2 + $0x8] sm:$0xff] %vm1421, %v1414
        %1424 = vst.msk [vmem:[#allocation2 + $0x10] sm:$0xff] %vm1421, %v1415
        %1425 = vst.msk [vmem:[#allocation2 + $0x18] sm:$0xff] %vm1421, %v1416
        %1426 = vst.msk [vmem:[#allocation2 + $0x20] sm:$0xff] %vm1421, %v1417
        %1427 = vst.msk [vmem:[#allocation2 + $0x28] sm:$0xff] %vm1421, %v1418
        %1428 = vst.msk [vmem:[#allocation2 + $0x30] sm:$0xff] %vm1421, %v1419
        %1429 = vst.msk [vmem:[#allocation2 + $0x38] sm:$0xff] %vm1421, %v1420
        %v1430 = vld [vmem:[%s376] sm:$0xff]
        %v1431 = vld [vmem:[%s376 + $0x8] sm:$0xff]
        %v1432 = vld [vmem:[%s376 + $0x10] sm:$0xff]
        %v1433 = vld [vmem:[%s376 + $0x18] sm:$0xff]
        %v1434 = vld [vmem:[%s376 + $0x20] sm:$0xff]
        %v1435 = vld [vmem:[%s376 + $0x28] sm:$0xff]
        %v1436 = vld [vmem:[%s376 + $0x30] sm:$0xff]
        %v1437 = vld [vmem:[%s376 + $0x38] sm:$0xff]
        %v1438 = vsub.f32 %v1430, %v1413
        %v1439 = vsub.f32 %v1431, %v1414
        %v1440 = vsub.f32 %v1432, %v1415
        %v1441 = vsub.f32 %v1433, %v1416
        %v1442 = vsub.f32 %v1434, %v1417
        %v1443 = vsub.f32 %v1435, %v1418
        %v1444 = vsub.f32 %v1436, %v1419
        %v1445 = vsub.f32 %v1437, %v1420
        %v1446 = vmul.f32 %v1438, %v1438
        %v1447 = vmul.f32 %v1439, %v1439
        %v1448 = vmul.f32 %v1440, %v1440
        %v1449 = vmul.f32 %v1441, %v1441
        %v1450 = vmul.f32 %v1442, %v1442
        %v1451 = vmul.f32 %v1443, %v1443
        %v1452 = vmul.f32 %v1444, %v1444
        %v1453 = vmul.f32 %v1445, %v1445
        %v1454 = vsel %vm1421, %v1446, 0.0
        %v1455 = vsel %vm1421, %v1447, 0.0
        %v1456 = vadd.f32 %v1454, %v1455
        %v1457 = vsel %vm1421, %v1448, 0.0
        %v1458 = vadd.f32 %v1456, %v1457
        %v1459 = vsel %vm1421, %v1449, 0.0
        %v1460 = vadd.f32 %v1458, %v1459
        %v1461 = vsel %vm1421, %v1450, 0.0
        %v1462 = vadd.f32 %v1460, %v1461
        %v1463 = vsel %vm1421, %v1451, 0.0
        %v1464 = vadd.f32 %v1462, %v1463
        %v1465 = vsel %vm1421, %v1452, 0.0
        %v1466 = vadd.f32 %v1464, %v1465
        %v1467 = vsel %vm1421, %v1453, 0.0
        %v1468 = vadd.f32 %v1466, %v1467
        %1469 = vadd.xlane.f32.xlu0 %v1468
        %v1470 = vpop.xlane.xlu0 %1469
        %v1471 = vrot.slane %v1470, 4
        %v1472 = vadd.f32 %v1470, %v1471
        %v1473 = vrot.slane %v1472, 2
        %v1474 = vadd.f32 %v1472, %v1473
        %v1475 = vrot.slane %v1474, 1
        %v1476 = vadd.f32 %v1474, %v1475
        %s1477 = vtos %v1476
        %s1478 = smul.f32 %s1477, 0.00040690103
        %s1479 = sadd.f32 %s490, %s1478
        %v1480 = vld [vmem:[#allocation2] ss:$2 sm:$0xff]
        %s1481 = scalar_lea.vmem [#allocation2], 16
        %v1482 = vld [vmem:[%s1481] ss:$2 sm:$0xff]
        %s1483 = scalar_lea.vmem [#allocation2], 32
        %v1484 = vld [vmem:[%s1483] ss:$2 sm:$0xff]
        %s1485 = scalar_lea.vmem [#allocation2], 48
        %v1486 = vld [vmem:[%s1485] ss:$2 sm:$0xff]
        %s1487 = scalar_lea.vmem [#allocation2], 1
        %v1488 = vld [vmem:[%s1487] ss:$2 sm:$0xff]
        %s1489 = scalar_lea.vmem [#allocation2], 17
        %v1490 = vld [vmem:[%s1489] ss:$2 sm:$0xff]
        %s1491 = scalar_lea.vmem [#allocation2], 33
        %v1492 = vld [vmem:[%s1491] ss:$2 sm:$0xff]
        %s1493 = scalar_lea.vmem [#allocation2], 49
        %v1494 = vld [vmem:[%s1493] ss:$2 sm:$0xff]
        %v1495 = vmax.f32 %v1480, %v1488
        %v1496 = vmax.f32 %v1482, %v1490
        %v1497 = vmax.f32 %v1484, %v1492
        %v1498 = vmax.f32 %v1486, %v1494
        %vm1499 = vcmp.lt.s32.totalorder %v536, 8
        %vm1500 = vmand %vm1499, %vm539
        %vm1501 = vmand %vm1499, %vm540
        %vm1502 = vcmp.ge.s32.totalorder %v536, 8
        %v1503 = vsub.s32 %v536, 8
        %v1504 = vmul.u32 %v1503, 2
        %v1505 = vadd.s32 %v1504, 1
        %vm1506 = vcmp.eq.s32.totalorder %v531, %v1505
        %vm1507 = vcmp.eq.s32.totalorder %v532, %v1505
        %vm1508 = vmand %vm1502, %vm1506
        %vm1509 = vmand %vm1502, %vm1507
        %vm1510 = vmor %vm1500, %vm1508
        %vm1511 = vmor %vm1501, %vm1509
        %v1512 = vsel %vm1510, 1, 0
        %v1513 = vsel %vm1511, 1, 0
        %v1514 = vcvt.s32.f32 %v1512
        %v1515 = vcvt.s32.f32 %v1513
        %v1517 = vsel %vm1421, %v1495, 0
        %v1520 = vsel %vm1421, %v1496, 0
        %v1523 = vsel %vm1421, %v1497, 0
        %v1526 = vsel %vm1421, %v1498, 0
        %1528 = vmatprep.subr.mxu0 0.0
        %v1529 = vand.u32 %v1514, 4294901760
        %1530 = vmatpush1.msra.mxu0 %v1529
        %1531 = vmatprep.subr.mxu0 0.0
        %v1532 = vand.u32 %v1515, 4294901760
        %1533 = vmatpush1.msra.mxu0 %v1532
        %1534 = vmatprep.subr.mxu0 0.0
        %1535 = vmatpush1.msra.mxu0 0.0
        %1536 = vmatprep.subr.mxu0 0.0
        %1537 = vmatpush1.msra.mxu0 0.0
        %1538 = vmatprep.subr.mxu0 0.0
        %1539 = vmatpush1.msra.mxu0 0.0
        %1540 = vmatprep.subr.mxu0 0.0
        %1541 = vmatpush1.msra.mxu0 0.0
        %1542 = vmatprep.subr.mxu0 0.0
        %1543 = vmatpush1.msra.mxu0 0.0
        %1544 = vmatprep.subr.mxu0 0.0
        %1545 = vmatpush1.msra.mxu0 0.0
        %1546 = vmatprep.subr.mxu0 0.0
        %1547 = vmatpush1.msra.mxu0 0.0
        %1548 = vmatprep.subr.mxu0 0.0
        %1549 = vmatpush1.msra.mxu0 0.0
        %1550 = vmatprep.subr.mxu0 0.0
        %1551 = vmatpush1.msra.mxu0 0.0
        %1552 = vmatprep.subr.mxu0 0.0
        %1553 = vmatpush1.msra.mxu0 0.0
        %1554 = vmatprep.subr.mxu0 0.0
        %1555 = vmatpush1.msra.mxu0 0.0
        %1556 = vmatprep.subr.mxu0 0.0
        %1557 = vmatpush1.msra.mxu0 0.0
        %1558 = vmatprep.subr.mxu0 0.0
        %1559 = vmatpush1.msra.mxu0 0.0
        %1560 = vmatprep.subr.mxu0 0.0
        %1561 = vmatpush1.msra.mxu0 0.0
        %1562 = vmatprep.subr.mxu0 0.0
        %1563 = vmatpush1.msra.mxu0 0.0
        %1564 = vmatprep.subr.mxu0 0.0
        %1565 = vmatpush1.msra.mxu0 0.0
        %1566 = vmatprep.subr.mxu0 0.0
        %1567 = vmatpush1.msra.mxu0 0.0
        %1568 = vmatprep.subr.mxu0 0.0
        %1569 = vmatpush1.msra.mxu0 0.0
        %1570 = vmatprep.subr.mxu0 0.0
        %1571 = vmatpush1.msra.mxu0 0.0
        %1572 = vmatprep.subr.mxu0 0.0
        %1573 = vmatpush1.msra.mxu0 0.0
        %1574 = vmatprep.subr.mxu0 0.0
        %1575 = vmatpush1.msra.mxu0 0.0
        %1576 = vmatprep.subr.mxu0 0.0
        %1577 = vmatpush1.msra.mxu0 0.0
        %1578 = vmatprep.subr.mxu0 0.0
        %1579 = vmatpush1.msra.mxu0 0.0
        %1580 = vmatprep.subr.mxu0 0.0
        %1581 = vmatpush1.msra.mxu0 0.0
        %1582 = vmatprep.subr.mxu0 0.0
        %1583 = vmatpush1.msra.mxu0 0.0
        %1584 = vmatprep.subr.mxu0 0.0
        %1585 = vmatpush1.msra.mxu0 0.0
        %1586 = vmatprep.subr.mxu0 0.0
        %1587 = vmatpush1.msra.mxu0 0.0
        %1588 = vmatprep.subr.mxu0 0.0
        %1589 = vmatpush1.msra.mxu0 0.0
        %1590 = vmatprep.subr.mxu0 0.0
        %1591 = vmatpush1.msra.mxu0 0.0
        %1592 = vmatprep.subr.mxu0 0.0
        %1593 = vmatpush1.msra.mxu0 0.0
        %1594 = vmatprep.mubr.f32.mxu0 0.0
        %v1595 = vand.u32 %v1517, 4294901760
        %v1596 = vsub.f32 %v1517, %v1595
        %v1597 = vand.u32 %v1596, 4294901760
        %v1598 = vsub.f32 %v1596, %v1597
        %v1599 = vand.u32 %v1598, 4294901760
        %1600 = vmatmul.mubr.f32.gmra.mrb[0].mxu0 %v1599
        %v1601 = vpop.f32.mrb[0].mxu0
        %v1602 = vadd.f32 0.0, %v1601
        %v1603 = vpop.f32.mrb[0].mxu0
        %1604 = vmatprep.mubr.f32.mxu0 0.0
        %v1605 = vand.u32 %v1520, 4294901760
        %v1606 = vsub.f32 %v1520, %v1605
        %v1607 = vand.u32 %v1606, 4294901760
        %v1608 = vsub.f32 %v1606, %v1607
        %v1609 = vand.u32 %v1608, 4294901760
        %1610 = vmatmul.mubr.f32.gmra.mrb[0].mxu0 %v1609
        %v1611 = vpop.f32.mrb[0].mxu0
        %v1612 = vadd.f32 0.0, %v1611
        %v1613 = vpop.f32.mrb[0].mxu0
        %1614 = vmatprep.mubr.f32.mxu0 0.0
        %v1615 = vand.u32 %v1523, 4294901760
        %v1616 = vsub.f32 %v1523, %v1615
        %v1617 = vand.u32 %v1616, 4294901760
        %v1618 = vsub.f32 %v1616, %v1617
        %v1619 = vand.u32 %v1618, 4294901760
        %1620 = vmatmul.mubr.f32.gmra.mrb[0].mxu0 %v1619
        %v1621 = vpop.f32.mrb[0].mxu0
        %v1622 = vadd.f32 0.0, %v1621
        %v1623 = vpop.f32.mrb[0].mxu0
        %1624 = vmatprep.mubr.f32.mxu0 0.0
        %v1625 = vand.u32 %v1526, 4294901760
        %v1626 = vsub.f32 %v1526, %v1625
        %v1627 = vand.u32 %v1626, 4294901760
        %v1628 = vsub.f32 %v1626, %v1627
        %v1629 = vand.u32 %v1628, 4294901760
        %1630 = vmatmul.mubr.f32.gmra.mrb[0].mxu0 %v1629
        %v1631 = vpop.f32.mrb[0].mxu0
        %v1632 = vadd.f32 0.0, %v1631
        %v1633 = vpop.f32.mrb[0].mxu0
        %1634 = vdwg.mxu0
        %1635 = vmatprep.subr.mxu0 0.0
        %v1636 = vand.u32 %v1514, 4294901760
        %v1637 = vsub.f32 %v1514, %v1636
        %v1638 = vand.u32 %v1637, 4294901760
        %v1639 = vsub.f32 %v1637, %v1638
        %v1640 = vand.u32 %v1639, 4294901760
        %1641 = vmatpush1.msra.mxu0 %v1640
        %1642 = vmatprep.subr.mxu0 0.0
        %v1643 = vand.u32 %v1515, 4294901760
        %v1644 = vsub.f32 %v1515, %v1643
        %v1645 = vand.u32 %v1644, 4294901760
        %v1646 = vsub.f32 %v1644, %v1645
        %v1647 = vand.u32 %v1646, 4294901760
        %1648 = vmatpush1.msra.mxu0 %v1647
        %1649 = vmatprep.subr.mxu0 0.0
        %1650 = vmatpush1.msra.mxu0 0.0
        %1651 = vmatprep.subr.mxu0 0.0
        %1652 = vmatpush1.msra.mxu0 0.0
        %1653 = vmatprep.subr.mxu0 0.0
        %1654 = vmatpush1.msra.mxu0 0.0
        %1655 = vmatprep.subr.mxu0 0.0
        %1656 = vmatpush1.msra.mxu0 0.0
        %1657 = vmatprep.subr.mxu0 0.0
        %1658 = vmatpush1.msra.mxu0 0.0
        %1659 = vmatprep.subr.mxu0 0.0
        %1660 = vmatpush1.msra.mxu0 0.0
        %1661 = vmatprep.subr.mxu0 0.0
        %1662 = vmatpush1.msra.mxu0 0.0
        %1663 = vmatprep.subr.mxu0 0.0
        %1664 = vmatpush1.msra.mxu0 0.0
        %1665 = vmatprep.subr.mxu0 0.0
        %1666 = vmatpush1.msra.mxu0 0.0
        %1667 = vmatprep.subr.mxu0 0.0
        %1668 = vmatpush1.msra.mxu0 0.0
        %1669 = vmatprep.subr.mxu0 0.0
        %1670 = vmatpush1.msra.mxu0 0.0
        %1671 = vmatprep.subr.mxu0 0.0
        %1672 = vmatpush1.msra.mxu0 0.0
        %1673 = vmatprep.subr.mxu0 0.0
        %1674 = vmatpush1.msra.mxu0 0.0
        %1675 = vmatprep.subr.mxu0 0.0
        %1676 = vmatpush1.msra.mxu0 0.0
        %1677 = vmatprep.subr.mxu0 0.0
        %1678 = vmatpush1.msra.mxu0 0.0
        %1679 = vmatprep.subr.mxu0 0.0
        %1680 = vmatpush1.msra.mxu0 0.0
        %1681 = vmatprep.subr.mxu0 0.0
        %1682 = vmatpush1.msra.mxu0 0.0
        %1683 = vmatprep.subr.mxu0 0.0
        %1684 = vmatpush1.msra.mxu0 0.0
        %1685 = vmatprep.subr.mxu0 0.0
        %1686 = vmatpush1.msra.mxu0 0.0
        %1687 = vmatprep.subr.mxu0 0.0
        %1688 = vmatpush1.msra.mxu0 0.0
        %1689 = vmatprep.subr.mxu0 0.0
        %1690 = vmatpush1.msra.mxu0 0.0
        %1691 = vmatprep.subr.mxu0 0.0
        %1692 = vmatpush1.msra.mxu0 0.0
        %1693 = vmatprep.subr.mxu0 0.0
        %1694 = vmatpush1.msra.mxu0 0.0
        %1695 = vmatprep.subr.mxu0 0.0
        %1696 = vmatpush1.msra.mxu0 0.0
        %1697 = vmatprep.subr.mxu0 0.0
        %1698 = vmatpush1.msra.mxu0 0.0
        %1699 = vmatprep.subr.mxu0 0.0
        %1700 = vmatpush1.msra.mxu0 0.0
        %1701 = vmatprep.subr.mxu0 0.0
        %1702 = vmatpush1.msra.mxu0 0.0
        %1703 = vmatprep.subr.mxu0 0.0
        %1704 = vmatpush1.msra.mxu0 0.0
        %1705 = vmatprep.subr.mxu0 0.0
        %1706 = vmatpush1.msra.mxu0 0.0
        %1707 = vmatprep.subr.mxu0 0.0
        %1708 = vmatpush1.msra.mxu0 0.0
        %1709 = vmatprep.mubr.f32.mxu0 0.0
        %v1710 = vand.u32 %v1517, 4294901760
        %1711 = vmatmul.mubr.f32.gmra.mrb[0].mxu0 %v1710
        %v1712 = vpop.f32.mrb[0].mxu0
        %v1713 = vadd.f32 %v1602, %v1712
        %v1714 = vpop.f32.mrb[0].mxu0
        %1715 = vmatprep.mubr.f32.mxu0 0.0
        %v1716 = vand.u32 %v1520, 4294901760
        %1717 = vmatmul.mubr.f32.gmra.mrb[0].mxu0 %v1716
        %v1718 = vpop.f32.mrb[0].mxu0
        %v1719 = vadd.f32 %v1612, %v1718
        %v1720 = vpop.f32.mrb[0].mxu0
        %1721 = vmatprep.mubr.f32.mxu0 0.0
        %v1722 = vand.u32 %v1523, 4294901760
        %1723 = vmatmul.mubr.f32.gmra.mrb[0].mxu0 %v1722
        %v1724 = vpop.f32.mrb[0].mxu0
        %v1725 = vadd.f32 %v1622, %v1724
        %v1726 = vpop.f32.mrb[0].mxu0
        %1727 = vmatprep.mubr.f32.mxu0 0.0
        %v1728 = vand.u32 %v1526, 4294901760
        %1729 = vmatmul.mubr.f32.gmra.mrb[0].mxu0 %v1728
        %v1730 = vpop.f32.mrb[0].mxu0
        %v1731 = vadd.f32 %v1632, %v1730
        %v1732 = vpop.f32.mrb[0].mxu0
        %1733 = vdwg.mxu0
        %1734 = vmatprep.subr.mxu0 0.0
        %v1735 = vand.u32 %v1514, 4294901760
        %v1736 = vsub.f32 %v1514, %v1735
        %1737 = vmatpush1.msra.mxu0 %v1736
        %1738 = vmatprep.subr.mxu0 0.0
        %v1739 = vand.u32 %v1515, 4294901760
        %v1740 = vsub.f32 %v1515, %v1739
        %1741 = vmatpush1.msra.mxu0 %v1740
        %1742 = vmatprep.subr.mxu0 0.0
        %1743 = vmatpush1.msra.mxu0 0.0
        %1744 = vmatprep.subr.mxu0 0.0
        %1745 = vmatpush1.msra.mxu0 0.0
        %1746 = vmatprep.subr.mxu0 0.0
        %1747 = vmatpush1.msra.mxu0 0.0
        %1748 = vmatprep.subr.mxu0 0.0
        %1749 = vmatpush1.msra.mxu0 0.0
        %1750 = vmatprep.subr.mxu0 0.0
        %1751 = vmatpush1.msra.mxu0 0.0
        %1752 = vmatprep.subr.mxu0 0.0
        %1753 = vmatpush1.msra.mxu0 0.0
        %1754 = vmatprep.subr.mxu0 0.0
        %1755 = vmatpush1.msra.mxu0 0.0
        %1756 = vmatprep.subr.mxu0 0.0
        %1757 = vmatpush1.msra.mxu0 0.0
        %1758 = vmatprep.subr.mxu0 0.0
        %1759 = vmatpush1.msra.mxu0 0.0
        %1760 = vmatprep.subr.mxu0 0.0
        %1761 = vmatpush1.msra.mxu0 0.0
        %1762 = vmatprep.subr.mxu0 0.0
        %1763 = vmatpush1.msra.mxu0 0.0
        %1764 = vmatprep.subr.mxu0 0.0
        %1765 = vmatpush1.msra.mxu0 0.0
        %1766 = vmatprep.subr.mxu0 0.0
        %1767 = vmatpush1.msra.mxu0 0.0
        %1768 = vmatprep.subr.mxu0 0.0
        %1769 = vmatpush1.msra.mxu0 0.0
        %1770 = vmatprep.subr.mxu0 0.0
        %1771 = vmatpush1.msra.mxu0 0.0
        %1772 = vmatprep.subr.mxu0 0.0
        %1773 = vmatpush1.msra.mxu0 0.0
        %1774 = vmatprep.subr.mxu0 0.0
        %1775 = vmatpush1.msra.mxu0 0.0
        %1776 = vmatprep.subr.mxu0 0.0
        %1777 = vmatpush1.msra.mxu0 0.0
        %1778 = vmatprep.subr.mxu0 0.0
        %1779 = vmatpush1.msra.mxu0 0.0
        %1780 = vmatprep.subr.mxu0 0.0
        %1781 = vmatpush1.msra.mxu0 0.0
        %1782 = vmatprep.subr.mxu0 0.0
        %1783 = vmatpush1.msra.mxu0 0.0
        %1784 = vmatprep.subr.mxu0 0.0
        %1785 = vmatpush1.msra.mxu0 0.0
        %1786 = vmatprep.subr.mxu0 0.0
        %1787 = vmatpush1.msra.mxu0 0.0
        %1788 = vmatprep.subr.mxu0 0.0
        %1789 = vmatpush1.msra.mxu0 0.0
        %1790 = vmatprep.subr.mxu0 0.0
        %1791 = vmatpush1.msra.mxu0 0.0
        %1792 = vmatprep.subr.mxu0 0.0
        %1793 = vmatpush1.msra.mxu0 0.0
        %1794 = vmatprep.subr.mxu0 0.0
        %1795 = vmatpush1.msra.mxu0 0.0
        %1796 = vmatprep.subr.mxu0 0.0
        %1797 = vmatpush1.msra.mxu0 0.0
        %1798 = vmatprep.subr.mxu0 0.0
        %1799 = vmatpush1.msra.mxu0 0.0
        %1800 = vmatprep.subr.mxu0 0.0
        %1801 = vmatpush1.msra.mxu0 0.0
        %1802 = vmatprep.mubr.f32.mxu0 0.0
        %v1803 = vand.u32 %v1517, 4294901760
        %v1804 = vsub.f32 %v1517, %v1803
        %1805 = vmatmul.mubr.f32.gmra.mrb[0].mxu0 %v1804
        %v1806 = vpop.f32.mrb[0].mxu0
        %v1807 = vadd.f32 %v1713, %v1806
        %v1808 = vpop.f32.mrb[0].mxu0
        %1809 = vmatprep.mubr.f32.mxu0 0.0
        %v1810 = vand.u32 %v1520, 4294901760
        %v1811 = vsub.f32 %v1520, %v1810
        %1812 = vmatmul.mubr.f32.gmra.mrb[0].mxu0 %v1811
        %v1813 = vpop.f32.mrb[0].mxu0
        %v1814 = vadd.f32 %v1719, %v1813
        %v1815 = vpop.f32.mrb[0].mxu0
        %1816 = vmatprep.mubr.f32.mxu0 0.0
        %v1817 = vand.u32 %v1523, 4294901760
        %v1818 = vsub.f32 %v1523, %v1817
        %1819 = vmatmul.mubr.f32.gmra.mrb[0].mxu0 %v1818
        %v1820 = vpop.f32.mrb[0].mxu0
        %v1821 = vadd.f32 %v1725, %v1820
        %v1822 = vpop.f32.mrb[0].mxu0
        %1823 = vmatprep.mubr.f32.mxu0 0.0
        %v1824 = vand.u32 %v1526, 4294901760
        %v1825 = vsub.f32 %v1526, %v1824
        %1826 = vmatmul.mubr.f32.gmra.mrb[0].mxu0 %v1825
        %v1827 = vpop.f32.mrb[0].mxu0
        %v1828 = vadd.f32 %v1731, %v1827
        %v1829 = vpop.f32.mrb[0].mxu0
        %1830 = vdwg.mxu0
        %1831 = vmatprep.subr.mxu0 0.0
        %v1832 = vand.u32 %v1514, 4294901760
        %1833 = vmatpush1.msra.mxu0 %v1832
        %1834 = vmatprep.subr.mxu0 0.0
        %v1835 = vand.u32 %v1515, 4294901760
        %1836 = vmatpush1.msra.mxu0 %v1835
        %1837 = vmatprep.subr.mxu0 0.0
        %1838 = vmatpush1.msra.mxu0 0.0
        %1839 = vmatprep.subr.mxu0 0.0
        %1840 = vmatpush1.msra.mxu0 0.0
        %1841 = vmatprep.subr.mxu0 0.0
        %1842 = vmatpush1.msra.mxu0 0.0
        %1843 = vmatprep.subr.mxu0 0.0
        %1844 = vmatpush1.msra.mxu0 0.0
        %1845 = vmatprep.subr.mxu0 0.0
        %1846 = vmatpush1.msra.mxu0 0.0
        %1847 = vmatprep.subr.mxu0 0.0
        %1848 = vmatpush1.msra.mxu0 0.0
        %1849 = vmatprep.subr.mxu0 0.0
        %1850 = vmatpush1.msra.mxu0 0.0
        %1851 = vmatprep.subr.mxu0 0.0
        %1852 = vmatpush1.msra.mxu0 0.0
        %1853 = vmatprep.subr.mxu0 0.0
        %1854 = vmatpush1.msra.mxu0 0.0
        %1855 = vmatprep.subr.mxu0 0.0
        %1856 = vmatpush1.msra.mxu0 0.0
        %1857 = vmatprep.subr.mxu0 0.0
        %1858 = vmatpush1.msra.mxu0 0.0
        %1859 = vmatprep.subr.mxu0 0.0
        %1860 = vmatpush1.msra.mxu0 0.0
        %1861 = vmatprep.subr.mxu0 0.0
        %1862 = vmatpush1.msra.mxu0 0.0
        %1863 = vmatprep.subr.mxu0 0.0
        %1864 = vmatpush1.msra.mxu0 0.0
        %1865 = vmatprep.subr.mxu0 0.0
        %1866 = vmatpush1.msra.mxu0 0.0
        %1867 = vmatprep.subr.mxu0 0.0
        %1868 = vmatpush1.msra.mxu0 0.0
        %1869 = vmatprep.subr.mxu0 0.0
        %1870 = vmatpush1.msra.mxu0 0.0
        %1871 = vmatprep.subr.mxu0 0.0
        %1872 = vmatpush1.msra.mxu0 0.0
        %1873 = vmatprep.subr.mxu0 0.0
        %1874 = vmatpush1.msra.mxu0 0.0
        %1875 = vmatprep.subr.mxu0 0.0
        %1876 = vmatpush1.msra.mxu0 0.0
        %1877 = vmatprep.subr.mxu0 0.0
        %1878 = vmatpush1.msra.mxu0 0.0
        %1879 = vmatprep.subr.mxu0 0.0
        %1880 = vmatpush1.msra.mxu0 0.0
        %1881 = vmatprep.subr.mxu0 0.0
        %1882 = vmatpush1.msra.mxu0 0.0
        %1883 = vmatprep.subr.mxu0 0.0
        %1884 = vmatpush1.msra.mxu0 0.0
        %1885 = vmatprep.subr.mxu0 0.0
        %1886 = vmatpush1.msra.mxu0 0.0
        %1887 = vmatprep.subr.mxu0 0.0
        %1888 = vmatpush1.msra.mxu0 0.0
        %1889 = vmatprep.subr.mxu0 0.0
        %1890 = vmatpush1.msra.mxu0 0.0
        %1891 = vmatprep.subr.mxu0 0.0
        %1892 = vmatpush1.msra.mxu0 0.0
        %1893 = vmatprep.subr.mxu0 0.0
        %1894 = vmatpush1.msra.mxu0 0.0
        %1895 = vmatprep.subr.mxu0 0.0
        %1896 = vmatpush1.msra.mxu0 0.0
        %1897 = vmatprep.mubr.f32.mxu0 0.0
        %v1898 = vand.u32 %v1517, 4294901760
        %v1899 = vsub.f32 %v1517, %v1898
        %v1900 = vand.u32 %v1899, 4294901760
        %1901 = vmatmul.mubr.f32.gmra.mrb[0].mxu0 %v1900
        %v1902 = vpop.f32.mrb[0].mxu0
        %v1903 = vadd.f32 %v1807, %v1902
        %v1904 = vpop.f32.mrb[0].mxu0
        %1905 = vmatprep.mubr.f32.mxu0 0.0
        %v1906 = vand.u32 %v1520, 4294901760
        %v1907 = vsub.f32 %v1520, %v1906
        %v1908 = vand.u32 %v1907, 4294901760
        %1909 = vmatmul.mubr.f32.gmra.mrb[0].mxu0 %v1908
        %v1910 = vpop.f32.mrb[0].mxu0
        %v1911 = vadd.f32 %v1814, %v1910
        %v1912 = vpop.f32.mrb[0].mxu0
        %1913 = vmatprep.mubr.f32.mxu0 0.0
        %v1914 = vand.u32 %v1523, 4294901760
        %v1915 = vsub.f32 %v1523, %v1914
        %v1916 = vand.u32 %v1915, 4294901760
        %1917 = vmatmul.mubr.f32.gmra.mrb[0].mxu0 %v1916
        %v1918 = vpop.f32.mrb[0].mxu0
        %v1919 = vadd.f32 %v1821, %v1918
        %v1920 = vpop.f32.mrb[0].mxu0
        %1921 = vmatprep.mubr.f32.mxu0 0.0
        %v1922 = vand.u32 %v1526, 4294901760
        %v1923 = vsub.f32 %v1526, %v1922
        %v1924 = vand.u32 %v1923, 4294901760
        %1925 = vmatmul.mubr.f32.gmra.mrb[0].mxu0 %v1924
        %v1926 = vpop.f32.mrb[0].mxu0
        %v1927 = vadd.f32 %v1828, %v1926
        %v1928 = vpop.f32.mrb[0].mxu0
        %1929 = vdwg.mxu0
        %1930 = vmatprep.subr.mxu0 0.0
        %v1931 = vand.u32 %v1514, 4294901760
        %v1932 = vsub.f32 %v1514, %v1931
        %v1933 = vand.u32 %v1932, 4294901760
        %1934 = vmatpush1.msra.mxu0 %v1933
        %1935 = vmatprep.subr.mxu0 0.0
        %v1936 = vand.u32 %v1515, 4294901760
        %v1937 = vsub.f32 %v1515, %v1936
        %v1938 = vand.u32 %v1937, 4294901760
        %1939 = vmatpush1.msra.mxu0 %v1938
        %1940 = vmatprep.subr.mxu0 0.0
        %1941 = vmatpush1.msra.mxu0 0.0
        %1942 = vmatprep.subr.mxu0 0.0
        %1943 = vmatpush1.msra.mxu0 0.0
        %1944 = vmatprep.subr.mxu0 0.0
        %1945 = vmatpush1.msra.mxu0 0.0
        %1946 = vmatprep.subr.mxu0 0.0
        %1947 = vmatpush1.msra.mxu0 0.0
        %1948 = vmatprep.subr.mxu0 0.0
        %1949 = vmatpush1.msra.mxu0 0.0
        %1950 = vmatprep.subr.mxu0 0.0
        %1951 = vmatpush1.msra.mxu0 0.0
        %1952 = vmatprep.subr.mxu0 0.0
        %1953 = vmatpush1.msra.mxu0 0.0
        %1954 = vmatprep.subr.mxu0 0.0
        %1955 = vmatpush1.msra.mxu0 0.0
        %1956 = vmatprep.subr.mxu0 0.0
        %1957 = vmatpush1.msra.mxu0 0.0
        %1958 = vmatprep.subr.mxu0 0.0
        %1959 = vmatpush1.msra.mxu0 0.0
        %1960 = vmatprep.subr.mxu0 0.0
        %1961 = vmatpush1.msra.mxu0 0.0
        %1962 = vmatprep.subr.mxu0 0.0
        %1963 = vmatpush1.msra.mxu0 0.0
        %1964 = vmatprep.subr.mxu0 0.0
        %1965 = vmatpush1.msra.mxu0 0.0
        %1966 = vmatprep.subr.mxu0 0.0
        %1967 = vmatpush1.msra.mxu0 0.0
        %1968 = vmatprep.subr.mxu0 0.0
        %1969 = vmatpush1.msra.mxu0 0.0
        %1970 = vmatprep.subr.mxu0 0.0
        %1971 = vmatpush1.msra.mxu0 0.0
        %1972 = vmatprep.subr.mxu0 0.0
        %1973 = vmatpush1.msra.mxu0 0.0
        %1974 = vmatprep.subr.mxu0 0.0
        %1975 = vmatpush1.msra.mxu0 0.0
        %1976 = vmatprep.subr.mxu0 0.0
        %1977 = vmatpush1.msra.mxu0 0.0
        %1978 = vmatprep.subr.mxu0 0.0
        %1979 = vmatpush1.msra.mxu0 0.0
        %1980 = vmatprep.subr.mxu0 0.0
        %1981 = vmatpush1.msra.mxu0 0.0
        %1982 = vmatprep.subr.mxu0 0.0
        %1983 = vmatpush1.msra.mxu0 0.0
        %1984 = vmatprep.subr.mxu0 0.0
        %1985 = vmatpush1.msra.mxu0 0.0
        %1986 = vmatprep.subr.mxu0 0.0
        %1987 = vmatpush1.msra.mxu0 0.0
        %1988 = vmatprep.subr.mxu0 0.0
        %1989 = vmatpush1.msra.mxu0 0.0
        %1990 = vmatprep.subr.mxu0 0.0
        %1991 = vmatpush1.msra.mxu0 0.0
        %1992 = vmatprep.subr.mxu0 0.0
        %1993 = vmatpush1.msra.mxu0 0.0
        %1994 = vmatprep.subr.mxu0 0.0
        %1995 = vmatpush1.msra.mxu0 0.0
        %1996 = vmatprep.subr.mxu0 0.0
        %1997 = vmatpush1.msra.mxu0 0.0
        %1998 = vmatprep.subr.mxu0 0.0
        %1999 = vmatpush1.msra.mxu0 0.0
        %2000 = vmatprep.mubr.f32.mxu0 0.0
        %v2001 = vand.u32 %v1517, 4294901760
        %2002 = vmatmul.mubr.f32.gmra.mrb[0].mxu0 %v2001
        %v2003 = vpop.f32.mrb[0].mxu0
        %v2004 = vadd.f32 %v1903, %v2003
        %v2005 = vpop.f32.mrb[0].mxu0
        %2006 = vmatprep.mubr.f32.mxu0 0.0
        %v2007 = vand.u32 %v1520, 4294901760
        %2008 = vmatmul.mubr.f32.gmra.mrb[0].mxu0 %v2007
        %v2009 = vpop.f32.mrb[0].mxu0
        %v2010 = vadd.f32 %v1911, %v2009
        %v2011 = vpop.f32.mrb[0].mxu0
        %2012 = vmatprep.mubr.f32.mxu0 0.0
        %v2013 = vand.u32 %v1523, 4294901760
        %2014 = vmatmul.mubr.f32.gmra.mrb[0].mxu0 %v2013
        %v2015 = vpop.f32.mrb[0].mxu0
        %v2016 = vadd.f32 %v1919, %v2015
        %v2017 = vpop.f32.mrb[0].mxu0
        %2018 = vmatprep.mubr.f32.mxu0 0.0
        %v2019 = vand.u32 %v1526, 4294901760
        %2020 = vmatmul.mubr.f32.gmra.mrb[0].mxu0 %v2019
        %v2021 = vpop.f32.mrb[0].mxu0
        %v2022 = vadd.f32 %v1927, %v2021
        %v2023 = vpop.f32.mrb[0].mxu0
        %2024 = vdwg.mxu0
        %2025 = vmatprep.subr.mxu0 0.0
        %v2026 = vand.u32 %v1514, 4294901760
        %2027 = vmatpush1.msra.mxu0 %v2026
        %2028 = vmatprep.subr.mxu0 0.0
        %v2029 = vand.u32 %v1515, 4294901760
        %2030 = vmatpush1.msra.mxu0 %v2029
        %2031 = vmatprep.subr.mxu0 0.0
        %2032 = vmatpush1.msra.mxu0 0.0
        %2033 = vmatprep.subr.mxu0 0.0
        %2034 = vmatpush1.msra.mxu0 0.0
        %2035 = vmatprep.subr.mxu0 0.0
        %2036 = vmatpush1.msra.mxu0 0.0
        %2037 = vmatprep.subr.mxu0 0.0
        %2038 = vmatpush1.msra.mxu0 0.0
        %2039 = vmatprep.subr.mxu0 0.0
        %2040 = vmatpush1.msra.mxu0 0.0
        %2041 = vmatprep.subr.mxu0 0.0
        %2042 = vmatpush1.msra.mxu0 0.0
        %2043 = vmatprep.subr.mxu0 0.0
        %2044 = vmatpush1.msra.mxu0 0.0
        %2045 = vmatprep.subr.mxu0 0.0
        %2046 = vmatpush1.msra.mxu0 0.0
        %2047 = vmatprep.subr.mxu0 0.0
        %2048 = vmatpush1.msra.mxu0 0.0
        %2049 = vmatprep.subr.mxu0 0.0
        %2050 = vmatpush1.msra.mxu0 0.0
        %2051 = vmatprep.subr.mxu0 0.0
        %2052 = vmatpush1.msra.mxu0 0.0
        %2053 = vmatprep.subr.mxu0 0.0
        %2054 = vmatpush1.msra.mxu0 0.0
        %2055 = vmatprep.subr.mxu0 0.0
        %2056 = vmatpush1.msra.mxu0 0.0
        %2057 = vmatprep.subr.mxu0 0.0
        %2058 = vmatpush1.msra.mxu0 0.0
        %2059 = vmatprep.subr.mxu0 0.0
        %2060 = vmatpush1.msra.mxu0 0.0
        %2061 = vmatprep.subr.mxu0 0.0
        %2062 = vmatpush1.msra.mxu0 0.0
        %2063 = vmatprep.subr.mxu0 0.0
        %2064 = vmatpush1.msra.mxu0 0.0
        %2065 = vmatprep.subr.mxu0 0.0
        %2066 = vmatpush1.msra.mxu0 0.0
        %2067 = vmatprep.subr.mxu0 0.0
        %2068 = vmatpush1.msra.mxu0 0.0
        %2069 = vmatprep.subr.mxu0 0.0
        %2070 = vmatpush1.msra.mxu0 0.0
        %2071 = vmatprep.subr.mxu0 0.0
        %2072 = vmatpush1.msra.mxu0 0.0
        %2073 = vmatprep.subr.mxu0 0.0
        %2074 = vmatpush1.msra.mxu0 0.0
        %2075 = vmatprep.subr.mxu0 0.0
        %2076 = vmatpush1.msra.mxu0 0.0
        %2077 = vmatprep.subr.mxu0 0.0
        %2078 = vmatpush1.msra.mxu0 0.0
        %2079 = vmatprep.subr.mxu0 0.0
        %2080 = vmatpush1.msra.mxu0 0.0
        %2081 = vmatprep.subr.mxu0 0.0
        %2082 = vmatpush1.msra.mxu0 0.0
        %2083 = vmatprep.subr.mxu0 0.0
        %2084 = vmatpush1.msra.mxu0 0.0
        %2085 = vmatprep.subr.mxu0 0.0
        %2086 = vmatpush1.msra.mxu0 0.0
        %2087 = vmatprep.subr.mxu0 0.0
        %2088 = vmatpush1.msra.mxu0 0.0
        %2089 = vmatprep.subr.mxu0 0.0
        %2090 = vmatpush1.msra.mxu0 0.0
        %2091 = vmatprep.mubr.f32.mxu0 0.0
        %v2092 = vand.u32 %v1517, 4294901760
        %2093 = vmatmul.mubr.f32.gmra.mrb[0].mxu0 %v2092
        %v2094 = vpop.f32.mrb[0].mxu0
        %v2095 = vadd.f32 %v2004, %v2094
        %v2096 = vpop.f32.mrb[0].mxu0
        %2097 = vmatprep.mubr.f32.mxu0 0.0
        %v2098 = vand.u32 %v1520, 4294901760
        %2099 = vmatmul.mubr.f32.gmra.mrb[0].mxu0 %v2098
        %v2100 = vpop.f32.mrb[0].mxu0
        %v2101 = vadd.f32 %v2010, %v2100
        %v2102 = vpop.f32.mrb[0].mxu0
        %2103 = vmatprep.mubr.f32.mxu0 0.0
        %v2104 = vand.u32 %v1523, 4294901760
        %2105 = vmatmul.mubr.f32.gmra.mrb[0].mxu0 %v2104
        %v2106 = vpop.f32.mrb[0].mxu0
        %v2107 = vadd.f32 %v2016, %v2106
        %v2108 = vpop.f32.mrb[0].mxu0
        %2109 = vmatprep.mubr.f32.mxu0 0.0
        %v2110 = vand.u32 %v1526, 4294901760
        %2111 = vmatmul.mubr.f32.gmra.mrb[0].mxu0 %v2110
        %v2112 = vpop.f32.mrb[0].mxu0
        %v2113 = vadd.f32 %v2022, %v2112
        %v2114 = vpop.f32.mrb[0].mxu0
        %2115 = vdwg.mxu0
        %2120 = vrot.lane.b32.xlu0 %v2095, 120
        %v2121 = vpop.permute.xlu0 %2120
        %2122 = vrot.lane.b32.xlu0 %v2101, 120
        %v2123 = vpop.permute.xlu0 %2122
        %2124 = vrot.lane.b32.xlu0 %v2107, 120
        %v2125 = vpop.permute.xlu0 %2124
        %2126 = vrot.lane.b32.xlu0 %v2113, 120
        %v2127 = vpop.permute.xlu0 %2126
        %v2132 = vmax.f32 %v2095, %v2121
        %v2133 = vmax.f32 %v2101, %v2123
        %v2134 = vmax.f32 %v2107, %v2125
        %v2135 = vmax.f32 %v2113, %v2127
        %vm2136 = vcmask 64512
        %2137 = vst.msk [vmem:[#allocation2] sm:$0xff] %vm2136, %v2132
        %2138 = vst.msk [vmem:[#allocation2 + $0x8] sm:$0xff] %vm2136, %v2133
        %2139 = vst.msk [vmem:[#allocation2 + $0x10] sm:$0xff] %vm2136, %v2134
        %2140 = vst.msk [vmem:[#allocation2 + $0x18] sm:$0xff] %vm2136, %v2135
        %v2141 = vld [vmem:[%s370] sm:$0xff]
        %v2142 = vld [vmem:[%s370 + $0x8] sm:$0xff]
        %v2143 = vld [vmem:[%s370 + $0x10] sm:$0xff]
        %v2144 = vld [vmem:[%s370 + $0x18] sm:$0xff]
        %v2145 = vsub.f32 %v2141, %v2132
        %v2146 = vsub.f32 %v2142, %v2133
        %v2147 = vsub.f32 %v2143, %v2134
        %v2148 = vsub.f32 %v2144, %v2135
        %v2149 = vmul.f32 %v2145, %v2145
        %v2150 = vmul.f32 %v2146, %v2146
        %v2151 = vmul.f32 %v2147, %v2147
        %v2152 = vmul.f32 %v2148, %v2148
        %v2153 = vsel %vm2136, %v2149, 0.0
        %v2154 = vsel %vm2136, %v2150, 0.0
        %v2155 = vadd.f32 %v2153, %v2154
        %v2156 = vsel %vm2136, %v2151, 0.0
        %v2157 = vadd.f32 %v2155, %v2156
        %v2158 = vsel %vm2136, %v2152, 0.0
        %v2159 = vadd.f32 %v2157, %v2158
        %2160 = vadd.xlane.f32.xlu0 %v2159
        %v2161 = vpop.xlane.xlu0 %2160
        %v2162 = vrot.slane %v2161, 4
        %v2163 = vadd.f32 %v2161, %v2162
        %v2164 = vrot.slane %v2163, 2
        %v2165 = vadd.f32 %v2163, %v2164
        %v2166 = vrot.slane %v2165, 1
        %v2167 = vadd.f32 %v2165, %v2166
        %s2168 = vtos %v2167
        %s2169 = smul.f32 %s2168, 0.0013020834
        %s2170 = sadd.f32 %s1479, %s2169
        %v2171 = vld [vmem:[#allocation2] ss:$2 sm:$0xff]
        %v2172 = vld [vmem:[%s1481] ss:$2 sm:$0xff]
        %v2173 = vld [vmem:[%s1487] ss:$2 sm:$0xff]
        %v2174 = vld [vmem:[%s1489] ss:$2 sm:$0xff]
        %v2175 = vmax.f32 %v2171, %v2173
        %v2176 = vmax.f32 %v2172, %v2174
        %vm2177 = vcmp.lt.s32.totalorder %v536, 4
        %vm2178 = vmand %vm2177, %vm539
        %vm2179 = vcmp.ge.s32.totalorder %v536, 4
        %v2180 = vsub.s32 %v536, 4
        %v2181 = vmul.u32 %v2180, 2
        %v2182 = vadd.s32 %v2181, 1
        %vm2183 = vcmp.eq.s32.totalorder %v531, %v2182
        %vm2184 = vmand %vm2179, %vm2183
        %vm2185 = vmor %vm2178, %vm2184
        %v2186 = vsel %vm2185, 1, 0
        %v2187 = vcvt.s32.f32 %v2186
        %v2189 = vsel %vm2136, %v2175, 0
        %v2192 = vsel %vm2136, %v2176, 0
        %2194 = vmatprep.subr.mxu0 0.0
        %v2195 = vand.u32 %v2187, 4294901760
        %2196 = vmatpush1.msra.mxu0 %v2195
        %2197 = vmatprep.subr.mxu0 0.0
        %2198 = vmatpush1.msra.mxu0 0.0
        %2199 = vmatprep.subr.mxu0 0.0
        %2200 = vmatpush1.msra.mxu0 0.0
        %2201 = vmatprep.subr.mxu0 0.0
        %2202 = vmatpush1.msra.mxu0 0.0
        %2203 = vmatprep.subr.mxu0 0.0
        %2204 = vmatpush1.msra.mxu0 0.0
        %2205 = vmatprep.subr.mxu0 0.0
        %2206 = vmatpush1.msra.mxu0 0.0
        %2207 = vmatprep.subr.mxu0 0.0
        %2208 = vmatpush1.msra.mxu0 0.0
        %2209 = vmatprep.subr.mxu0 0.0
        %2210 = vmatpush1.msra.mxu0 0.0
        %2211 = vmatprep.subr.mxu0 0.0
        %2212 = vmatpush1.msra.mxu0 0.0
        %2213 = vmatprep.subr.mxu0 0.0
        %2214 = vmatpush1.msra.mxu0 0.0
        %2215 = vmatprep.subr.mxu0 0.0
        %2216 = vmatpush1.msra.mxu0 0.0
        %2217 = vmatprep.subr.mxu0 0.0
        %2218 = vmatpush1.msra.mxu0 0.0
        %2219 = vmatprep.subr.mxu0 0.0
        %2220 = vmatpush1.msra.mxu0 0.0
        %2221 = vmatprep.subr.mxu0 0.0
        %2222 = vmatpush1.msra.mxu0 0.0
        %2223 = vmatprep.subr.mxu0 0.0
        %2224 = vmatpush1.msra.mxu0 0.0
        %2225 = vmatprep.subr.mxu0 0.0
        %2226 = vmatpush1.msra.mxu0 0.0
        %2227 = vmatprep.subr.mxu0 0.0
        %2228 = vmatpush1.msra.mxu0 0.0
        %2229 = vmatprep.subr.mxu0 0.0
        %2230 = vmatpush1.msra.mxu0 0.0
        %2231 = vmatprep.subr.mxu0 0.0
        %2232 = vmatpush1.msra.mxu0 0.0
        %2233 = vmatprep.subr.mxu0 0.0
        %2234 = vmatpush1.msra.mxu0 0.0
        %2235 = vmatprep.subr.mxu0 0.0
        %2236 = vmatpush1.msra.mxu0 0.0
        %2237 = vmatprep.subr.mxu0 0.0
        %2238 = vmatpush1.msra.mxu0 0.0
        %2239 = vmatprep.subr.mxu0 0.0
        %2240 = vmatpush1.msra.mxu0 0.0
        %2241 = vmatprep.subr.mxu0 0.0
        %2242 = vmatpush1.msra.mxu0 0.0
        %2243 = vmatprep.subr.mxu0 0.0
        %2244 = vmatpush1.msra.mxu0 0.0
        %2245 = vmatprep.subr.mxu0 0.0
        %2246 = vmatpush1.msra.mxu0 0.0
        %2247 = vmatprep.subr.mxu0 0.0
        %2248 = vmatpush1.msra.mxu0 0.0
        %2249 = vmatprep.subr.mxu0 0.0
        %2250 = vmatpush1.msra.mxu0 0.0
        %2251 = vmatprep.subr.mxu0 0.0
        %2252 = vmatpush1.msra.mxu0 0.0
        %2253 = vmatprep.subr.mxu0 0.0
        %2254 = vmatpush1.msra.mxu0 0.0
        %2255 = vmatprep.subr.mxu0 0.0
        %2256 = vmatpush1.msra.mxu0 0.0
        %2257 = vmatprep.subr.mxu0 0.0
        %2258 = vmatpush1.msra.mxu0 0.0
        %2259 = vmatprep.mubr.f32.mxu0 0.0
        %v2260 = vand.u32 %v2189, 4294901760
        %v2261 = vsub.f32 %v2189, %v2260
        %v2262 = vand.u32 %v2261, 4294901760
        %v2263 = vsub.f32 %v2261, %v2262
        %v2264 = vand.u32 %v2263, 4294901760
        %2265 = vmatmul.mubr.f32.gmra.mrb[0].mxu0 %v2264
        %v2266 = vpop.f32.mrb[0].mxu0
        %v2267 = vadd.f32 0.0, %v2266
        %v2268 = vpop.f32.mrb[0].mxu0
        %2269 = vmatprep.mubr.f32.mxu0 0.0
        %v2270 = vand.u32 %v2192, 4294901760
        %v2271 = vsub.f32 %v2192, %v2270
        %v2272 = vand.u32 %v2271, 4294901760
        %v2273 = vsub.f32 %v2271, %v2272
        %v2274 = vand.u32 %v2273, 4294901760
        %2275 = vmatmul.mubr.f32.gmra.mrb[0].mxu0 %v2274
        %v2276 = vpop.f32.mrb[0].mxu0
        %v2277 = vadd.f32 0.0, %v2276
        %v2278 = vpop.f32.mrb[0].mxu0
        %2279 = vdwg.mxu0
        %2280 = vmatprep.subr.mxu0 0.0
        %v2281 = vand.u32 %v2187, 4294901760
        %v2282 = vsub.f32 %v2187, %v2281
        %v2283 = vand.u32 %v2282, 4294901760
        %v2284 = vsub.f32 %v2282, %v2283
        %v2285 = vand.u32 %v2284, 4294901760
        %2286 = vmatpush1.msra.mxu0 %v2285
        %2287 = vmatprep.subr.mxu0 0.0
        %2288 = vmatpush1.msra.mxu0 0.0
        %2289 = vmatprep.subr.mxu0 0.0
        %2290 = vmatpush1.msra.mxu0 0.0
        %2291 = vmatprep.subr.mxu0 0.0
        %2292 = vmatpush1.msra.mxu0 0.0
        %2293 = vmatprep.subr.mxu0 0.0
        %2294 = vmatpush1.msra.mxu0 0.0
        %2295 = vmatprep.subr.mxu0 0.0
        %2296 = vmatpush1.msra.mxu0 0.0
        %2297 = vmatprep.subr.mxu0 0.0
        %2298 = vmatpush1.msra.mxu0 0.0
        %2299 = vmatprep.subr.mxu0 0.0
        %2300 = vmatpush1.msra.mxu0 0.0
        %2301 = vmatprep.subr.mxu0 0.0
        %2302 = vmatpush1.msra.mxu0 0.0
        %2303 = vmatprep.subr.mxu0 0.0
        %2304 = vmatpush1.msra.mxu0 0.0
        %2305 = vmatprep.subr.mxu0 0.0
        %2306 = vmatpush1.msra.mxu0 0.0
        %2307 = vmatprep.subr.mxu0 0.0
        %2308 = vmatpush1.msra.mxu0 0.0
        %2309 = vmatprep.subr.mxu0 0.0
        %2310 = vmatpush1.msra.mxu0 0.0
        %2311 = vmatprep.subr.mxu0 0.0
        %2312 = vmatpush1.msra.mxu0 0.0
        %2313 = vmatprep.subr.mxu0 0.0
        %2314 = vmatpush1.msra.mxu0 0.0
        %2315 = vmatprep.subr.mxu0 0.0
        %2316 = vmatpush1.msra.mxu0 0.0
        %2317 = vmatprep.subr.mxu0 0.0
        %2318 = vmatpush1.msra.mxu0 0.0
        %2319 = vmatprep.subr.mxu0 0.0
        %2320 = vmatpush1.msra.mxu0 0.0
        %2321 = vmatprep.subr.mxu0 0.0
        %2322 = vmatpush1.msra.mxu0 0.0
        %2323 = vmatprep.subr.mxu0 0.0
        %2324 = vmatpush1.msra.mxu0 0.0
        %2325 = vmatprep.subr.mxu0 0.0
        %2326 = vmatpush1.msra.mxu0 0.0
        %2327 = vmatprep.subr.mxu0 0.0
        %2328 = vmatpush1.msra.mxu0 0.0
        %2329 = vmatprep.subr.mxu0 0.0
        %2330 = vmatpush1.msra.mxu0 0.0
        %2331 = vmatprep.subr.mxu0 0.0
        %2332 = vmatpush1.msra.mxu0 0.0
        %2333 = vmatprep.subr.mxu0 0.0
        %2334 = vmatpush1.msra.mxu0 0.0
        %2335 = vmatprep.subr.mxu0 0.0
        %2336 = vmatpush1.msra.mxu0 0.0
        %2337 = vmatprep.subr.mxu0 0.0
        %2338 = vmatpush1.msra.mxu0 0.0
        %2339 = vmatprep.subr.mxu0 0.0
        %2340 = vmatpush1.msra.mxu0 0.0
        %2341 = vmatprep.subr.mxu0 0.0
        %2342 = vmatpush1.msra.mxu0 0.0
        %2343 = vmatprep.subr.mxu0 0.0
        %2344 = vmatpush1.msra.mxu0 0.0
        %2345 = vmatprep.subr.mxu0 0.0
        %2346 = vmatpush1.msra.mxu0 0.0
        %2347 = vmatprep.subr.mxu0 0.0
        %2348 = vmatpush1.msra.mxu0 0.0
        %2349 = vmatprep.mubr.f32.mxu0 0.0
        %v2350 = vand.u32 %v2189, 4294901760
        %2351 = vmatmul.mubr.f32.gmra.mrb[0].mxu0 %v2350
        %v2352 = vpop.f32.mrb[0].mxu0
        %v2353 = vadd.f32 %v2267, %v2352
        %v2354 = vpop.f32.mrb[0].mxu0
        %2355 = vmatprep.mubr.f32.mxu0 0.0
        %v2356 = vand.u32 %v2192, 4294901760
        %2357 = vmatmul.mubr.f32.gmra.mrb[0].mxu0 %v2356
        %v2358 = vpop.f32.mrb[0].mxu0
        %v2359 = vadd.f32 %v2277, %v2358
        %v2360 = vpop.f32.mrb[0].mxu0
        %2361 = vdwg.mxu0
        %2362 = vmatprep.subr.mxu0 0.0
        %v2363 = vand.u32 %v2187, 4294901760
        %v2364 = vsub.f32 %v2187, %v2363
        %2365 = vmatpush1.msra.mxu0 %v2364
        %2366 = vmatprep.subr.mxu0 0.0
        %2367 = vmatpush1.msra.mxu0 0.0
        %2368 = vmatprep.subr.mxu0 0.0
        %2369 = vmatpush1.msra.mxu0 0.0
        %2370 = vmatprep.subr.mxu0 0.0
        %2371 = vmatpush1.msra.mxu0 0.0
        %2372 = vmatprep.subr.mxu0 0.0
        %2373 = vmatpush1.msra.mxu0 0.0
        %2374 = vmatprep.subr.mxu0 0.0
        %2375 = vmatpush1.msra.mxu0 0.0
        %2376 = vmatprep.subr.mxu0 0.0
        %2377 = vmatpush1.msra.mxu0 0.0
        %2378 = vmatprep.subr.mxu0 0.0
        %2379 = vmatpush1.msra.mxu0 0.0
        %2380 = vmatprep.subr.mxu0 0.0
        %2381 = vmatpush1.msra.mxu0 0.0
        %2382 = vmatprep.subr.mxu0 0.0
        %2383 = vmatpush1.msra.mxu0 0.0
        %2384 = vmatprep.subr.mxu0 0.0
        %2385 = vmatpush1.msra.mxu0 0.0
        %2386 = vmatprep.subr.mxu0 0.0
        %2387 = vmatpush1.msra.mxu0 0.0
        %2388 = vmatprep.subr.mxu0 0.0
        %2389 = vmatpush1.msra.mxu0 0.0
        %2390 = vmatprep.subr.mxu0 0.0
        %2391 = vmatpush1.msra.mxu0 0.0
        %2392 = vmatprep.subr.mxu0 0.0
        %2393 = vmatpush1.msra.mxu0 0.0
        %2394 = vmatprep.subr.mxu0 0.0
        %2395 = vmatpush1.msra.mxu0 0.0
        %2396 = vmatprep.subr.mxu0 0.0
        %2397 = vmatpush1.msra.mxu0 0.0
        %2398 = vmatprep.subr.mxu0 0.0
        %2399 = vmatpush1.msra.mxu0 0.0
        %2400 = vmatprep.subr.mxu0 0.0
        %2401 = vmatpush1.msra.mxu0 0.0
        %2402 = vmatprep.subr.mxu0 0.0
        %2403 = vmatpush1.msra.mxu0 0.0
        %2404 = vmatprep.subr.mxu0 0.0
        %2405 = vmatpush1.msra.mxu0 0.0
        %2406 = vmatprep.subr.mxu0 0.0
        %2407 = vmatpush1.msra.mxu0 0.0
        %2408 = vmatprep.subr.mxu0 0.0
        %2409 = vmatpush1.msra.mxu0 0.0
        %2410 = vmatprep.subr.mxu0 0.0
        %2411 = vmatpush1.msra.mxu0 0.0
        %2412 = vmatprep.subr.mxu0 0.0
        %2413 = vmatpush1.msra.mxu0 0.0
        %2414 = vmatprep.subr.mxu0 0.0
        %2415 = vmatpush1.msra.mxu0 0.0
        %2416 = vmatprep.subr.mxu0 0.0
        %2417 = vmatpush1.msra.mxu0 0.0
        %2418 = vmatprep.subr.mxu0 0.0
        %2419 = vmatpush1.msra.mxu0 0.0
        %2420 = vmatprep.subr.mxu0 0.0
        %2421 = vmatpush1.msra.mxu0 0.0
        %2422 = vmatprep.subr.mxu0 0.0
        %2423 = vmatpush1.msra.mxu0 0.0
        %2424 = vmatprep.subr.mxu0 0.0
        %2425 = vmatpush1.msra.mxu0 0.0
        %2426 = vmatprep.subr.mxu0 0.0
        %2427 = vmatpush1.msra.mxu0 0.0
        %2428 = vmatprep.mubr.f32.mxu0 0.0
        %v2429 = vand.u32 %v2189, 4294901760
        %v2430 = vsub.f32 %v2189, %v2429
        %2431 = vmatmul.mubr.f32.gmra.mrb[0].mxu0 %v2430
        %v2432 = vpop.f32.mrb[0].mxu0
        %v2433 = vadd.f32 %v2353, %v2432
        %v2434 = vpop.f32.mrb[0].mxu0
        %2435 = vmatprep.mubr.f32.mxu0 0.0
        %v2436 = vand.u32 %v2192, 4294901760
        %v2437 = vsub.f32 %v2192, %v2436
        %2438 = vmatmul.mubr.f32.gmra.mrb[0].mxu0 %v2437
        %v2439 = vpop.f32.mrb[0].mxu0
        %v2440 = vadd.f32 %v2359, %v2439
        %v2441 = vpop.f32.mrb[0].mxu0
        %2442 = vdwg.mxu0
        %2443 = vmatprep.subr.mxu0 0.0
        %v2444 = vand.u32 %v2187, 4294901760
        %2445 = vmatpush1.msra.mxu0 %v2444
        %2446 = vmatprep.subr.mxu0 0.0
        %2447 = vmatpush1.msra.mxu0 0.0
        %2448 = vmatprep.subr.mxu0 0.0
        %2449 = vmatpush1.msra.mxu0 0.0
        %2450 = vmatprep.subr.mxu0 0.0
        %2451 = vmatpush1.msra.mxu0 0.0
        %2452 = vmatprep.subr.mxu0 0.0
        %2453 = vmatpush1.msra.mxu0 0.0
        %2454 = vmatprep.subr.mxu0 0.0
        %2455 = vmatpush1.msra.mxu0 0.0
        %2456 = vmatprep.subr.mxu0 0.0
        %2457 = vmatpush1.msra.mxu0 0.0
        %2458 = vmatprep.subr.mxu0 0.0
        %2459 = vmatpush1.msra.mxu0 0.0
        %2460 = vmatprep.subr.mxu0 0.0
        %2461 = vmatpush1.msra.mxu0 0.0
        %2462 = vmatprep.subr.mxu0 0.0
        %2463 = vmatpush1.msra.mxu0 0.0
        %2464 = vmatprep.subr.mxu0 0.0
        %2465 = vmatpush1.msra.mxu0 0.0
        %2466 = vmatprep.subr.mxu0 0.0
        %2467 = vmatpush1.msra.mxu0 0.0
        %2468 = vmatprep.subr.mxu0 0.0
        %2469 = vmatpush1.msra.mxu0 0.0
        %2470 = vmatprep.subr.mxu0 0.0
        %2471 = vmatpush1.msra.mxu0 0.0
        %2472 = vmatprep.subr.mxu0 0.0
        %2473 = vmatpush1.msra.mxu0 0.0
        %2474 = vmatprep.subr.mxu0 0.0
        %2475 = vmatpush1.msra.mxu0 0.0
        %2476 = vmatprep.subr.mxu0 0.0
        %2477 = vmatpush1.msra.mxu0 0.0
        %2478 = vmatprep.subr.mxu0 0.0
        %2479 = vmatpush1.msra.mxu0 0.0
        %2480 = vmatprep.subr.mxu0 0.0
        %2481 = vmatpush1.msra.mxu0 0.0
        %2482 = vmatprep.subr.mxu0 0.0
        %2483 = vmatpush1.msra.mxu0 0.0
        %2484 = vmatprep.subr.mxu0 0.0
        %2485 = vmatpush1.msra.mxu0 0.0
        %2486 = vmatprep.subr.mxu0 0.0
        %2487 = vmatpush1.msra.mxu0 0.0
        %2488 = vmatprep.subr.mxu0 0.0
        %2489 = vmatpush1.msra.mxu0 0.0
        %2490 = vmatprep.subr.mxu0 0.0
        %2491 = vmatpush1.msra.mxu0 0.0
        %2492 = vmatprep.subr.mxu0 0.0
        %2493 = vmatpush1.msra.mxu0 0.0
        %2494 = vmatprep.subr.mxu0 0.0
        %2495 = vmatpush1.msra.mxu0 0.0
        %2496 = vmatprep.subr.mxu0 0.0
        %2497 = vmatpush1.msra.mxu0 0.0
        %2498 = vmatprep.subr.mxu0 0.0
        %2499 = vmatpush1.msra.mxu0 0.0
        %2500 = vmatprep.subr.mxu0 0.0
        %2501 = vmatpush1.msra.mxu0 0.0
        %2502 = vmatprep.subr.mxu0 0.0
        %2503 = vmatpush1.msra.mxu0 0.0
        %2504 = vmatprep.subr.mxu0 0.0
        %2505 = vmatpush1.msra.mxu0 0.0
        %2506 = vmatprep.subr.mxu0 0.0
        %2507 = vmatpush1.msra.mxu0 0.0
        %2508 = vmatprep.mubr.f32.mxu0 0.0
        %v2509 = vand.u32 %v2189, 4294901760
        %v2510 = vsub.f32 %v2189, %v2509
        %v2511 = vand.u32 %v2510, 4294901760
        %2512 = vmatmul.mubr.f32.gmra.mrb[0].mxu0 %v2511
        %v2513 = vpop.f32.mrb[0].mxu0
        %v2514 = vadd.f32 %v2433, %v2513
        %v2515 = vpop.f32.mrb[0].mxu0
        %2516 = vmatprep.mubr.f32.mxu0 0.0
        %v2517 = vand.u32 %v2192, 4294901760
        %v2518 = vsub.f32 %v2192, %v2517
        %v2519 = vand.u32 %v2518, 4294901760
        %2520 = vmatmul.mubr.f32.gmra.mrb[0].mxu0 %v2519
        %v2521 = vpop.f32.mrb[0].mxu0
        %v2522 = vadd.f32 %v2440, %v2521
        %v2523 = vpop.f32.mrb[0].mxu0
        %2524 = vdwg.mxu0
        %2525 = vmatprep.subr.mxu0 0.0
        %v2526 = vand.u32 %v2187, 4294901760
        %v2527 = vsub.f32 %v2187, %v2526
        %v2528 = vand.u32 %v2527, 4294901760
        %2529 = vmatpush1.msra.mxu0 %v2528
        %2530 = vmatprep.subr.mxu0 0.0
        %2531 = vmatpush1.msra.mxu0 0.0
        %2532 = vmatprep.subr.mxu0 0.0
        %2533 = vmatpush1.msra.mxu0 0.0
        %2534 = vmatprep.subr.mxu0 0.0
        %2535 = vmatpush1.msra.mxu0 0.0
        %2536 = vmatprep.subr.mxu0 0.0
        %2537 = vmatpush1.msra.mxu0 0.0
        %2538 = vmatprep.subr.mxu0 0.0
        %2539 = vmatpush1.msra.mxu0 0.0
        %2540 = vmatprep.subr.mxu0 0.0
        %2541 = vmatpush1.msra.mxu0 0.0
        %2542 = vmatprep.subr.mxu0 0.0
        %2543 = vmatpush1.msra.mxu0 0.0
        %2544 = vmatprep.subr.mxu0 0.0
        %2545 = vmatpush1.msra.mxu0 0.0
        %2546 = vmatprep.subr.mxu0 0.0
        %2547 = vmatpush1.msra.mxu0 0.0
        %2548 = vmatprep.subr.mxu0 0.0
        %2549 = vmatpush1.msra.mxu0 0.0
        %2550 = vmatprep.subr.mxu0 0.0
        %2551 = vmatpush1.msra.mxu0 0.0
        %2552 = vmatprep.subr.mxu0 0.0
        %2553 = vmatpush1.msra.mxu0 0.0
        %2554 = vmatprep.subr.mxu0 0.0
        %2555 = vmatpush1.msra.mxu0 0.0
        %2556 = vmatprep.subr.mxu0 0.0
        %2557 = vmatpush1.msra.mxu0 0.0
        %2558 = vmatprep.subr.mxu0 0.0
        %2559 = vmatpush1.msra.mxu0 0.0
        %2560 = vmatprep.subr.mxu0 0.0
        %2561 = vmatpush1.msra.mxu0 0.0
        %2562 = vmatprep.subr.mxu0 0.0
        %2563 = vmatpush1.msra.mxu0 0.0
        %2564 = vmatprep.subr.mxu0 0.0
        %2565 = vmatpush1.msra.mxu0 0.0
        %2566 = vmatprep.subr.mxu0 0.0
        %2567 = vmatpush1.msra.mxu0 0.0
        %2568 = vmatprep.subr.mxu0 0.0
        %2569 = vmatpush1.msra.mxu0 0.0
        %2570 = vmatprep.subr.mxu0 0.0
        %2571 = vmatpush1.msra.mxu0 0.0
        %2572 = vmatprep.subr.mxu0 0.0
        %2573 = vmatpush1.msra.mxu0 0.0
        %2574 = vmatprep.subr.mxu0 0.0
        %2575 = vmatpush1.msra.mxu0 0.0
        %2576 = vmatprep.subr.mxu0 0.0
        %2577 = vmatpush1.msra.mxu0 0.0
        %2578 = vmatprep.subr.mxu0 0.0
        %2579 = vmatpush1.msra.mxu0 0.0
        %2580 = vmatprep.subr.mxu0 0.0
        %2581 = vmatpush1.msra.mxu0 0.0
        %2582 = vmatprep.subr.mxu0 0.0
        %2583 = vmatpush1.msra.mxu0 0.0
        %2584 = vmatprep.subr.mxu0 0.0
        %2585 = vmatpush1.msra.mxu0 0.0
        %2586 = vmatprep.subr.mxu0 0.0
        %2587 = vmatpush1.msra.mxu0 0.0
        %2588 = vmatprep.subr.mxu0 0.0
        %2589 = vmatpush1.msra.mxu0 0.0
        %2590 = vmatprep.subr.mxu0 0.0
        %2591 = vmatpush1.msra.mxu0 0.0
        %2592 = vmatprep.mubr.f32.mxu0 0.0
        %v2593 = vand.u32 %v2189, 4294901760
        %2594 = vmatmul.mubr.f32.gmra.mrb[0].mxu0 %v2593
        %v2595 = vpop.f32.mrb[0].mxu0
        %v2596 = vadd.f32 %v2514, %v2595
        %v2597 = vpop.f32.mrb[0].mxu0
        %2598 = vmatprep.mubr.f32.mxu0 0.0
        %v2599 = vand.u32 %v2192, 4294901760
        %2600 = vmatmul.mubr.f32.gmra.mrb[0].mxu0 %v2599
        %v2601 = vpop.f32.mrb[0].mxu0
        %v2602 = vadd.f32 %v2522, %v2601
        %v2603 = vpop.f32.mrb[0].mxu0
        %2604 = vdwg.mxu0
        %2605 = vmatprep.subr.mxu0 0.0
        %v2606 = vand.u32 %v2187, 4294901760
        %2607 = vmatpush1.msra.mxu0 %v2606
        %2608 = vmatprep.subr.mxu0 0.0
        %2609 = vmatpush1.msra.mxu0 0.0
        %2610 = vmatprep.subr.mxu0 0.0
        %2611 = vmatpush1.msra.mxu0 0.0
        %2612 = vmatprep.subr.mxu0 0.0
        %2613 = vmatpush1.msra.mxu0 0.0
        %2614 = vmatprep.subr.mxu0 0.0
        %2615 = vmatpush1.msra.mxu0 0.0
        %2616 = vmatprep.subr.mxu0 0.0
        %2617 = vmatpush1.msra.mxu0 0.0
        %2618 = vmatprep.subr.mxu0 0.0
        %2619 = vmatpush1.msra.mxu0 0.0
        %2620 = vmatprep.subr.mxu0 0.0
        %2621 = vmatpush1.msra.mxu0 0.0
        %2622 = vmatprep.subr.mxu0 0.0
        %2623 = vmatpush1.msra.mxu0 0.0
        %2624 = vmatprep.subr.mxu0 0.0
        %2625 = vmatpush1.msra.mxu0 0.0
        %2626 = vmatprep.subr.mxu0 0.0
        %2627 = vmatpush1.msra.mxu0 0.0
        %2628 = vmatprep.subr.mxu0 0.0
        %2629 = vmatpush1.msra.mxu0 0.0
        %2630 = vmatprep.subr.mxu0 0.0
        %2631 = vmatpush1.msra.mxu0 0.0
        %2632 = vmatprep.subr.mxu0 0.0
        %2633 = vmatpush1.msra.mxu0 0.0
        %2634 = vmatprep.subr.mxu0 0.0
        %2635 = vmatpush1.msra.mxu0 0.0
        %2636 = vmatprep.subr.mxu0 0.0
        %2637 = vmatpush1.msra.mxu0 0.0
        %2638 = vmatprep.subr.mxu0 0.0
        %2639 = vmatpush1.msra.mxu0 0.0
        %2640 = vmatprep.subr.mxu0 0.0
        %2641 = vmatpush1.msra.mxu0 0.0
        %2642 = vmatprep.subr.mxu0 0.0
        %2643 = vmatpush1.msra.mxu0 0.0
        %2644 = vmatprep.subr.mxu0 0.0
        %2645 = vmatpush1.msra.mxu0 0.0
        %2646 = vmatprep.subr.mxu0 0.0
        %2647 = vmatpush1.msra.mxu0 0.0
        %2648 = vmatprep.subr.mxu0 0.0
        %2649 = vmatpush1.msra.mxu0 0.0
        %2650 = vmatprep.subr.mxu0 0.0
        %2651 = vmatpush1.msra.mxu0 0.0
        %2652 = vmatprep.subr.mxu0 0.0
        %2653 = vmatpush1.msra.mxu0 0.0
        %2654 = vmatprep.subr.mxu0 0.0
        %2655 = vmatpush1.msra.mxu0 0.0
        %2656 = vmatprep.subr.mxu0 0.0
        %2657 = vmatpush1.msra.mxu0 0.0
        %2658 = vmatprep.subr.mxu0 0.0
        %2659 = vmatpush1.msra.mxu0 0.0
        %2660 = vmatprep.subr.mxu0 0.0
        %2661 = vmatpush1.msra.mxu0 0.0
        %2662 = vmatprep.subr.mxu0 0.0
        %2663 = vmatpush1.msra.mxu0 0.0
        %2664 = vmatprep.subr.mxu0 0.0
        %2665 = vmatpush1.msra.mxu0 0.0
        %2666 = vmatprep.subr.mxu0 0.0
        %2667 = vmatpush1.msra.mxu0 0.0
        %2668 = vmatprep.subr.mxu0 0.0
        %2669 = vmatpush1.msra.mxu0 0.0
        %2670 = vmatprep.mubr.f32.mxu0 0.0
        %v2671 = vand.u32 %v2189, 4294901760
        %2672 = vmatmul.mubr.f32.gmra.mrb[0].mxu0 %v2671
        %v2673 = vpop.f32.mrb[0].mxu0
        %v2674 = vadd.f32 %v2596, %v2673
        %v2675 = vpop.f32.mrb[0].mxu0
        %2676 = vmatprep.mubr.f32.mxu0 0.0
        %v2677 = vand.u32 %v2192, 4294901760
        %2678 = vmatmul.mubr.f32.gmra.mrb[0].mxu0 %v2677
        %v2679 = vpop.f32.mrb[0].mxu0
        %v2680 = vadd.f32 %v2602, %v2679
        %v2681 = vpop.f32.mrb[0].mxu0
        %2682 = vdwg.mxu0
        %2685 = vrot.lane.b32.xlu0 %v2674, 124
        %v2686 = vpop.permute.xlu0 %2685
        %2687 = vrot.lane.b32.xlu0 %v2680, 124
        %v2688 = vpop.permute.xlu0 %2687
        %v2691 = vmax.f32 %v2674, %v2686
        %v2692 = vmax.f32 %v2680, %v2688
        %vm2693 = vcmask 31744
        %2694 = vst.msk [vmem:[#allocation2] sm:$0xff] %vm2693, %v2691
        %2695 = vst.msk [vmem:[#allocation2 + $0x8] sm:$0xff] %vm2693, %v2692
        %v2696 = vld [vmem:[%s364] sm:$0xff]
        %v2697 = vld [vmem:[%s364 + $0x8] sm:$0xff]
        %v2698 = vsub.f32 %v2696, %v2691
        %v2699 = vsub.f32 %v2697, %v2692
        %v2700 = vmul.f32 %v2698, %v2698
        %v2701 = vmul.f32 %v2699, %v2699
        %v2702 = vsel %vm2693, %v2700, 0.0
        %v2703 = vsel %vm2693, %v2701, 0.0
        %v2704 = vadd.f32 %v2702, %v2703
        %2705 = vadd.xlane.f32.xlu0 %v2704
        %v2706 = vpop.xlane.xlu0 %2705
        %v2707 = vrot.slane %v2706, 4
        %v2708 = vadd.f32 %v2706, %v2707
        %v2709 = vrot.slane %v2708, 2
        %v2710 = vadd.f32 %v2708, %v2709
        %v2711 = vrot.slane %v2710, 1
        %v2712 = vadd.f32 %v2710, %v2711
        %s2713 = vtos %v2712
        %s2714 = smul.f32 %s2713, 0.00390625
        %s2715 = sadd.f32 %s2170, %s2714
        %v2716 = vld [vmem:[#allocation2] ss:$2 sm:$0xff]
        %v2717 = vld [vmem:[%s1487] ss:$2 sm:$0xff]
        %v2718 = vmax.f32 %v2716, %v2717
        %vm2719 = vcmp.lt.s32.totalorder %v536, 2
        %vm2720 = vmand %vm2719, %vm539
        %vm2721 = vcmp.ge.s32.totalorder %v536, 2
        %v2722 = vsub.s32 %v536, 2
        %v2723 = vmul.u32 %v2722, 2
        %v2724 = vadd.s32 %v2723, 1
        %vm2725 = vcmp.eq.s32.totalorder %v531, %v2724
        %vm2726 = vmand %vm2721, %vm2725
        %vm2727 = vmor %vm2720, %vm2726
        %v2728 = vsel %vm2727, 1, 0
        %v2729 = vcvt.s32.f32 %v2728
        %v2731 = vsel %vm2693, %v2718, 0
        %vm2733 = vcmask 1043456
        %v2735 = vsel %vm2733, %v2729, 0
        %2737 = vmatprep.subr.mxu0 0.0
        %v2738 = vand.u32 %v2735, 4294901760
        %2739 = vmatpush1.msra.mxu0 %v2738
        %2740 = vmatprep.subr.mxu0 0.0
        %2741 = vmatpush1.msra.mxu0 0.0
        %2742 = vmatprep.subr.mxu0 0.0
        %2743 = vmatpush1.msra.mxu0 0.0
        %2744 = vmatprep.subr.mxu0 0.0
        %2745 = vmatpush1.msra.mxu0 0.0
        %2746 = vmatprep.subr.mxu0 0.0
        %2747 = vmatpush1.msra.mxu0 0.0
        %2748 = vmatprep.subr.mxu0 0.0
        %2749 = vmatpush1.msra.mxu0 0.0
        %2750 = vmatprep.subr.mxu0 0.0
        %2751 = vmatpush1.msra.mxu0 0.0
        %2752 = vmatprep.subr.mxu0 0.0
        %2753 = vmatpush1.msra.mxu0 0.0
        %2754 = vmatprep.subr.mxu0 0.0
        %2755 = vmatpush1.msra.mxu0 0.0
        %2756 = vmatprep.subr.mxu0 0.0
        %2757 = vmatpush1.msra.mxu0 0.0
        %2758 = vmatprep.subr.mxu0 0.0
        %2759 = vmatpush1.msra.mxu0 0.0
        %2760 = vmatprep.subr.mxu0 0.0
        %2761 = vmatpush1.msra.mxu0 0.0
        %2762 = vmatprep.subr.mxu0 0.0
        %2763 = vmatpush1.msra.mxu0 0.0
        %2764 = vmatprep.subr.mxu0 0.0
        %2765 = vmatpush1.msra.mxu0 0.0
        %2766 = vmatprep.subr.mxu0 0.0
        %2767 = vmatpush1.msra.mxu0 0.0
        %2768 = vmatprep.subr.mxu0 0.0
        %2769 = vmatpush1.msra.mxu0 0.0
        %2770 = vmatprep.subr.mxu0 0.0
        %2771 = vmatpush1.msra.mxu0 0.0
        %2772 = vmatprep.subr.mxu0 0.0
        %2773 = vmatpush1.msra.mxu0 0.0
        %2774 = vmatprep.subr.mxu0 0.0
        %2775 = vmatpush1.msra.mxu0 0.0
        %2776 = vmatprep.subr.mxu0 0.0
        %2777 = vmatpush1.msra.mxu0 0.0
        %2778 = vmatprep.subr.mxu0 0.0
        %2779 = vmatpush1.msra.mxu0 0.0
        %2780 = vmatprep.subr.mxu0 0.0
        %2781 = vmatpush1.msra.mxu0 0.0
        %2782 = vmatprep.subr.mxu0 0.0
        %2783 = vmatpush1.msra.mxu0 0.0
        %2784 = vmatprep.subr.mxu0 0.0
        %2785 = vmatpush1.msra.mxu0 0.0
        %2786 = vmatprep.subr.mxu0 0.0
        %2787 = vmatpush1.msra.mxu0 0.0
        %2788 = vmatprep.subr.mxu0 0.0
        %2789 = vmatpush1.msra.mxu0 0.0
        %2790 = vmatprep.subr.mxu0 0.0
        %2791 = vmatpush1.msra.mxu0 0.0
        %2792 = vmatprep.subr.mxu0 0.0
        %2793 = vmatpush1.msra.mxu0 0.0
        %2794 = vmatprep.subr.mxu0 0.0
        %2795 = vmatpush1.msra.mxu0 0.0
        %2796 = vmatprep.subr.mxu0 0.0
        %2797 = vmatpush1.msra.mxu0 0.0
        %2798 = vmatprep.subr.mxu0 0.0
        %2799 = vmatpush1.msra.mxu0 0.0
        %2800 = vmatprep.subr.mxu0 0.0
        %2801 = vmatpush1.msra.mxu0 0.0
        %2802 = vmatprep.mubr.f32.mxu0 0.0
        %v2803 = vand.u32 %v2731, 4294901760
        %v2804 = vsub.f32 %v2731, %v2803
        %v2805 = vand.u32 %v2804, 4294901760
        %v2806 = vsub.f32 %v2804, %v2805
        %v2807 = vand.u32 %v2806, 4294901760
        %2808 = vmatmul.mubr.f32.gmra.mrb[0].mxu0 %v2807
        %v2809 = vpop.f32.mrb[0].mxu0
        %v2810 = vadd.f32 0.0, %v2809
        %v2811 = vpop.f32.mrb[0].mxu0
        %2812 = vdwg.mxu0
        %2813 = vmatprep.subr.mxu0 0.0
        %v2814 = vand.u32 %v2735, 4294901760
        %v2815 = vsub.f32 %v2735, %v2814
        %v2816 = vand.u32 %v2815, 4294901760
        %v2817 = vsub.f32 %v2815, %v2816
        %v2818 = vand.u32 %v2817, 4294901760
        %2819 = vmatpush1.msra.mxu0 %v2818
        %2820 = vmatprep.subr.mxu0 0.0
        %2821 = vmatpush1.msra.mxu0 0.0
        %2822 = vmatprep.subr.mxu0 0.0
        %2823 = vmatpush1.msra.mxu0 0.0
        %2824 = vmatprep.subr.mxu0 0.0
        %2825 = vmatpush1.msra.mxu0 0.0
        %2826 = vmatprep.subr.mxu0 0.0
        %2827 = vmatpush1.msra.mxu0 0.0
        %2828 = vmatprep.subr.mxu0 0.0
        %2829 = vmatpush1.msra.mxu0 0.0
        %2830 = vmatprep.subr.mxu0 0.0
        %2831 = vmatpush1.msra.mxu0 0.0
        %2832 = vmatprep.subr.mxu0 0.0
        %2833 = vmatpush1.msra.mxu0 0.0
        %2834 = vmatprep.subr.mxu0 0.0
        %2835 = vmatpush1.msra.mxu0 0.0
        %2836 = vmatprep.subr.mxu0 0.0
        %2837 = vmatpush1.msra.mxu0 0.0
        %2838 = vmatprep.subr.mxu0 0.0
        %2839 = vmatpush1.msra.mxu0 0.0
        %2840 = vmatprep.subr.mxu0 0.0
        %2841 = vmatpush1.msra.mxu0 0.0
        %2842 = vmatprep.subr.mxu0 0.0
        %2843 = vmatpush1.msra.mxu0 0.0
        %2844 = vmatprep.subr.mxu0 0.0
        %2845 = vmatpush1.msra.mxu0 0.0
        %2846 = vmatprep.subr.mxu0 0.0
        %2847 = vmatpush1.msra.mxu0 0.0
        %2848 = vmatprep.subr.mxu0 0.0
        %2849 = vmatpush1.msra.mxu0 0.0
        %2850 = vmatprep.subr.mxu0 0.0
        %2851 = vmatpush1.msra.mxu0 0.0
        %2852 = vmatprep.subr.mxu0 0.0
        %2853 = vmatpush1.msra.mxu0 0.0
        %2854 = vmatprep.subr.mxu0 0.0
        %2855 = vmatpush1.msra.mxu0 0.0
        %2856 = vmatprep.subr.mxu0 0.0
        %2857 = vmatpush1.msra.mxu0 0.0
        %2858 = vmatprep.subr.mxu0 0.0
        %2859 = vmatpush1.msra.mxu0 0.0
        %2860 = vmatprep.subr.mxu0 0.0
        %2861 = vmatpush1.msra.mxu0 0.0
        %2862 = vmatprep.subr.mxu0 0.0
        %2863 = vmatpush1.msra.mxu0 0.0
        %2864 = vmatprep.subr.mxu0 0.0
        %2865 = vmatpush1.msra.mxu0 0.0
        %2866 = vmatprep.subr.mxu0 0.0
        %2867 = vmatpush1.msra.mxu0 0.0
        %2868 = vmatprep.subr.mxu0 0.0
        %2869 = vmatpush1.msra.mxu0 0.0
        %2870 = vmatprep.subr.mxu0 0.0
        %2871 = vmatpush1.msra.mxu0 0.0
        %2872 = vmatprep.subr.mxu0 0.0
        %2873 = vmatpush1.msra.mxu0 0.0
        %2874 = vmatprep.subr.mxu0 0.0
        %2875 = vmatpush1.msra.mxu0 0.0
        %2876 = vmatprep.subr.mxu0 0.0
        %2877 = vmatpush1.msra.mxu0 0.0
        %2878 = vmatprep.subr.mxu0 0.0
        %2879 = vmatpush1.msra.mxu0 0.0
        %2880 = vmatprep.subr.mxu0 0.0
        %2881 = vmatpush1.msra.mxu0 0.0
        %2882 = vmatprep.mubr.f32.mxu0 0.0
        %v2883 = vand.u32 %v2731, 4294901760
        %2884 = vmatmul.mubr.f32.gmra.mrb[0].mxu0 %v2883
        %v2885 = vpop.f32.mrb[0].mxu0
        %v2886 = vadd.f32 %v2810, %v2885
        %v2887 = vpop.f32.mrb[0].mxu0
        %2888 = vdwg.mxu0
        %2889 = vmatprep.subr.mxu0 0.0
        %v2890 = vand.u32 %v2735, 4294901760
        %v2891 = vsub.f32 %v2735, %v2890
        %2892 = vmatpush1.msra.mxu0 %v2891
        %2893 = vmatprep.subr.mxu0 0.0
        %2894 = vmatpush1.msra.mxu0 0.0
        %2895 = vmatprep.subr.mxu0 0.0
        %2896 = vmatpush1.msra.mxu0 0.0
        %2897 = vmatprep.subr.mxu0 0.0
        %2898 = vmatpush1.msra.mxu0 0.0
        %2899 = vmatprep.subr.mxu0 0.0
        %2900 = vmatpush1.msra.mxu0 0.0
        %2901 = vmatprep.subr.mxu0 0.0
        %2902 = vmatpush1.msra.mxu0 0.0
        %2903 = vmatprep.subr.mxu0 0.0
        %2904 = vmatpush1.msra.mxu0 0.0
        %2905 = vmatprep.subr.mxu0 0.0
        %2906 = vmatpush1.msra.mxu0 0.0
        %2907 = vmatprep.subr.mxu0 0.0
        %2908 = vmatpush1.msra.mxu0 0.0
        %2909 = vmatprep.subr.mxu0 0.0
        %2910 = vmatpush1.msra.mxu0 0.0
        %2911 = vmatprep.subr.mxu0 0.0
        %2912 = vmatpush1.msra.mxu0 0.0
        %2913 = vmatprep.subr.mxu0 0.0
        %2914 = vmatpush1.msra.mxu0 0.0
        %2915 = vmatprep.subr.mxu0 0.0
        %2916 = vmatpush1.msra.mxu0 0.0
        %2917 = vmatprep.subr.mxu0 0.0
        %2918 = vmatpush1.msra.mxu0 0.0
        %2919 = vmatprep.subr.mxu0 0.0
        %2920 = vmatpush1.msra.mxu0 0.0
        %2921 = vmatprep.subr.mxu0 0.0
        %2922 = vmatpush1.msra.mxu0 0.0
        %2923 = vmatprep.subr.mxu0 0.0
        %2924 = vmatpush1.msra.mxu0 0.0
        %2925 = vmatprep.subr.mxu0 0.0
        %2926 = vmatpush1.msra.mxu0 0.0
        %2927 = vmatprep.subr.mxu0 0.0
        %2928 = vmatpush1.msra.mxu0 0.0
        %2929 = vmatprep.subr.mxu0 0.0
        %2930 = vmatpush1.msra.mxu0 0.0
        %2931 = vmatprep.subr.mxu0 0.0
        %2932 = vmatpush1.msra.mxu0 0.0
        %2933 = vmatprep.subr.mxu0 0.0
        %2934 = vmatpush1.msra.mxu0 0.0
        %2935 = vmatprep.subr.mxu0 0.0
        %2936 = vmatpush1.msra.mxu0 0.0
        %2937 = vmatprep.subr.mxu0 0.0
        %2938 = vmatpush1.msra.mxu0 0.0
        %2939 = vmatprep.subr.mxu0 0.0
        %2940 = vmatpush1.msra.mxu0 0.0
        %2941 = vmatprep.subr.mxu0 0.0
        %2942 = vmatpush1.msra.mxu0 0.0
        %2943 = vmatprep.subr.mxu0 0.0
        %2944 = vmatpush1.msra.mxu0 0.0
        %2945 = vmatprep.subr.mxu0 0.0
        %2946 = vmatpush1.msra.mxu0 0.0
        %2947 = vmatprep.subr.mxu0 0.0
        %2948 = vmatpush1.msra.mxu0 0.0
        %2949 = vmatprep.subr.mxu0 0.0
        %2950 = vmatpush1.msra.mxu0 0.0
        %2951 = vmatprep.subr.mxu0 0.0
        %2952 = vmatpush1.msra.mxu0 0.0
        %2953 = vmatprep.subr.mxu0 0.0
        %2954 = vmatpush1.msra.mxu0 0.0
        %2955 = vmatprep.mubr.f32.mxu0 0.0
        %v2956 = vand.u32 %v2731, 4294901760
        %v2957 = vsub.f32 %v2731, %v2956
        %2958 = vmatmul.mubr.f32.gmra.mrb[0].mxu0 %v2957
        %v2959 = vpop.f32.mrb[0].mxu0
        %v2960 = vadd.f32 %v2886, %v2959
        %v2961 = vpop.f32.mrb[0].mxu0
        %2962 = vdwg.mxu0
        %2963 = vmatprep.subr.mxu0 0.0
        %v2964 = vand.u32 %v2735, 4294901760
        %2965 = vmatpush1.msra.mxu0 %v2964
        %2966 = vmatprep.subr.mxu0 0.0
        %2967 = vmatpush1.msra.mxu0 0.0
        %2968 = vmatprep.subr.mxu0 0.0
        %2969 = vmatpush1.msra.mxu0 0.0
        %2970 = vmatprep.subr.mxu0 0.0
        %2971 = vmatpush1.msra.mxu0 0.0
        %2972 = vmatprep.subr.mxu0 0.0
        %2973 = vmatpush1.msra.mxu0 0.0
        %2974 = vmatprep.subr.mxu0 0.0
        %2975 = vmatpush1.msra.mxu0 0.0
        %2976 = vmatprep.subr.mxu0 0.0
        %2977 = vmatpush1.msra.mxu0 0.0
        %2978 = vmatprep.subr.mxu0 0.0
        %2979 = vmatpush1.msra.mxu0 0.0
        %2980 = vmatprep.subr.mxu0 0.0
        %2981 = vmatpush1.msra.mxu0 0.0
        %2982 = vmatprep.subr.mxu0 0.0
        %2983 = vmatpush1.msra.mxu0 0.0
        %2984 = vmatprep.subr.mxu0 0.0
        %2985 = vmatpush1.msra.mxu0 0.0
        %2986 = vmatprep.subr.mxu0 0.0
        %2987 = vmatpush1.msra.mxu0 0.0
        %2988 = vmatprep.subr.mxu0 0.0
        %2989 = vmatpush1.msra.mxu0 0.0
        %2990 = vmatprep.subr.mxu0 0.0
        %2991 = vmatpush1.msra.mxu0 0.0
        %2992 = vmatprep.subr.mxu0 0.0
        %2993 = vmatpush1.msra.mxu0 0.0
        %2994 = vmatprep.subr.mxu0 0.0
        %2995 = vmatpush1.msra.mxu0 0.0
        %2996 = vmatprep.subr.mxu0 0.0
        %2997 = vmatpush1.msra.mxu0 0.0
        %2998 = vmatprep.subr.mxu0 0.0
        %2999 = vmatpush1.msra.mxu0 0.0
        %3000 = vmatprep.subr.mxu0 0.0
        %3001 = vmatpush1.msra.mxu0 0.0
        %3002 = vmatprep.subr.mxu0 0.0
        %3003 = vmatpush1.msra.mxu0 0.0
        %3004 = vmatprep.subr.mxu0 0.0
        %3005 = vmatpush1.msra.mxu0 0.0
        %3006 = vmatprep.subr.mxu0 0.0
        %3007 = vmatpush1.msra.mxu0 0.0
        %3008 = vmatprep.subr.mxu0 0.0
        %3009 = vmatpush1.msra.mxu0 0.0
        %3010 = vmatprep.subr.mxu0 0.0
        %3011 = vmatpush1.msra.mxu0 0.0
        %3012 = vmatprep.subr.mxu0 0.0
        %3013 = vmatpush1.msra.mxu0 0.0
        %3014 = vmatprep.subr.mxu0 0.0
        %3015 = vmatpush1.msra.mxu0 0.0
        %3016 = vmatprep.subr.mxu0 0.0
        %3017 = vmatpush1.msra.mxu0 0.0
        %3018 = vmatprep.subr.mxu0 0.0
        %3019 = vmatpush1.msra.mxu0 0.0
        %3020 = vmatprep.subr.mxu0 0.0
        %3021 = vmatpush1.msra.mxu0 0.0
        %3022 = vmatprep.subr.mxu0 0.0
        %3023 = vmatpush1.msra.mxu0 0.0
        %3024 = vmatprep.subr.mxu0 0.0
        %3025 = vmatpush1.msra.mxu0 0.0
        %3026 = vmatprep.subr.mxu0 0.0
        %3027 = vmatpush1.msra.mxu0 0.0
        %3028 = vmatprep.mubr.f32.mxu0 0.0
        %v3029 = vand.u32 %v2731, 4294901760
        %v3030 = vsub.f32 %v2731, %v3029
        %v3031 = vand.u32 %v3030, 4294901760
        %3032 = vmatmul.mubr.f32.gmra.mrb[0].mxu0 %v3031
        %v3033 = vpop.f32.mrb[0].mxu0
        %v3034 = vadd.f32 %v2960, %v3033
        %v3035 = vpop.f32.mrb[0].mxu0
        %3036 = vdwg.mxu0
        %3037 = vmatprep.subr.mxu0 0.0
        %v3038 = vand.u32 %v2735, 4294901760
        %v3039 = vsub.f32 %v2735, %v3038
        %v3040 = vand.u32 %v3039, 4294901760
        %3041 = vmatpush1.msra.mxu0 %v3040
        %3042 = vmatprep.subr.mxu0 0.0
        %3043 = vmatpush1.msra.mxu0 0.0
        %3044 = vmatprep.subr.mxu0 0.0
        %3045 = vmatpush1.msra.mxu0 0.0
        %3046 = vmatprep.subr.mxu0 0.0
        %3047 = vmatpush1.msra.mxu0 0.0
        %3048 = vmatprep.subr.mxu0 0.0
        %3049 = vmatpush1.msra.mxu0 0.0
        %3050 = vmatprep.subr.mxu0 0.0
        %3051 = vmatpush1.msra.mxu0 0.0
        %3052 = vmatprep.subr.mxu0 0.0
        %3053 = vmatpush1.msra.mxu0 0.0
        %3054 = vmatprep.subr.mxu0 0.0
        %3055 = vmatpush1.msra.mxu0 0.0
        %3056 = vmatprep.subr.mxu0 0.0
        %3057 = vmatpush1.msra.mxu0 0.0
        %3058 = vmatprep.subr.mxu0 0.0
        %3059 = vmatpush1.msra.mxu0 0.0
        %3060 = vmatprep.subr.mxu0 0.0
        %3061 = vmatpush1.msra.mxu0 0.0
        %3062 = vmatprep.subr.mxu0 0.0
        %3063 = vmatpush1.msra.mxu0 0.0
        %3064 = vmatprep.subr.mxu0 0.0
        %3065 = vmatpush1.msra.mxu0 0.0
        %3066 = vmatprep.subr.mxu0 0.0
        %3067 = vmatpush1.msra.mxu0 0.0
        %3068 = vmatprep.subr.mxu0 0.0
        %3069 = vmatpush1.msra.mxu0 0.0
        %3070 = vmatprep.subr.mxu0 0.0
        %3071 = vmatpush1.msra.mxu0 0.0
        %3072 = vmatprep.subr.mxu0 0.0
        %3073 = vmatpush1.msra.mxu0 0.0
        %3074 = vmatprep.subr.mxu0 0.0
        %3075 = vmatpush1.msra.mxu0 0.0
        %3076 = vmatprep.subr.mxu0 0.0
        %3077 = vmatpush1.msra.mxu0 0.0
        %3078 = vmatprep.subr.mxu0 0.0
        %3079 = vmatpush1.msra.mxu0 0.0
        %3080 = vmatprep.subr.mxu0 0.0
        %3081 = vmatpush1.msra.mxu0 0.0
        %3082 = vmatprep.subr.mxu0 0.0
        %3083 = vmatpush1.msra.mxu0 0.0
        %3084 = vmatprep.subr.mxu0 0.0
        %3085 = vmatpush1.msra.mxu0 0.0
        %3086 = vmatprep.subr.mxu0 0.0
        %3087 = vmatpush1.msra.mxu0 0.0
        %3088 = vmatprep.subr.mxu0 0.0
        %3089 = vmatpush1.msra.mxu0 0.0
        %3090 = vmatprep.subr.mxu0 0.0
        %3091 = vmatpush1.msra.mxu0 0.0
        %3092 = vmatprep.subr.mxu0 0.0
        %3093 = vmatpush1.msra.mxu0 0.0
        %3094 = vmatprep.subr.mxu0 0.0
        %3095 = vmatpush1.msra.mxu0 0.0
        %3096 = vmatprep.subr.mxu0 0.0
        %3097 = vmatpush1.msra.mxu0 0.0
        %3098 = vmatprep.subr.mxu0 0.0
        %3099 = vmatpush1.msra.mxu0 0.0
        %3100 = vmatprep.subr.mxu0 0.0
        %3101 = vmatpush1.msra.mxu0 0.0
        %3102 = vmatprep.subr.mxu0 0.0
        %3103 = vmatpush1.msra.mxu0 0.0
        %3104 = vmatprep.mubr.f32.mxu0 0.0
        %v3105 = vand.u32 %v2731, 4294901760
        %3106 = vmatmul.mubr.f32.gmra.mrb[0].mxu0 %v3105
        %v3107 = vpop.f32.mrb[0].mxu0
        %v3108 = vadd.f32 %v3034, %v3107
        %v3109 = vpop.f32.mrb[0].mxu0
        %3110 = vdwg.mxu0
        %3111 = vmatprep.subr.mxu0 0.0
        %v3112 = vand.u32 %v2735, 4294901760
        %3113 = vmatpush1.msra.mxu0 %v3112
        %3114 = vmatprep.subr.mxu0 0.0
        %3115 = vmatpush1.msra.mxu0 0.0
        %3116 = vmatprep.subr.mxu0 0.0
        %3117 = vmatpush1.msra.mxu0 0.0
        %3118 = vmatprep.subr.mxu0 0.0
        %3119 = vmatpush1.msra.mxu0 0.0
        %3120 = vmatprep.subr.mxu0 0.0
        %3121 = vmatpush1.msra.mxu0 0.0
        %3122 = vmatprep.subr.mxu0 0.0
        %3123 = vmatpush1.msra.mxu0 0.0
        %3124 = vmatprep.subr.mxu0 0.0
        %3125 = vmatpush1.msra.mxu0 0.0
        %3126 = vmatprep.subr.mxu0 0.0
        %3127 = vmatpush1.msra.mxu0 0.0
        %3128 = vmatprep.subr.mxu0 0.0
        %3129 = vmatpush1.msra.mxu0 0.0
        %3130 = vmatprep.subr.mxu0 0.0
        %3131 = vmatpush1.msra.mxu0 0.0
        %3132 = vmatprep.subr.mxu0 0.0
        %3133 = vmatpush1.msra.mxu0 0.0
        %3134 = vmatprep.subr.mxu0 0.0
        %3135 = vmatpush1.msra.mxu0 0.0
        %3136 = vmatprep.subr.mxu0 0.0
        %3137 = vmatpush1.msra.mxu0 0.0
        %3138 = vmatprep.subr.mxu0 0.0
        %3139 = vmatpush1.msra.mxu0 0.0
        %3140 = vmatprep.subr.mxu0 0.0
        %3141 = vmatpush1.msra.mxu0 0.0
        %3142 = vmatprep.subr.mxu0 0.0
        %3143 = vmatpush1.msra.mxu0 0.0
        %3144 = vmatprep.subr.mxu0 0.0
        %3145 = vmatpush1.msra.mxu0 0.0
        %3146 = vmatprep.subr.mxu0 0.0
        %3147 = vmatpush1.msra.mxu0 0.0
        %3148 = vmatprep.subr.mxu0 0.0
        %3149 = vmatpush1.msra.mxu0 0.0
        %3150 = vmatprep.subr.mxu0 0.0
        %3151 = vmatpush1.msra.mxu0 0.0
        %3152 = vmatprep.subr.mxu0 0.0
        %3153 = vmatpush1.msra.mxu0 0.0
        %3154 = vmatprep.subr.mxu0 0.0
        %3155 = vmatpush1.msra.mxu0 0.0
        %3156 = vmatprep.subr.mxu0 0.0
        %3157 = vmatpush1.msra.mxu0 0.0
        %3158 = vmatprep.subr.mxu0 0.0
        %3159 = vmatpush1.msra.mxu0 0.0
        %3160 = vmatprep.subr.mxu0 0.0
        %3161 = vmatpush1.msra.mxu0 0.0
        %3162 = vmatprep.subr.mxu0 0.0
        %3163 = vmatpush1.msra.mxu0 0.0
        %3164 = vmatprep.subr.mxu0 0.0
        %3165 = vmatpush1.msra.mxu0 0.0
        %3166 = vmatprep.subr.mxu0 0.0
        %3167 = vmatpush1.msra.mxu0 0.0
        %3168 = vmatprep.subr.mxu0 0.0
        %3169 = vmatpush1.msra.mxu0 0.0
        %3170 = vmatprep.subr.mxu0 0.0
        %3171 = vmatpush1.msra.mxu0 0.0
        %3172 = vmatprep.subr.mxu0 0.0
        %3173 = vmatpush1.msra.mxu0 0.0
        %3174 = vmatprep.subr.mxu0 0.0
        %3175 = vmatpush1.msra.mxu0 0.0
        %3176 = vmatprep.mubr.f32.mxu0 0.0
        %v3177 = vand.u32 %v2731, 4294901760
        %3178 = vmatmul.mubr.f32.gmra.mrb[0].mxu0 %v3177
        %v3179 = vpop.f32.mrb[0].mxu0
        %v3180 = vadd.f32 %v3108, %v3179
        %v3181 = vpop.f32.mrb[0].mxu0
        %3182 = vdwg.mxu0
        %3184 = vrot.lane.b32.xlu0 %v3180, 126
        %v3185 = vpop.permute.xlu0 %3184
        %v3187 = vmax.f32 %v3180, %v3185
        %vm3188 = vcmask 15360
        %3189 = vst.msk [vmem:[#allocation2] sm:$0xff] %vm3188, %v3187
        %v3190 = vld [vmem:[%s359] sm:$0xff]
        %v3191 = vsub.f32 %v3190, %v3187
        %v3192 = vmul.f32 %v3191, %v3191
        %v3193 = vsel %vm3188, %v3192, 0.0
        %3194 = vadd.xlane.f32.xlu0 %v3193
        %v3195 = vpop.xlane.xlu0 %3194
        %v3196 = vrot.slane %v3195, 4
        %v3197 = vadd.f32 %v3195, %v3196
        %v3198 = vrot.slane %v3197, 2
        %v3199 = vadd.f32 %v3197, %v3198
        %v3200 = vrot.slane %v3199, 1
        %v3201 = vadd.f32 %v3199, %v3200
        %s3202 = vtos %v3201
        %s3203 = smul.f32 %s3202, 0.010416667
        %s3204 = sadd.f32 %s2715, %s3203
        %v3205 = vld [vmem:[#allocation2] ss:$2 sm:$0xf]
        %v3206 = vld [vmem:[%s1487] ss:$2 sm:$0xf]
        %v3207 = vmax.f32 %v3205, %v3206
        %vm3208 = vcmask 11264
        %v3209 = vsel %vm3208, %v3207, -inf
        %3210 = vmax.xlane.f32.xlu0 %v3209
        %v3211 = vpop.xlane.xlu0 %3210
        %s3212 = smul.u32 %s21, 4
        %s3213 = scalar_lea.vmem %s1, %s3212
        %v3214 = vld [vmem:[%s3213] sm:$0xf]
        %v3215 = vsub.f32 %v3214, %v3211
        %v3216 = vmul.f32 %v3215, %v3215
        %vm3217 = vcmask 3072
        %v3218 = vsel %vm3217, %v3216, 0.0
        %3219 = vadd.xlane.f32.xlu0 %v3218
        %v3220 = vpop.xlane.xlu0 %3219
        %v3221 = vrot.slane %v3220, 4
        %v3222 = vadd.f32 %v3220, %v3221
        %v3223 = vrot.slane %v3222, 2
        %v3224 = vadd.f32 %v3222, %v3223
        %v3225 = vrot.slane %v3224, 1
        %v3226 = vadd.f32 %v3224, %v3225
        %s3227 = vtos %v3226
        %s3228 = smul.f32 %s3227, 0.020833334
        %s3229 = sadd.f32 %s3204, %s3228
        %vm3230 = vcmp.eq.s32.totalorder %v531, 0
        %vm3231 = vcmp.eq.s32.totalorder %v536, 0
        %vm3232 = vmand %vm3230, %vm3231
        %v3233 = vstv %s3229
        %v3234 = vsel %vm3232, %v3233, 0.0
        %3235 = vst [vmem:[%s349] sm:$0xff] %v3234
        %s3236 = sand.u32 %s206, 1
        %s3237 = scalar_lea.sflag [#allocation4], %s3236
        %s3238 = sand.u32 %s206, 1
        %s3239 = smul.addr %s3238, 8
        %s3240 = scalar_lea.vmem [#allocation3], %s3239
        // Predicated region
        $region49: #{tpu_custom_call.1} parent=47 // pred_check
          %p3241 = pneg %p216
        $region50: #{tpu_custom_call.1} parent=47 // pred_check_branch
          %3243 = sbr.rel (%p3241) target = $region52
        $region51: #{tpu_custom_call.1} parent=47 // pred_region
          %s3245 = ssub.s32 128, 128
          %3246 = vsyncadd %s3237, %s3245
          %s3247 = smul.addr %s21, 128
          %s3248 = scalar_lea.hbm %s7, %s3247
          %s3250 = sshll.u32 %s3240, 4
          %s3251 = int_to_ptr.vmem [resolvable:$true] %s3250
          %3253 = dma.vmem_to_hbm [thread:$0]  %s3251, 128, %s3248, %s3237
        $region52: #{tpu_custom_call.1} parent=47 // pred_fallthru
          _
      $region48: #{tpu_custom_call.1} parent=5 // pred_fallthru
        _
      %p3254 = scmp.le.s32.totalorder 2, %s16
      // Predicated region
      $region53: #{tpu_custom_call.1} parent=5 // pred_check
        %p3255 = pneg %p3254
      $region54: #{tpu_custom_call.1} parent=5 // pred_check_branch
        %3257 = sbr.rel (%p3255) target = $region56
      $region55: #{tpu_custom_call.1} parent=5 // pred_region
        %s3258 = ssub.s32 %s16, 2
        // Predicated region
        $region57: #{tpu_custom_call.1} parent=55 // pred_check
          %p3259 = pneg %p222
        $region58: #{tpu_custom_call.1} parent=55 // pred_check_branch
          %3261 = sbr.rel (%p3259) target = $region60
        $region59: #{tpu_custom_call.1} parent=55 // pred_region
          %s3262 = sand.u32 %s207, 1
          %s3263 = scalar_lea.sflag [#allocation4], %s3262
          %s3264 = sand.u32 %s207, 1
          %s3265 = smul.addr %s3264, 8
          %s3266 = scalar_lea.vmem [#allocation3], %s3265
          %3267 = dma.done %s3263, 128
        $region60: #{tpu_custom_call.1} parent=55 // pred_fallthru
          _
      $region56: #{tpu_custom_call.1} parent=5 // pred_fallthru
        _
    $region6: #{tpu_custom_call.1} parent=1 // loop_footer
      %s20 = sadd.s32 1, %s16
    $region7: #{tpu_custom_call.1} parent=1 // loop_footer_branch
      %15 = sbr.rel target = $region3
    $region8: #{tpu_custom_call.1} parent=1 // loop_exit
      _
    %3268 = vsyncpa [#allocation4], 1
    %s3269 = scalar_lea.sflag [#allocation4], 1
    %3270 = vsyncpa %s3269, 1

</llo_original>
